<compile_context>
chip_gen: v7x
topology: tpu7x:2x2x1
jax: 0.10.0
libtpu: 0.0.40
codegen_flags: <defaults>
</compile_context>

<pallas_src>
import numpy as np
import jax
import jax.numpy as jnp
from jax.experimental import pallas as pl
from jax.experimental.pallas import tpu as pltpu

EPS = 1e-5  # nn.BatchNorm2d default eps


# --------------------------------------------------------------------------- #
# Static (shape-only) geometry and constant operands
# --------------------------------------------------------------------------- #

def _block_geometry(batch, in_ch, h, w, block_weights):
    """Per-conv-block geometry for the flat padded+guarded lane layout."""
    geos = []
    for wgt in block_weights:
        cout, cin = int(wgt.shape[0]), int(wgt.shape[1])
        assert cin == in_ch
        hp, wp = h + 2, w + 2
        npad = batch * hp * wp            # flat padded spatial size (lane axis)
        guard = wp + 1                    # keeps every 3x3 tap slice in bounds
        geos.append(dict(H=h, W=w, Cin=cin, Cout=cout, Hp=hp, Wp=wp,
                         Np=npad, G=guard, M=npad + 2 * guard,
                         L=npad - wp - 1, n_valid=batch * h * w,
                         Ho=h // 2, Wo=w // 2))
        in_ch, h, w = cout, h // 2, w // 2
    return geos


def _valid_mask(batch, h, w):
    """(1, B*Hp*Wp) mask: 1 at real conv-output positions, 0 at the pad ring."""
    hp, wp = h + 2, w + 2
    m = np.zeros((batch, hp, wp), dtype=np.float32)
    m[:, 1:h + 1, 1:w + 1] = 1.0
    return m.reshape(1, batch * hp * wp)


def _pool_scatter(batch, g_cur, g_next):
    """0/1 matrix: 2x2-max positions of block i -> padded/guarded flat input
    of block i+1 (subsample + zero-pad scatter in one matmul)."""
    hp, wp, ho, wo = g_cur["Hp"], g_cur["Wp"], g_cur["Ho"], g_cur["Wo"]
    hpn, wpn, gn = g_next["Hp"], g_next["Wp"], g_next["G"]
    s = np.zeros((g_cur["L"], g_next["M"]), dtype=np.float32)
    for b in range(batch):
        for py in range(ho):
            for px in range(wo):
                q = b * hp * wp + (2 * py + 1) * wp + (2 * px + 1)
                t = gn + b * hpn * wpn + (py + 1) * wpn + (px + 1)
                s[q, t] = 1.0
    return s


def _pool_to_head(batch, g_cur):
    """0/1 matrix: last block's 2x2-max positions -> head feature columns
    indexed by b*P + (py*Wo + px)."""
    hp, wp, ho, wo = g_cur["Hp"], g_cur["Wp"], g_cur["Ho"], g_cur["Wo"]
    p = ho * wo
    s = np.zeros((g_cur["L"], batch * p), dtype=np.float32)
    for b in range(batch):
        for py in range(ho):
            for px in range(wo):
                q = b * hp * wp + (2 * py + 1) * wp + (2 * px + 1)
                s[q, b * p + py * wo + px] = 1.0
    return s


def _head_constants(batch, p):
    """Constants to finish fc1 over the (C_last, B*P) feature layout with
    plain 2-D matmuls: z[j,b] = sum_p (Wt@G)[j*P+p, b*P+p]."""
    dmask = np.zeros((2 * p, batch * p), dtype=np.float32)
    for r in range(2 * p):
        for c in range(batch * p):
            if r % p == c % p:
                dmask[r, c] = 1.0
    rsel = np.zeros((2, 2 * p), dtype=np.float32)
    rsel[0, :p] = 1.0
    rsel[1, p:] = 1.0
    csel = np.zeros((batch * p, batch), dtype=np.float32)
    for b in range(batch):
        csel[b * p:(b + 1) * p, b] = 1.0
    return dmask, rsel, csel


# --------------------------------------------------------------------------- #
# Fused kernel
# --------------------------------------------------------------------------- #

def _build_kernel(geos):
    nb = len(geos)
    n_in = 1 + 4 * nb + 5

    def kernel(*args):
        in_refs = args[:n_in]
        out_ref = args[n_in]
        scratch = args[n_in + 1:]
        y_s = scratch[:nb]            # per-block conv+BN+ReLU result
        pin_s = scratch[nb:]          # padded/guarded input of blocks 1..nb-1

        cur_pin = in_refs[0]          # padded/guarded flat input of block 0
        g_feat = None
        for i, g in enumerate(geos):
            w_ref, bn_ref, mask_ref, sel_ref = in_refs[1 + 4 * i:5 + 4 * i]
            wp, npad, guard, L = g["Wp"], g["Np"], g["G"], g["L"]

            # -- conv 3x3 / pad 1: 9 accumulated MXU matmuls on shifted flat
            #    windows.  Channels on sublanes, all B*Hp*Wp positions on lanes.
            acc = None
            for k in range(9):
                dy, dx = divmod(k, 3)
                start = guard + (dy - 1) * wp + (dx - 1)
                xk = cur_pin[:, start:start + npad]
                part = jnp.dot(w_ref[k], xk, preferred_element_type=jnp.float32)
                acc = part if acc is None else acc + part
            # Conv bias omitted: training-mode BatchNorm subtracts the batch
            # mean right after, which cancels a per-channel bias exactly.

            # -- BatchNorm2d (training batch stats, biased var) + ReLU in one
            #    pass over valid (non-pad) positions, folded scale+shift.
            msk = mask_ref[...]
            am = acc * msk
            s1 = jnp.sum(am, axis=1, keepdims=True)
            s2 = jnp.sum(am * am, axis=1, keepdims=True)
            inv_n = 1.0 / g["n_valid"]
            mean = s1 * inv_n
            var = s2 * inv_n - mean * mean
            scale = bn_ref[0] * jax.lax.rsqrt(var + EPS)
            shift = bn_ref[1] - mean * scale
            y_s[i][...] = jnp.maximum(acc * scale + shift, 0.0)

            # -- MaxPool2d(2, 2): max over the 4 flat-shifted taps, then one
            #    constant selection matmul that subsamples + scatters into the
            #    next block's padded layout (or the head feature layout).
            ys = y_s[i]
            pooled = jnp.maximum(
                jnp.maximum(ys[:, 0:L], ys[:, 1:1 + L]),
                jnp.maximum(ys[:, wp:wp + L], ys[:, wp + 1:wp + 1 + L]))
            sel = jnp.dot(pooled, sel_ref[...],
                          preferred_element_type=jnp.float32)
            if i + 1 < nb:
                pin_s[i][...] = sel
                cur_pin = pin_s[i]
            else:
                g_feat = sel                           # (C_last, B*P)

        # -- head: fc1 + analytic quantum expectation + cat(x, 1 - x).
        wt_ref, b_ref, d_ref, rsel_ref, csel_ref = in_refs[1 + 4 * nb:]
        t = jnp.dot(wt_ref[...], g_feat, preferred_element_type=jnp.float32)
        z = jnp.dot(
            jnp.dot(rsel_ref[...], t * d_ref[...],
                    preferred_element_type=jnp.float32),
            csel_ref[...], preferred_element_type=jnp.float32) + b_ref[...]
        # E(theta) = 11 * (1 + sin(theta)) / 2 for the 2-qubit H;RY circuit.
        e = 5.5 * (1.0 + jnp.sin(z))                   # (2, B): (theta_j, batch)
        out_ref[0:2, :] = e
        out_ref[2:4, :] = 1.0 - e

    return kernel


# --------------------------------------------------------------------------- #
# Wrapper
# --------------------------------------------------------------------------- #

def simple_quantum_conv_net(x_nchw, params):
    batch, cin0, h0, w0 = (int(d) for d in x_nchw.shape)
    block_ws = [bp[0] for bp in params["blocks"]]
    nb = len(block_ws)
    geos = _block_geometry(batch, cin0, h0, w0, block_ws)
    g_last = geos[-1]
    p_spatial = g_last["Ho"] * g_last["Wo"]
    c_last = g_last["Cout"]
    assert tuple(params["fc1_w"].shape) == (2, c_last * p_spatial)

    # ---- constant (shape-only) operands, baked into the executable ------- #
    masks = [_valid_mask(batch, g["H"], g["W"]) for g in geos]
    sels = [_pool_scatter(batch, geos[i], geos[i + 1]) if i + 1 < nb
            else _pool_to_head(batch, geos[i]) for i in range(nb)]
    dmask, rsel, csel = _head_constants(batch, p_spatial)

    # ---- parameter-derived operands (tiny per-call XLA ops) --------------- #
    blk_inputs = []
    for g, (wgt, _bias, gamma, beta) in zip(geos, params["blocks"]):
        # _bias is intentionally unused (cancelled by training-mode BN).
        w3d = jnp.transpose(wgt, (2, 3, 0, 1)).reshape(9, g["Cout"], g["Cin"])
        bn = jnp.stack([gamma, beta], axis=0).reshape(2, g["Cout"], 1)
        blk_inputs.append((w3d, bn))
    wt = jnp.transpose(params["fc1_w"].reshape(2, c_last, p_spatial),
                       (0, 2, 1)).reshape(2 * p_spatial, c_last)
    bcol = params["fc1_b"].reshape(2, 1)

    # ---- input: NCHW -> channel-major padded + guarded flat layout -------- #
    g0 = geos[0]
    xp = jnp.pad(x_nchw, ((0, 0), (0, 0), (1, 1), (1, 1)))
    pin0 = jnp.transpose(xp, (1, 0, 2, 3)).reshape(
        cin0, batch * g0["Hp"] * g0["Wp"])
    pin0 = jnp.pad(pin0, ((0, 0), (g0["G"], g0["G"])))

    inputs = [pin0]
    for (w3d, bn), msk, sel in zip(blk_inputs, masks, sels):
        inputs += [w3d, bn, msk, sel]
    inputs += [wt, bcol, dmask, rsel, csel]

    def _spec(a):
        shape = tuple(int(d) for d in jnp.shape(a))
        nd = len(shape)
        return pl.BlockSpec(shape, lambda i, _nd=nd: (0,) * _nd)

    scratch = ([pltpu.VMEM((g["Cout"], g["Np"]), jnp.float32) for g in geos] +
               [pltpu.VMEM((geos[i - 1]["Cout"], geos[i]["M"]), jnp.float32)
                for i in range(1, nb)])

    out4 = pl.pallas_call(
        _build_kernel(geos),
        grid=(1,),
        in_specs=[_spec(a) for a in inputs],
        out_specs=pl.BlockSpec((4, batch), lambda i: (0, 0)),
        out_shape=jax.ShapeDtypeStruct((4, batch), jnp.float32),
        scratch_shapes=scratch,
        compiler_params=pltpu.CompilerParams(
            dimension_semantics=("arbitrary",),
            vmem_limit_bytes=32 * 1024 * 1024),
    )(*inputs)
    # (4, B) -> (B, 4): rows per sample are [E(z0), E(z1), 1-E(z0), 1-E(z1)].
    return out4.T


# --------------------------------------------------------------------------- #
# Parameters / demo
# --------------------------------------------------------------------------- #

def init_params(key, img_shape=(4, 16, 16), num_blocks=2, num_filters=6):
    c, h, w = img_shape
    blocks = []
    in_ch = c
    for i in range(num_blocks):
        out_ch = num_filters * (i + 1)
        key, k1, k2, k3, k4 = jax.random.split(key, 5)
        wgt = 0.1 * jax.random.normal(k1, (out_ch, in_ch, 3, 3), jnp.float32)
        b = 0.1 * jax.random.normal(k2, (out_ch,), jnp.float32)
        gamma = 1.0 + 0.1 * jax.random.normal(k3, (out_ch,), jnp.float32)
        beta = 0.1 * jax.random.normal(k4, (out_ch,), jnp.float32)
        blocks.append((wgt, b, gamma, beta))
        in_ch = out_ch
    flat = in_ch * (h // 2 ** num_blocks) * (w // 2 ** num_blocks)  # 12*4*4
    key, k5, k6 = jax.random.split(key, 3)
    fc1_w = 0.05 * jax.random.normal(k5, (2, flat), jnp.float32)
    fc1_b = 0.05 * jax.random.normal(k6, (2,), jnp.float32)
    return {"blocks": blocks, "fc1_w": fc1_w, "fc1_b": fc1_b}


if __name__ == "__main__":
    key = jax.random.PRNGKey(0)
    kp, kx = jax.random.split(key)
    img_shape = (4, 16, 16)                     # (C, H, W)
    params = init_params(kp, img_shape=img_shape, num_blocks=2, num_filters=6)
    x = jax.random.normal(kx, (2, *img_shape), jnp.float32)   # NCHW, batch=2

    fwd = jax.jit(simple_quantum_conv_net)
    out = fwd(x, params)
    jax.block_until_ready(out)
    assert out.shape == (2, 4) and out.dtype == jnp.float32
    assert bool(jnp.all(jnp.isfinite(out)))
    print("KERNEL_OK")
</pallas_src>

<mosaic_0001>
module attributes {stable_mosaic.version = 11 : i64} {
  func.func @kernel(%arg0: i32, %arg1: memref<4x686xf32, #tpu.memory_space<vmem>>, %arg2: memref<9x6x4xf32, #tpu.memory_space<vmem>>, %arg3: memref<2x6x1xf32, #tpu.memory_space<vmem>>, %arg4: memref<1x648xf32, #tpu.memory_space<vmem>>, %arg5: memref<629x222xf32, #tpu.memory_space<vmem>>, %arg6: memref<9x12x6xf32, #tpu.memory_space<vmem>>, %arg7: memref<2x12x1xf32, #tpu.memory_space<vmem>>, %arg8: memref<1x200xf32, #tpu.memory_space<vmem>>, %arg9: memref<189x32xf32, #tpu.memory_space<vmem>>, %arg10: memref<32x12xf32, #tpu.memory_space<vmem>>, %arg11: memref<2x1xf32, #tpu.memory_space<vmem>>, %arg12: memref<32x32xf32, #tpu.memory_space<vmem>>, %arg13: memref<2x32xf32, #tpu.memory_space<vmem>>, %arg14: memref<32x2xf32, #tpu.memory_space<vmem>>, %arg15: memref<4x2xf32, #tpu.memory_space<vmem>>, %arg16: memref<6x648xf32, #tpu.memory_space<vmem>>, %arg17: memref<12x200xf32, #tpu.memory_space<vmem>>, %arg18: memref<6x222xf32, #tpu.memory_space<vmem>>) attributes {dimension_semantics = [#tpu.dimension_semantics<arbitrary>], iteration_bounds = array<i64: 1>, scalar_prefetch = 0 : i64, scratch_operands = 3 : i64, tpu.core_type = #tpu.core_type<tc>, window_params = [{pipeline_mode = #tpu.pipeline_mode<synchronous>, transform_indices = @transform_0, window_bounds = array<i64: 4, 686>}, {pipeline_mode = #tpu.pipeline_mode<synchronous>, transform_indices = @transform_1, window_bounds = array<i64: 9, 6, 4>}, {pipeline_mode = #tpu.pipeline_mode<synchronous>, transform_indices = @transform_2, window_bounds = array<i64: 2, 6, 1>}, {pipeline_mode = #tpu.pipeline_mode<synchronous>, transform_indices = @transform_3, window_bounds = array<i64: 1, 648>}, {pipeline_mode = #tpu.pipeline_mode<synchronous>, transform_indices = @transform_4, window_bounds = array<i64: 629, 222>}, {pipeline_mode = #tpu.pipeline_mode<synchronous>, transform_indices = @transform_5, window_bounds = array<i64: 9, 12, 6>}, {pipeline_mode = #tpu.pipeline_mode<synchronous>, transform_indices = @transform_6, window_bounds = array<i64: 2, 12, 1>}, {pipeline_mode = #tpu.pipeline_mode<synchronous>, transform_indices = @transform_7, window_bounds = array<i64: 1, 200>}, {pipeline_mode = #tpu.pipeline_mode<synchronous>, transform_indices = @transform_8, window_bounds = array<i64: 189, 32>}, {pipeline_mode = #tpu.pipeline_mode<synchronous>, transform_indices = @transform_9, window_bounds = array<i64: 32, 12>}, {pipeline_mode = #tpu.pipeline_mode<synchronous>, transform_indices = @transform_10, window_bounds = array<i64: 2, 1>}, {pipeline_mode = #tpu.pipeline_mode<synchronous>, transform_indices = @transform_11, window_bounds = array<i64: 32, 32>}, {pipeline_mode = #tpu.pipeline_mode<synchronous>, transform_indices = @transform_12, window_bounds = array<i64: 2, 32>}, {pipeline_mode = #tpu.pipeline_mode<synchronous>, transform_indices = @transform_13, window_bounds = array<i64: 32, 2>}, {pipeline_mode = #tpu.pipeline_mode<synchronous>, transform_indices = @transform_14, window_bounds = array<i64: 4, 2>}]} {
    %c0 = arith.constant 0 : index
    %c0_0 = arith.constant 0 : index
    %0 = vector.load %arg1[%c0, %c0_0] : memref<4x686xf32, #tpu.memory_space<vmem>>, vector<4x648xf32>
    %c0_1 = arith.constant 0 : index
    %c0_2 = arith.constant 0 : index
    %c0_3 = arith.constant 0 : index
    %1 = vector.load %arg2[%c0_1, %c0_2, %c0_3] : memref<9x6x4xf32, #tpu.memory_space<vmem>>, vector<1x6x4xf32>
    %2 = vector.shape_cast %1 : vector<1x6x4xf32> to vector<6x4xf32>
    %cst = arith.constant dense<0.000000e+00> : vector<6x648xf32>
    %3 = tpu.matmul %2, %0, %cst {dimension_numbers = #tpu.dot_dimension_numbers<[1], [0], [0], [1], [0, 0, 1, 1], [], []>} : vector<6x4xf32>, vector<4x648xf32>, vector<6x648xf32> -> vector<6x648xf32>
    %c0_4 = arith.constant 0 : index
    %c1 = arith.constant 1 : index
    %4 = vector.load %arg1[%c0_4, %c1] : memref<4x686xf32, #tpu.memory_space<vmem>>, vector<4x648xf32>
    %c1_5 = arith.constant 1 : index
    %c0_6 = arith.constant 0 : index
    %c0_7 = arith.constant 0 : index
    %5 = vector.load %arg2[%c1_5, %c0_6, %c0_7] : memref<9x6x4xf32, #tpu.memory_space<vmem>>, vector<1x6x4xf32>
    %6 = vector.shape_cast %5 : vector<1x6x4xf32> to vector<6x4xf32>
    %cst_8 = arith.constant dense<0.000000e+00> : vector<6x648xf32>
    %7 = tpu.matmul %6, %4, %cst_8 {dimension_numbers = #tpu.dot_dimension_numbers<[1], [0], [0], [1], [0, 0, 1, 1], [], []>} : vector<6x4xf32>, vector<4x648xf32>, vector<6x648xf32> -> vector<6x648xf32>
    %8 = arith.addf %3, %7 : vector<6x648xf32>
    %c0_9 = arith.constant 0 : index
    %c2 = arith.constant 2 : index
    %9 = vector.load %arg1[%c0_9, %c2] : memref<4x686xf32, #tpu.memory_space<vmem>>, vector<4x648xf32>
    %c2_10 = arith.constant 2 : index
    %c0_11 = arith.constant 0 : index
    %c0_12 = arith.constant 0 : index
    %10 = vector.load %arg2[%c2_10, %c0_11, %c0_12] : memref<9x6x4xf32, #tpu.memory_space<vmem>>, vector<1x6x4xf32>
    %11 = vector.shape_cast %10 : vector<1x6x4xf32> to vector<6x4xf32>
    %cst_13 = arith.constant dense<0.000000e+00> : vector<6x648xf32>
    %12 = tpu.matmul %11, %9, %cst_13 {dimension_numbers = #tpu.dot_dimension_numbers<[1], [0], [0], [1], [0, 0, 1, 1], [], []>} : vector<6x4xf32>, vector<4x648xf32>, vector<6x648xf32> -> vector<6x648xf32>
    %13 = arith.addf %8, %12 : vector<6x648xf32>
    %c0_14 = arith.constant 0 : index
    %c18 = arith.constant 18 : index
    %14 = vector.load %arg1[%c0_14, %c18] : memref<4x686xf32, #tpu.memory_space<vmem>>, vector<4x648xf32>
    %c3 = arith.constant 3 : index
    %c0_15 = arith.constant 0 : index
    %c0_16 = arith.constant 0 : index
    %15 = vector.load %arg2[%c3, %c0_15, %c0_16] : memref<9x6x4xf32, #tpu.memory_space<vmem>>, vector<1x6x4xf32>
    %16 = vector.shape_cast %15 : vector<1x6x4xf32> to vector<6x4xf32>
    %cst_17 = arith.constant dense<0.000000e+00> : vector<6x648xf32>
    %17 = tpu.matmul %16, %14, %cst_17 {dimension_numbers = #tpu.dot_dimension_numbers<[1], [0], [0], [1], [0, 0, 1, 1], [], []>} : vector<6x4xf32>, vector<4x648xf32>, vector<6x648xf32> -> vector<6x648xf32>
    %18 = arith.addf %13, %17 : vector<6x648xf32>
    %c0_18 = arith.constant 0 : index
    %c19 = arith.constant 19 : index
    %19 = vector.load %arg1[%c0_18, %c19] : memref<4x686xf32, #tpu.memory_space<vmem>>, vector<4x648xf32>
    %c4 = arith.constant 4 : index
    %c0_19 = arith.constant 0 : index
    %c0_20 = arith.constant 0 : index
    %20 = vector.load %arg2[%c4, %c0_19, %c0_20] : memref<9x6x4xf32, #tpu.memory_space<vmem>>, vector<1x6x4xf32>
    %21 = vector.shape_cast %20 : vector<1x6x4xf32> to vector<6x4xf32>
    %cst_21 = arith.constant dense<0.000000e+00> : vector<6x648xf32>
    %22 = tpu.matmul %21, %19, %cst_21 {dimension_numbers = #tpu.dot_dimension_numbers<[1], [0], [0], [1], [0, 0, 1, 1], [], []>} : vector<6x4xf32>, vector<4x648xf32>, vector<6x648xf32> -> vector<6x648xf32>
    %23 = arith.addf %18, %22 : vector<6x648xf32>
    %c0_22 = arith.constant 0 : index
    %c20 = arith.constant 20 : index
    %24 = vector.load %arg1[%c0_22, %c20] : memref<4x686xf32, #tpu.memory_space<vmem>>, vector<4x648xf32>
    %c5 = arith.constant 5 : index
    %c0_23 = arith.constant 0 : index
    %c0_24 = arith.constant 0 : index
    %25 = vector.load %arg2[%c5, %c0_23, %c0_24] : memref<9x6x4xf32, #tpu.memory_space<vmem>>, vector<1x6x4xf32>
    %26 = vector.shape_cast %25 : vector<1x6x4xf32> to vector<6x4xf32>
    %cst_25 = arith.constant dense<0.000000e+00> : vector<6x648xf32>
    %27 = tpu.matmul %26, %24, %cst_25 {dimension_numbers = #tpu.dot_dimension_numbers<[1], [0], [0], [1], [0, 0, 1, 1], [], []>} : vector<6x4xf32>, vector<4x648xf32>, vector<6x648xf32> -> vector<6x648xf32>
    %28 = arith.addf %23, %27 : vector<6x648xf32>
    %c0_26 = arith.constant 0 : index
    %c36 = arith.constant 36 : index
    %29 = vector.load %arg1[%c0_26, %c36] : memref<4x686xf32, #tpu.memory_space<vmem>>, vector<4x648xf32>
    %c6 = arith.constant 6 : index
    %c0_27 = arith.constant 0 : index
    %c0_28 = arith.constant 0 : index
    %30 = vector.load %arg2[%c6, %c0_27, %c0_28] : memref<9x6x4xf32, #tpu.memory_space<vmem>>, vector<1x6x4xf32>
    %31 = vector.shape_cast %30 : vector<1x6x4xf32> to vector<6x4xf32>
    %cst_29 = arith.constant dense<0.000000e+00> : vector<6x648xf32>
    %32 = tpu.matmul %31, %29, %cst_29 {dimension_numbers = #tpu.dot_dimension_numbers<[1], [0], [0], [1], [0, 0, 1, 1], [], []>} : vector<6x4xf32>, vector<4x648xf32>, vector<6x648xf32> -> vector<6x648xf32>
    %33 = arith.addf %28, %32 : vector<6x648xf32>
    %c0_30 = arith.constant 0 : index
    %c37 = arith.constant 37 : index
    %34 = vector.load %arg1[%c0_30, %c37] : memref<4x686xf32, #tpu.memory_space<vmem>>, vector<4x648xf32>
    %c7 = arith.constant 7 : index
    %c0_31 = arith.constant 0 : index
    %c0_32 = arith.constant 0 : index
    %35 = vector.load %arg2[%c7, %c0_31, %c0_32] : memref<9x6x4xf32, #tpu.memory_space<vmem>>, vector<1x6x4xf32>
    %36 = vector.shape_cast %35 : vector<1x6x4xf32> to vector<6x4xf32>
    %cst_33 = arith.constant dense<0.000000e+00> : vector<6x648xf32>
    %37 = tpu.matmul %36, %34, %cst_33 {dimension_numbers = #tpu.dot_dimension_numbers<[1], [0], [0], [1], [0, 0, 1, 1], [], []>} : vector<6x4xf32>, vector<4x648xf32>, vector<6x648xf32> -> vector<6x648xf32>
    %38 = arith.addf %33, %37 : vector<6x648xf32>
    %c0_34 = arith.constant 0 : index
    %c38 = arith.constant 38 : index
    %39 = vector.load %arg1[%c0_34, %c38] : memref<4x686xf32, #tpu.memory_space<vmem>>, vector<4x648xf32>
    %c8 = arith.constant 8 : index
    %c0_35 = arith.constant 0 : index
    %c0_36 = arith.constant 0 : index
    %40 = vector.load %arg2[%c8, %c0_35, %c0_36] : memref<9x6x4xf32, #tpu.memory_space<vmem>>, vector<1x6x4xf32>
    %41 = vector.shape_cast %40 : vector<1x6x4xf32> to vector<6x4xf32>
    %cst_37 = arith.constant dense<0.000000e+00> : vector<6x648xf32>
    %42 = tpu.matmul %41, %39, %cst_37 {dimension_numbers = #tpu.dot_dimension_numbers<[1], [0], [0], [1], [0, 0, 1, 1], [], []>} : vector<6x4xf32>, vector<4x648xf32>, vector<6x648xf32> -> vector<6x648xf32>
    %43 = arith.addf %38, %42 : vector<6x648xf32>
    %c0_38 = arith.constant 0 : index
    %c0_39 = arith.constant 0 : index
    %44 = vector.load %arg4[%c0_38, %c0_39] : memref<1x648xf32, #tpu.memory_space<vmem>>, vector<1x648xf32>
    %45 = vector.broadcast %44 : vector<1x648xf32> to vector<6x648xf32>
    %46 = arith.mulf %43, %45 : vector<6x648xf32>
    %cst_40 = arith.constant dense<0.000000e+00> : vector<6xf32>
    %47 = vector.multi_reduction <add>, %46, %cst_40 [1] : vector<6x648xf32> to vector<6xf32>
    %48 = vector.shape_cast %47 : vector<6xf32> to vector<6x1xf32>
    %49 = arith.mulf %46, %46 : vector<6x648xf32>
    %cst_41 = arith.constant dense<0.000000e+00> : vector<6xf32>
    %50 = vector.multi_reduction <add>, %49, %cst_41 [1] : vector<6x648xf32> to vector<6xf32>
    %51 = vector.shape_cast %50 : vector<6xf32> to vector<6x1xf32>
    %cst_42 = arith.constant 0.001953125 : f32
    %52 = vector.broadcast %cst_42 : f32 to vector<6x1xf32>
    %53 = arith.mulf %48, %52 : vector<6x1xf32>
    %cst_43 = arith.constant 0.001953125 : f32
    %54 = vector.broadcast %cst_43 : f32 to vector<6x1xf32>
    %55 = arith.mulf %51, %54 : vector<6x1xf32>
    %56 = arith.mulf %53, %53 : vector<6x1xf32>
    %57 = arith.subf %55, %56 : vector<6x1xf32>
    %c0_44 = arith.constant 0 : index
    %c0_45 = arith.constant 0 : index
    %c0_46 = arith.constant 0 : index
    %58 = vector.load %arg3[%c0_44, %c0_45, %c0_46] : memref<2x6x1xf32, #tpu.memory_space<vmem>>, vector<1x6x1xf32>
    %59 = vector.shape_cast %58 : vector<1x6x1xf32> to vector<6x1xf32>
    %cst_47 = arith.constant 9.99999974E-6 : f32
    %60 = vector.broadcast %cst_47 : f32 to vector<6x1xf32>
    %61 = arith.addf %57, %60 : vector<6x1xf32>
    %62 = math.rsqrt %61 : vector<6x1xf32>
    %63 = arith.mulf %59, %62 : vector<6x1xf32>
    %c1_48 = arith.constant 1 : index
    %c0_49 = arith.constant 0 : index
    %c0_50 = arith.constant 0 : index
    %64 = vector.load %arg3[%c1_48, %c0_49, %c0_50] : memref<2x6x1xf32, #tpu.memory_space<vmem>>, vector<1x6x1xf32>
    %65 = vector.shape_cast %64 : vector<1x6x1xf32> to vector<6x1xf32>
    %66 = arith.mulf %53, %63 : vector<6x1xf32>
    %67 = arith.subf %65, %66 : vector<6x1xf32>
    %68 = vector.broadcast %63 : vector<6x1xf32> to vector<6x648xf32>
    %69 = arith.mulf %43, %68 : vector<6x648xf32>
    %70 = vector.broadcast %67 : vector<6x1xf32> to vector<6x648xf32>
    %71 = arith.addf %69, %70 : vector<6x648xf32>
    %cst_51 = arith.constant 0.000000e+00 : f32
    %72 = vector.broadcast %cst_51 : f32 to vector<6x648xf32>
    %73 = arith.maximumf %71, %72 : vector<6x648xf32>
    %c0_52 = arith.constant 0 : index
    %c0_53 = arith.constant 0 : index
    %74 = vector.load %arg16[%c0_52, %c0_53] : memref<6x648xf32, #tpu.memory_space<vmem>>, vector<6x648xf32>
    tpu.vector_store %arg16[%c0_52, %c0_53], %73 {strides = array<i32>} : memref<6x648xf32, #tpu.memory_space<vmem>>, vector<6x648xf32>,
    %c0_54 = arith.constant 0 : index
    %c0_55 = arith.constant 0 : index
    %75 = vector.load %arg16[%c0_54, %c0_55] : memref<6x648xf32, #tpu.memory_space<vmem>>, vector<6x629xf32>
    %c0_56 = arith.constant 0 : index
    %c1_57 = arith.constant 1 : index
    %76 = vector.load %arg16[%c0_56, %c1_57] : memref<6x648xf32, #tpu.memory_space<vmem>>, vector<6x629xf32>
    %77 = arith.maximumf %75, %76 : vector<6x629xf32>
    %c0_58 = arith.constant 0 : index
    %c18_59 = arith.constant 18 : index
    %78 = vector.load %arg16[%c0_58, %c18_59] : memref<6x648xf32, #tpu.memory_space<vmem>>, vector<6x629xf32>
    %c0_60 = arith.constant 0 : index
    %c19_61 = arith.constant 19 : index
    %79 = vector.load %arg16[%c0_60, %c19_61] : memref<6x648xf32, #tpu.memory_space<vmem>>, vector<6x629xf32>
    %80 = arith.maximumf %78, %79 : vector<6x629xf32>
    %81 = arith.maximumf %77, %80 : vector<6x629xf32>
    %c0_62 = arith.constant 0 : index
    %c0_63 = arith.constant 0 : index
    %82 = vector.load %arg5[%c0_62, %c0_63] : memref<629x222xf32, #tpu.memory_space<vmem>>, vector<629x222xf32>
    %cst_64 = arith.constant dense<0.000000e+00> : vector<6x222xf32>
    %83 = tpu.matmul %81, %82, %cst_64 {dimension_numbers = #tpu.dot_dimension_numbers<[1], [0], [0], [1], [0, 0, 1, 1], [], []>} : vector<6x629xf32>, vector<629x222xf32>, vector<6x222xf32> -> vector<6x222xf32>
    %c0_65 = arith.constant 0 : index
    %c0_66 = arith.constant 0 : index
    %84 = vector.load %arg18[%c0_65, %c0_66] : memref<6x222xf32, #tpu.memory_space<vmem>>, vector<6x222xf32>
    tpu.vector_store %arg18[%c0_65, %c0_66], %83 {strides = array<i32>} : memref<6x222xf32, #tpu.memory_space<vmem>>, vector<6x222xf32>,
    %c0_67 = arith.constant 0 : index
    %c0_68 = arith.constant 0 : index
    %85 = vector.load %arg18[%c0_67, %c0_68] : memref<6x222xf32, #tpu.memory_space<vmem>>, vector<6x200xf32>
    %c0_69 = arith.constant 0 : index
    %c0_70 = arith.constant 0 : index
    %c0_71 = arith.constant 0 : index
    %86 = vector.load %arg6[%c0_69, %c0_70, %c0_71] : memref<9x12x6xf32, #tpu.memory_space<vmem>>, vector<1x12x6xf32>
    %87 = vector.shape_cast %86 : vector<1x12x6xf32> to vector<12x6xf32>
    %cst_72 = arith.constant dense<0.000000e+00> : vector<12x200xf32>
    %88 = tpu.matmul %87, %85, %cst_72 {dimension_numbers = #tpu.dot_dimension_numbers<[1], [0], [0], [1], [0, 0, 1, 1], [], []>} : vector<12x6xf32>, vector<6x200xf32>, vector<12x200xf32> -> vector<12x200xf32>
    %c0_73 = arith.constant 0 : index
    %c1_74 = arith.constant 1 : index
    %89 = vector.load %arg18[%c0_73, %c1_74] : memref<6x222xf32, #tpu.memory_space<vmem>>, vector<6x200xf32>
    %c1_75 = arith.constant 1 : index
    %c0_76 = arith.constant 0 : index
    %c0_77 = arith.constant 0 : index
    %90 = vector.load %arg6[%c1_75, %c0_76, %c0_77] : memref<9x12x6xf32, #tpu.memory_space<vmem>>, vector<1x12x6xf32>
    %91 = vector.shape_cast %90 : vector<1x12x6xf32> to vector<12x6xf32>
    %cst_78 = arith.constant dense<0.000000e+00> : vector<12x200xf32>
    %92 = tpu.matmul %91, %89, %cst_78 {dimension_numbers = #tpu.dot_dimension_numbers<[1], [0], [0], [1], [0, 0, 1, 1], [], []>} : vector<12x6xf32>, vector<6x200xf32>, vector<12x200xf32> -> vector<12x200xf32>
    %93 = arith.addf %88, %92 : vector<12x200xf32>
    %c0_79 = arith.constant 0 : index
    %c2_80 = arith.constant 2 : index
    %94 = vector.load %arg18[%c0_79, %c2_80] : memref<6x222xf32, #tpu.memory_space<vmem>>, vector<6x200xf32>
    %c2_81 = arith.constant 2 : index
    %c0_82 = arith.constant 0 : index
    %c0_83 = arith.constant 0 : index
    %95 = vector.load %arg6[%c2_81, %c0_82, %c0_83] : memref<9x12x6xf32, #tpu.memory_space<vmem>>, vector<1x12x6xf32>
    %96 = vector.shape_cast %95 : vector<1x12x6xf32> to vector<12x6xf32>
    %cst_84 = arith.constant dense<0.000000e+00> : vector<12x200xf32>
    %97 = tpu.matmul %96, %94, %cst_84 {dimension_numbers = #tpu.dot_dimension_numbers<[1], [0], [0], [1], [0, 0, 1, 1], [], []>} : vector<12x6xf32>, vector<6x200xf32>, vector<12x200xf32> -> vector<12x200xf32>
    %98 = arith.addf %93, %97 : vector<12x200xf32>
    %c0_85 = arith.constant 0 : index
    %c10 = arith.constant 10 : index
    %99 = vector.load %arg18[%c0_85, %c10] : memref<6x222xf32, #tpu.memory_space<vmem>>, vector<6x200xf32>
    %c3_86 = arith.constant 3 : index
    %c0_87 = arith.constant 0 : index
    %c0_88 = arith.constant 0 : index
    %100 = vector.load %arg6[%c3_86, %c0_87, %c0_88] : memref<9x12x6xf32, #tpu.memory_space<vmem>>, vector<1x12x6xf32>
    %101 = vector.shape_cast %100 : vector<1x12x6xf32> to vector<12x6xf32>
    %cst_89 = arith.constant dense<0.000000e+00> : vector<12x200xf32>
    %102 = tpu.matmul %101, %99, %cst_89 {dimension_numbers = #tpu.dot_dimension_numbers<[1], [0], [0], [1], [0, 0, 1, 1], [], []>} : vector<12x6xf32>, vector<6x200xf32>, vector<12x200xf32> -> vector<12x200xf32>
    %103 = arith.addf %98, %102 : vector<12x200xf32>
    %c0_90 = arith.constant 0 : index
    %c11 = arith.constant 11 : index
    %104 = vector.load %arg18[%c0_90, %c11] : memref<6x222xf32, #tpu.memory_space<vmem>>, vector<6x200xf32>
    %c4_91 = arith.constant 4 : index
    %c0_92 = arith.constant 0 : index
    %c0_93 = arith.constant 0 : index
    %105 = vector.load %arg6[%c4_91, %c0_92, %c0_93] : memref<9x12x6xf32, #tpu.memory_space<vmem>>, vector<1x12x6xf32>
    %106 = vector.shape_cast %105 : vector<1x12x6xf32> to vector<12x6xf32>
    %cst_94 = arith.constant dense<0.000000e+00> : vector<12x200xf32>
    %107 = tpu.matmul %106, %104, %cst_94 {dimension_numbers = #tpu.dot_dimension_numbers<[1], [0], [0], [1], [0, 0, 1, 1], [], []>} : vector<12x6xf32>, vector<6x200xf32>, vector<12x200xf32> -> vector<12x200xf32>
    %108 = arith.addf %103, %107 : vector<12x200xf32>
    %c0_95 = arith.constant 0 : index
    %c12 = arith.constant 12 : index
    %109 = vector.load %arg18[%c0_95, %c12] : memref<6x222xf32, #tpu.memory_space<vmem>>, vector<6x200xf32>
    %c5_96 = arith.constant 5 : index
    %c0_97 = arith.constant 0 : index
    %c0_98 = arith.constant 0 : index
    %110 = vector.load %arg6[%c5_96, %c0_97, %c0_98] : memref<9x12x6xf32, #tpu.memory_space<vmem>>, vector<1x12x6xf32>
    %111 = vector.shape_cast %110 : vector<1x12x6xf32> to vector<12x6xf32>
    %cst_99 = arith.constant dense<0.000000e+00> : vector<12x200xf32>
    %112 = tpu.matmul %111, %109, %cst_99 {dimension_numbers = #tpu.dot_dimension_numbers<[1], [0], [0], [1], [0, 0, 1, 1], [], []>} : vector<12x6xf32>, vector<6x200xf32>, vector<12x200xf32> -> vector<12x200xf32>
    %113 = arith.addf %108, %112 : vector<12x200xf32>
    %c0_100 = arith.constant 0 : index
    %c20_101 = arith.constant 20 : index
    %114 = vector.load %arg18[%c0_100, %c20_101] : memref<6x222xf32, #tpu.memory_space<vmem>>, vector<6x200xf32>
    %c6_102 = arith.constant 6 : index
    %c0_103 = arith.constant 0 : index
    %c0_104 = arith.constant 0 : index
    %115 = vector.load %arg6[%c6_102, %c0_103, %c0_104] : memref<9x12x6xf32, #tpu.memory_space<vmem>>, vector<1x12x6xf32>
    %116 = vector.shape_cast %115 : vector<1x12x6xf32> to vector<12x6xf32>
    %cst_105 = arith.constant dense<0.000000e+00> : vector<12x200xf32>
    %117 = tpu.matmul %116, %114, %cst_105 {dimension_numbers = #tpu.dot_dimension_numbers<[1], [0], [0], [1], [0, 0, 1, 1], [], []>} : vector<12x6xf32>, vector<6x200xf32>, vector<12x200xf32> -> vector<12x200xf32>
    %118 = arith.addf %113, %117 : vector<12x200xf32>
    %c0_106 = arith.constant 0 : index
    %c21 = arith.constant 21 : index
    %119 = vector.load %arg18[%c0_106, %c21] : memref<6x222xf32, #tpu.memory_space<vmem>>, vector<6x200xf32>
    %c7_107 = arith.constant 7 : index
    %c0_108 = arith.constant 0 : index
    %c0_109 = arith.constant 0 : index
    %120 = vector.load %arg6[%c7_107, %c0_108, %c0_109] : memref<9x12x6xf32, #tpu.memory_space<vmem>>, vector<1x12x6xf32>
    %121 = vector.shape_cast %120 : vector<1x12x6xf32> to vector<12x6xf32>
    %cst_110 = arith.constant dense<0.000000e+00> : vector<12x200xf32>
    %122 = tpu.matmul %121, %119, %cst_110 {dimension_numbers = #tpu.dot_dimension_numbers<[1], [0], [0], [1], [0, 0, 1, 1], [], []>} : vector<12x6xf32>, vector<6x200xf32>, vector<12x200xf32> -> vector<12x200xf32>
    %123 = arith.addf %118, %122 : vector<12x200xf32>
    %c0_111 = arith.constant 0 : index
    %c22 = arith.constant 22 : index
    %124 = vector.load %arg18[%c0_111, %c22] : memref<6x222xf32, #tpu.memory_space<vmem>>, vector<6x200xf32>
    %c8_112 = arith.constant 8 : index
    %c0_113 = arith.constant 0 : index
    %c0_114 = arith.constant 0 : index
    %125 = vector.load %arg6[%c8_112, %c0_113, %c0_114] : memref<9x12x6xf32, #tpu.memory_space<vmem>>, vector<1x12x6xf32>
    %126 = vector.shape_cast %125 : vector<1x12x6xf32> to vector<12x6xf32>
    %cst_115 = arith.constant dense<0.000000e+00> : vector<12x200xf32>
    %127 = tpu.matmul %126, %124, %cst_115 {dimension_numbers = #tpu.dot_dimension_numbers<[1], [0], [0], [1], [0, 0, 1, 1], [], []>} : vector<12x6xf32>, vector<6x200xf32>, vector<12x200xf32> -> vector<12x200xf32>
    %128 = arith.addf %123, %127 : vector<12x200xf32>
    %c0_116 = arith.constant 0 : index
    %c0_117 = arith.constant 0 : index
    %129 = vector.load %arg8[%c0_116, %c0_117] : memref<1x200xf32, #tpu.memory_space<vmem>>, vector<1x200xf32>
    %130 = vector.broadcast %129 : vector<1x200xf32> to vector<12x200xf32>
    %131 = arith.mulf %128, %130 : vector<12x200xf32>
    %cst_118 = arith.constant dense<0.000000e+00> : vector<12xf32>
    %132 = vector.multi_reduction <add>, %131, %cst_118 [1] : vector<12x200xf32> to vector<12xf32>
    %133 = vector.shape_cast %132 : vector<12xf32> to vector<12x1xf32>
    %134 = arith.mulf %131, %131 : vector<12x200xf32>
    %cst_119 = arith.constant dense<0.000000e+00> : vector<12xf32>
    %135 = vector.multi_reduction <add>, %134, %cst_119 [1] : vector<12x200xf32> to vector<12xf32>
    %136 = vector.shape_cast %135 : vector<12xf32> to vector<12x1xf32>
    %cst_120 = arith.constant 7.812500e-03 : f32
    %137 = vector.broadcast %cst_120 : f32 to vector<12x1xf32>
    %138 = arith.mulf %133, %137 : vector<12x1xf32>
    %cst_121 = arith.constant 7.812500e-03 : f32
    %139 = vector.broadcast %cst_121 : f32 to vector<12x1xf32>
    %140 = arith.mulf %136, %139 : vector<12x1xf32>
    %141 = arith.mulf %138, %138 : vector<12x1xf32>
    %142 = arith.subf %140, %141 : vector<12x1xf32>
    %c0_122 = arith.constant 0 : index
    %c0_123 = arith.constant 0 : index
    %c0_124 = arith.constant 0 : index
    %143 = vector.load %arg7[%c0_122, %c0_123, %c0_124] : memref<2x12x1xf32, #tpu.memory_space<vmem>>, vector<1x12x1xf32>
    %144 = vector.shape_cast %143 : vector<1x12x1xf32> to vector<12x1xf32>
    %cst_125 = arith.constant 9.99999974E-6 : f32
    %145 = vector.broadcast %cst_125 : f32 to vector<12x1xf32>
    %146 = arith.addf %142, %145 : vector<12x1xf32>
    %147 = math.rsqrt %146 : vector<12x1xf32>
    %148 = arith.mulf %144, %147 : vector<12x1xf32>
    %c1_126 = arith.constant 1 : index
    %c0_127 = arith.constant 0 : index
    %c0_128 = arith.constant 0 : index
    %149 = vector.load %arg7[%c1_126, %c0_127, %c0_128] : memref<2x12x1xf32, #tpu.memory_space<vmem>>, vector<1x12x1xf32>
    %150 = vector.shape_cast %149 : vector<1x12x1xf32> to vector<12x1xf32>
    %151 = arith.mulf %138, %148 : vector<12x1xf32>
    %152 = arith.subf %150, %151 : vector<12x1xf32>
    %153 = vector.broadcast %148 : vector<12x1xf32> to vector<12x200xf32>
    %154 = arith.mulf %128, %153 : vector<12x200xf32>
    %155 = vector.broadcast %152 : vector<12x1xf32> to vector<12x200xf32>
    %156 = arith.addf %154, %155 : vector<12x200xf32>
    %cst_129 = arith.constant 0.000000e+00 : f32
    %157 = vector.broadcast %cst_129 : f32 to vector<12x200xf32>
    %158 = arith.maximumf %156, %157 : vector<12x200xf32>
    %c0_130 = arith.constant 0 : index
    %c0_131 = arith.constant 0 : index
    %159 = vector.load %arg17[%c0_130, %c0_131] : memref<12x200xf32, #tpu.memory_space<vmem>>, vector<12x200xf32>
    tpu.vector_store %arg17[%c0_130, %c0_131], %158 {strides = array<i32>} : memref<12x200xf32, #tpu.memory_space<vmem>>, vector<12x200xf32>,
    %c0_132 = arith.constant 0 : index
    %c0_133 = arith.constant 0 : index
    %160 = vector.load %arg17[%c0_132, %c0_133] : memref<12x200xf32, #tpu.memory_space<vmem>>, vector<12x189xf32>
    %c0_134 = arith.constant 0 : index
    %c1_135 = arith.constant 1 : index
    %161 = vector.load %arg17[%c0_134, %c1_135] : memref<12x200xf32, #tpu.memory_space<vmem>>, vector<12x189xf32>
    %162 = arith.maximumf %160, %161 : vector<12x189xf32>
    %c0_136 = arith.constant 0 : index
    %c10_137 = arith.constant 10 : index
    %163 = vector.load %arg17[%c0_136, %c10_137] : memref<12x200xf32, #tpu.memory_space<vmem>>, vector<12x189xf32>
    %c0_138 = arith.constant 0 : index
    %c11_139 = arith.constant 11 : index
    %164 = vector.load %arg17[%c0_138, %c11_139] : memref<12x200xf32, #tpu.memory_space<vmem>>, vector<12x189xf32>
    %165 = arith.maximumf %163, %164 : vector<12x189xf32>
    %166 = arith.maximumf %162, %165 : vector<12x189xf32>
    %c0_140 = arith.constant 0 : index
    %c0_141 = arith.constant 0 : index
    %167 = vector.load %arg9[%c0_140, %c0_141] : memref<189x32xf32, #tpu.memory_space<vmem>>, vector<189x32xf32>
    %cst_142 = arith.constant dense<0.000000e+00> : vector<12x32xf32>
    %168 = tpu.matmul %166, %167, %cst_142 {dimension_numbers = #tpu.dot_dimension_numbers<[1], [0], [0], [1], [0, 0, 1, 1], [], []>} : vector<12x189xf32>, vector<189x32xf32>, vector<12x32xf32> -> vector<12x32xf32>
    %c0_143 = arith.constant 0 : index
    %c0_144 = arith.constant 0 : index
    %169 = vector.load %arg10[%c0_143, %c0_144] : memref<32x12xf32, #tpu.memory_space<vmem>>, vector<32x12xf32>
    %cst_145 = arith.constant dense<0.000000e+00> : vector<32x32xf32>
    %170 = tpu.matmul %169, %168, %cst_145 {dimension_numbers = #tpu.dot_dimension_numbers<[1], [0], [0], [1], [0, 0, 1, 1], [], []>} : vector<32x12xf32>, vector<12x32xf32>, vector<32x32xf32> -> vector<32x32xf32>
    %c0_146 = arith.constant 0 : index
    %c0_147 = arith.constant 0 : index
    %171 = vector.load %arg13[%c0_146, %c0_147] : memref<2x32xf32, #tpu.memory_space<vmem>>, vector<2x32xf32>
    %c0_148 = arith.constant 0 : index
    %c0_149 = arith.constant 0 : index
    %172 = vector.load %arg12[%c0_148, %c0_149] : memref<32x32xf32, #tpu.memory_space<vmem>>, vector<32x32xf32>
    %173 = arith.mulf %170, %172 : vector<32x32xf32>
    %cst_150 = arith.constant dense<0.000000e+00> : vector<2x32xf32>
    %174 = tpu.matmul %171, %173, %cst_150 {dimension_numbers = #tpu.dot_dimension_numbers<[1], [0], [0], [1], [0, 0, 1, 1], [], []>} : vector<2x32xf32>, vector<32x32xf32>, vector<2x32xf32> -> vector<2x32xf32>
    %c0_151 = arith.constant 0 : index
    %c0_152 = arith.constant 0 : index
    %175 = vector.load %arg14[%c0_151, %c0_152] : memref<32x2xf32, #tpu.memory_space<vmem>>, vector<32x2xf32>
    %cst_153 = arith.constant dense<0.000000e+00> : vector<2x2xf32>
    %176 = tpu.matmul %174, %175, %cst_153 {dimension_numbers = #tpu.dot_dimension_numbers<[1], [0], [0], [1], [0, 0, 1, 1], [], []>} : vector<2x32xf32>, vector<32x2xf32>, vector<2x2xf32> -> vector<2x2xf32>
    %c0_154 = arith.constant 0 : index
    %c0_155 = arith.constant 0 : index
    %177 = vector.load %arg11[%c0_154, %c0_155] : memref<2x1xf32, #tpu.memory_space<vmem>>, vector<2x1xf32>
    %178 = vector.broadcast %177 : vector<2x1xf32> to vector<2x2xf32>
    %179 = arith.addf %176, %178 : vector<2x2xf32>
    %180 = math.sin %179 : vector<2x2xf32>
    %cst_156 = arith.constant 1.000000e+00 : f32
    %181 = vector.broadcast %cst_156 : f32 to vector<2x2xf32>
    %182 = arith.addf %181, %180 : vector<2x2xf32>
    %cst_157 = arith.constant 5.500000e+00 : f32
    %183 = vector.broadcast %cst_157 : f32 to vector<2x2xf32>
    %184 = arith.mulf %183, %182 : vector<2x2xf32>
    %c0_158 = arith.constant 0 : index
    %c0_159 = arith.constant 0 : index
    %185 = vector.load %arg15[%c0_158, %c0_159] : memref<4x2xf32, #tpu.memory_space<vmem>>, vector<2x2xf32>
    tpu.vector_store %arg15[%c0_158, %c0_159], %184 {strides = array<i32>} : memref<4x2xf32, #tpu.memory_space<vmem>>, vector<2x2xf32>,
    %cst_160 = arith.constant 1.000000e+00 : f32
    %186 = vector.broadcast %cst_160 : f32 to vector<2x2xf32>
    %187 = arith.subf %186, %184 : vector<2x2xf32>
    %c2_161 = arith.constant 2 : index
    %c0_162 = arith.constant 0 : index
    %188 = vector.load %arg15[%c2_161, %c0_162] : memref<4x2xf32, #tpu.memory_space<vmem>>, vector<2x2xf32>
    tpu.vector_store %arg15[%c2_161, %c0_162], %187 {strides = array<i32>} : memref<4x2xf32, #tpu.memory_space<vmem>>, vector<2x2xf32>,
    return
  }
  func.func @transform_0(%arg0: i32) -> (i32, i32) {
    %c0_i32 = arith.constant 0 : i32
    %c0_i32_0 = arith.constant 0 : i32
    %c0_i32_1 = arith.constant 0 : i32
    return %c0_i32, %c0_i32_0 : i32, i32
  }
  func.func @transform_1(%arg0: i32) -> (i32, i32, i32) {
    %c0_i32 = arith.constant 0 : i32
    %c0_i32_0 = arith.constant 0 : i32
    %c0_i32_1 = arith.constant 0 : i32
    %c0_i32_2 = arith.constant 0 : i32
    return %c0_i32, %c0_i32_0, %c0_i32_1 : i32, i32, i32
  }
  func.func @transform_2(%arg0: i32) -> (i32, i32, i32) {
    %c0_i32 = arith.constant 0 : i32
    %c0_i32_0 = arith.constant 0 : i32
    %c0_i32_1 = arith.constant 0 : i32
    %c0_i32_2 = arith.constant 0 : i32
    return %c0_i32, %c0_i32_0, %c0_i32_1 : i32, i32, i32
  }
  func.func @transform_3(%arg0: i32) -> (i32, i32) {
    %c0_i32 = arith.constant 0 : i32
    %c0_i32_0 = arith.constant 0 : i32
    %c0_i32_1 = arith.constant 0 : i32
    return %c0_i32, %c0_i32_0 : i32, i32
  }
  func.func @transform_4(%arg0: i32) -> (i32, i32) {
    %c0_i32 = arith.constant 0 : i32
    %c0_i32_0 = arith.constant 0 : i32
    %c0_i32_1 = arith.constant 0 : i32
    return %c0_i32, %c0_i32_0 : i32, i32
  }
  func.func @transform_5(%arg0: i32) -> (i32, i32, i32) {
    %c0_i32 = arith.constant 0 : i32
    %c0_i32_0 = arith.constant 0 : i32
    %c0_i32_1 = arith.constant 0 : i32
    %c0_i32_2 = arith.constant 0 : i32
    return %c0_i32, %c0_i32_0, %c0_i32_1 : i32, i32, i32
  }
  func.func @transform_6(%arg0: i32) -> (i32, i32, i32) {
    %c0_i32 = arith.constant 0 : i32
    %c0_i32_0 = arith.constant 0 : i32
    %c0_i32_1 = arith.constant 0 : i32
    %c0_i32_2 = arith.constant 0 : i32
    return %c0_i32, %c0_i32_0, %c0_i32_1 : i32, i32, i32
  }
  func.func @transform_7(%arg0: i32) -> (i32, i32) {
    %c0_i32 = arith.constant 0 : i32
    %c0_i32_0 = arith.constant 0 : i32
    %c0_i32_1 = arith.constant 0 : i32
    return %c0_i32, %c0_i32_0 : i32, i32
  }
  func.func @transform_8(%arg0: i32) -> (i32, i32) {
    %c0_i32 = arith.constant 0 : i32
    %c0_i32_0 = arith.constant 0 : i32
    %c0_i32_1 = arith.constant 0 : i32
    return %c0_i32, %c0_i32_0 : i32, i32
  }
  func.func @transform_9(%arg0: i32) -> (i32, i32) {
    %c0_i32 = arith.constant 0 : i32
    %c0_i32_0 = arith.constant 0 : i32
    %c0_i32_1 = arith.constant 0 : i32
    return %c0_i32, %c0_i32_0 : i32, i32
  }
  func.func @transform_10(%arg0: i32) -> (i32, i32) {
    %c0_i32 = arith.constant 0 : i32
    %c0_i32_0 = arith.constant 0 : i32
    %c0_i32_1 = arith.constant 0 : i32
    return %c0_i32, %c0_i32_0 : i32, i32
  }
  func.func @transform_11(%arg0: i32) -> (i32, i32) {
    %c0_i32 = arith.constant 0 : i32
    %c0_i32_0 = arith.constant 0 : i32
    %c0_i32_1 = arith.constant 0 : i32
    return %c0_i32, %c0_i32_0 : i32, i32
  }
  func.func @transform_12(%arg0: i32) -> (i32, i32) {
    %c0_i32 = arith.constant 0 : i32
    %c0_i32_0 = arith.constant 0 : i32
    %c0_i32_1 = arith.constant 0 : i32
    return %c0_i32, %c0_i32_0 : i32, i32
  }
  func.func @transform_13(%arg0: i32) -> (i32, i32) {
    %c0_i32 = arith.constant 0 : i32
    %c0_i32_0 = arith.constant 0 : i32
    %c0_i32_1 = arith.constant 0 : i32
    return %c0_i32, %c0_i32_0 : i32, i32
  }
  func.func @transform_14(%arg0: i32) -> (i32, i32) {
    %c0_i32 = arith.constant 0 : i32
    %c0_i32_0 = arith.constant 0 : i32
    %c0_i32_1 = arith.constant 0 : i32
    return %c0_i32, %c0_i32_0 : i32, i32
  }
}

</mosaic_0001>

<llo_original>
// kernel: simple_quantum_conv_net.1
$region0: #{simple_quantum_conv_net.1}
  #allocation0 [shape = 'u32[]', space=smem, size = 0x4, offset = 0x4, fixed_abs, tag = 'smem constant byte address 0x4 - core index']
  #allocation1 [shape = 'u32[144,128]{1,0:T(1,128)}', space=vmem, size = 0x12000, scoped, tag = 'internal scratch']
  #allocation2 [shape = 'f32[6,648]{1,0:T(8,128)}', space=vmem, size = 0x6000, scoped, tag = 'scratch operand']
  #allocation3 [shape = 'f32[12,200]{1,0:T(8,128)}', space=vmem, size = 0x4000, scoped, tag = 'scratch operand']
  #allocation4 [shape = 'f32[6,222]{1,0:T(8,128)}', space=vmem, size = 0x2000, scoped, tag = 'scratch operand']
  %s0 = inlined_call_operand.vmem [shape: f32[4,686], index: 0, kind: input, shape index: {}]
  %s1 = inlined_call_operand.vmem [shape: f32[9,6,4], index: 1, kind: input, shape index: {}]
  %s2 = inlined_call_operand.vmem [shape: f32[2,6,1], index: 2, kind: input, shape index: {}]
  %s3 = inlined_call_operand.vmem [shape: f32[1,648], index: 3, kind: input, shape index: {}]
  %s4 = inlined_call_operand.vmem [shape: f32[629,222], index: 4, kind: input, shape index: {}]
  %s5 = inlined_call_operand.vmem [shape: f32[9,12,6], index: 5, kind: input, shape index: {}]
  %s6 = inlined_call_operand.vmem [shape: f32[2,12,1], index: 6, kind: input, shape index: {}]
  %s7 = inlined_call_operand.vmem [shape: f32[1,200], index: 7, kind: input, shape index: {}]
  %s8 = inlined_call_operand.vmem [shape: f32[189,32], index: 8, kind: input, shape index: {}]
  %s9 = inlined_call_operand.vmem [shape: f32[32,12], index: 9, kind: input, shape index: {}]
  %s10 = inlined_call_operand.vmem [shape: f32[2,1], index: 10, kind: input, shape index: {}]
  %s11 = inlined_call_operand.vmem [shape: f32[32,32], index: 11, kind: input, shape index: {}]
  %s12 = inlined_call_operand.vmem [shape: f32[2,32], index: 12, kind: input, shape index: {}]
  %s13 = inlined_call_operand.vmem [shape: f32[32,2], index: 13, kind: input, shape index: {}]
  %s14 = inlined_call_operand.vmem [shape: f32[4,2], index: 14, kind: output, shape index: {}]
  %s15 = sld [smem:[#allocation0]]
  $region66: #{simple_quantum_conv_net.1} parent=0
    _
  %s17 = ssub.s32 1, %s15
  %s18 = scalar_select 0, %s17, %s15
  // Predicated region
  $region2: #{simple_quantum_conv_net.1} parent=0 // pred_check
    _
  $region3: #{simple_quantum_conv_net.1} parent=0 // pred_check_branch
    %20 = sbr.rel (0) target = $region5
  $region4: #{simple_quantum_conv_net.1} parent=0 // pred_region
    _
  $region5: #{simple_quantum_conv_net.1} parent=0 // pred_fallthru
    _
  // Predicated region
  $region6: #{simple_quantum_conv_net.1} parent=0 // pred_check
    _
  $region7: #{simple_quantum_conv_net.1} parent=0 // pred_check_branch
    %22 = sbr.rel (0) target = $region9
  $region8: #{simple_quantum_conv_net.1} parent=0 // pred_region
    _
  $region9: #{simple_quantum_conv_net.1} parent=0 // pred_fallthru
    _
  // Predicated region
  $region10: #{simple_quantum_conv_net.1} parent=0 // pred_check
    _
  $region11: #{simple_quantum_conv_net.1} parent=0 // pred_check_branch
    %24 = sbr.rel (0) target = $region13
  $region12: #{simple_quantum_conv_net.1} parent=0 // pred_region
    _
  $region13: #{simple_quantum_conv_net.1} parent=0 // pred_fallthru
    _
  // Predicated region
  $region14: #{simple_quantum_conv_net.1} parent=0 // pred_check
    _
  $region15: #{simple_quantum_conv_net.1} parent=0 // pred_check_branch
    %26 = sbr.rel (0) target = $region17
  $region16: #{simple_quantum_conv_net.1} parent=0 // pred_region
    _
  $region17: #{simple_quantum_conv_net.1} parent=0 // pred_fallthru
    _
  // Predicated region
  $region18: #{simple_quantum_conv_net.1} parent=0 // pred_check
    _
  $region19: #{simple_quantum_conv_net.1} parent=0 // pred_check_branch
    %28 = sbr.rel (0) target = $region21
  $region20: #{simple_quantum_conv_net.1} parent=0 // pred_region
    _
  $region21: #{simple_quantum_conv_net.1} parent=0 // pred_fallthru
    _
  // Predicated region
  $region22: #{simple_quantum_conv_net.1} parent=0 // pred_check
    _
  $region23: #{simple_quantum_conv_net.1} parent=0 // pred_check_branch
    %30 = sbr.rel (0) target = $region25
  $region24: #{simple_quantum_conv_net.1} parent=0 // pred_region
    _
  $region25: #{simple_quantum_conv_net.1} parent=0 // pred_fallthru
    _
  // Predicated region
  $region26: #{simple_quantum_conv_net.1} parent=0 // pred_check
    _
  $region27: #{simple_quantum_conv_net.1} parent=0 // pred_check_branch
    %32 = sbr.rel (0) target = $region29
  $region28: #{simple_quantum_conv_net.1} parent=0 // pred_region
    _
  $region29: #{simple_quantum_conv_net.1} parent=0 // pred_fallthru
    _
  // Predicated region
  $region30: #{simple_quantum_conv_net.1} parent=0 // pred_check
    _
  $region31: #{simple_quantum_conv_net.1} parent=0 // pred_check_branch
    %34 = sbr.rel (0) target = $region33
  $region32: #{simple_quantum_conv_net.1} parent=0 // pred_region
    _
  $region33: #{simple_quantum_conv_net.1} parent=0 // pred_fallthru
    _
  // Predicated region
  $region34: #{simple_quantum_conv_net.1} parent=0 // pred_check
    _
  $region35: #{simple_quantum_conv_net.1} parent=0 // pred_check_branch
    %36 = sbr.rel (0) target = $region37
  $region36: #{simple_quantum_conv_net.1} parent=0 // pred_region
    _
  $region37: #{simple_quantum_conv_net.1} parent=0 // pred_fallthru
    _
  // Predicated region
  $region38: #{simple_quantum_conv_net.1} parent=0 // pred_check
    _
  $region39: #{simple_quantum_conv_net.1} parent=0 // pred_check_branch
    %38 = sbr.rel (0) target = $region41
  $region40: #{simple_quantum_conv_net.1} parent=0 // pred_region
    _
  $region41: #{simple_quantum_conv_net.1} parent=0 // pred_fallthru
    _
  // Predicated region
  $region42: #{simple_quantum_conv_net.1} parent=0 // pred_check
    _
  $region43: #{simple_quantum_conv_net.1} parent=0 // pred_check_branch
    %40 = sbr.rel (0) target = $region45
  $region44: #{simple_quantum_conv_net.1} parent=0 // pred_region
    _
  $region45: #{simple_quantum_conv_net.1} parent=0 // pred_fallthru
    _
  // Predicated region
  $region46: #{simple_quantum_conv_net.1} parent=0 // pred_check
    _
  $region47: #{simple_quantum_conv_net.1} parent=0 // pred_check_branch
    %42 = sbr.rel (0) target = $region49
  $region48: #{simple_quantum_conv_net.1} parent=0 // pred_region
    _
  $region49: #{simple_quantum_conv_net.1} parent=0 // pred_fallthru
    _
  // Predicated region
  $region50: #{simple_quantum_conv_net.1} parent=0 // pred_check
    _
  $region51: #{simple_quantum_conv_net.1} parent=0 // pred_check_branch
    %44 = sbr.rel (0) target = $region53
  $region52: #{simple_quantum_conv_net.1} parent=0 // pred_region
    _
  $region53: #{simple_quantum_conv_net.1} parent=0 // pred_fallthru
    _
  // Predicated region
  $region54: #{simple_quantum_conv_net.1} parent=0 // pred_check
    _
  $region55: #{simple_quantum_conv_net.1} parent=0 // pred_check_branch
    %46 = sbr.rel (0) target = $region57
  $region56: #{simple_quantum_conv_net.1} parent=0 // pred_region
    _
  $region57: #{simple_quantum_conv_net.1} parent=0 // pred_fallthru
    _
  %v47 = vld [vmem:[%s0] sm:$0xff]
  %v48 = vld [vmem:[%s0 + $0x8] sm:$0xff]
  %v49 = vld [vmem:[%s0 + $0x10] sm:$0xff]
  %v50 = vld [vmem:[%s1] sm:$0x3f]
  %s51 = scalar_lea.vmem %s1, 8
  %v52 = vld [vmem:[%s51] sm:$0x3f]
  %v56 = vcombine.high %v47, %v47
  %v57 = vcombine.high %v48, %v48
  %v58 = vcombine.high %v49, %v49
  %59 = vrot.lane.b32.xlu0 %v47, 127
  %v60 = vpop.permute.xlu0 %59
  %61 = vrot.lane.b32.xlu0 %v56, 127
  %v62 = vpop.permute.xlu0 %61
  %63 = vrot.lane.b32.xlu0 %v48, 127
  %v64 = vpop.permute.xlu0 %63
  %65 = vrot.lane.b32.xlu0 %v57, 127
  %v66 = vpop.permute.xlu0 %65
  %67 = vrot.lane.b32.xlu0 %v49, 127
  %v68 = vpop.permute.xlu0 %67
  %69 = vrot.lane.b32.xlu0 %v58, 127
  %v70 = vpop.permute.xlu0 %69
  %vm71 = vcmask 1039360
  %v72 = vsel %vm71, %v60, %v62
  %v73 = vsel %vm71, %v62, %v64
  %v74 = vsel %vm71, %v64, %v66
  %v75 = vsel %vm71, %v66, %v68
  %v76 = vsel %vm71, %v68, %v70
  %vm77 = vcmask 31744
  %v79 = vsel %vm77, %v52, 0
  %vm81 = vcmask 1043456
  %v82 = vsel %vm81, %v72, 0
  %v84 = vsel %vm81, %v73, 0
  %v86 = vsel %vm81, %v74, 0
  %v88 = vsel %vm81, %v75, 0
  %v90 = vsel %vm81, %v76, 0
  %v92 = vsel %vm81, %v70, 0
  %94 = vmatprep.subr.mxu0 %v84
  %95 = vmatpush1.msra.mxu0 %v82
  %96 = vmatprep.subr.mxu0 0.0
  %97 = vmatpush1.msra.mxu0 0.0
  %98 = vmatprep.subr.mxu0 0.0
  %99 = vmatpush1.msra.mxu0 0.0
  %100 = vmatprep.subr.mxu0 0.0
  %101 = vmatpush1.msra.mxu0 0.0
  %102 = vmatprep.subr.mxu0 0.0
  %103 = vmatpush1.msra.mxu0 0.0
  %104 = vmatprep.subr.mxu0 0.0
  %105 = vmatpush1.msra.mxu0 0.0
  %106 = vmatprep.subr.mxu0 0.0
  %107 = vmatpush1.msra.mxu0 0.0
  %108 = vmatprep.subr.mxu0 0.0
  %109 = vmatpush1.msra.mxu0 0.0
  %110 = vmatprep.subr.mxu0 0.0
  %111 = vmatpush1.msra.mxu0 0.0
  %112 = vmatprep.subr.mxu0 0.0
  %113 = vmatpush1.msra.mxu0 0.0
  %114 = vmatprep.subr.mxu0 0.0
  %115 = vmatpush1.msra.mxu0 0.0
  %116 = vmatprep.subr.mxu0 0.0
  %117 = vmatpush1.msra.mxu0 0.0
  %118 = vmatprep.subr.mxu0 0.0
  %119 = vmatpush1.msra.mxu0 0.0
  %120 = vmatprep.subr.mxu0 0.0
  %121 = vmatpush1.msra.mxu0 0.0
  %122 = vmatprep.subr.mxu0 0.0
  %123 = vmatpush1.msra.mxu0 0.0
  %124 = vmatprep.subr.mxu0 0.0
  %125 = vmatpush1.msra.mxu0 0.0
  %126 = vmatprep.subr.mxu0 0.0
  %127 = vmatpush1.msra.mxu0 0.0
  %128 = vmatprep.subr.mxu0 0.0
  %129 = vmatpush1.msra.mxu0 0.0
  %130 = vmatprep.subr.mxu0 0.0
  %131 = vmatpush1.msra.mxu0 0.0
  %132 = vmatprep.subr.mxu0 0.0
  %133 = vmatpush1.msra.mxu0 0.0
  %134 = vmatprep.subr.mxu0 0.0
  %135 = vmatpush1.msra.mxu0 0.0
  %136 = vmatprep.subr.mxu0 0.0
  %137 = vmatpush1.msra.mxu0 0.0
  %138 = vmatprep.subr.mxu0 0.0
  %139 = vmatpush1.msra.mxu0 0.0
  %140 = vmatprep.subr.mxu0 0.0
  %141 = vmatpush1.msra.mxu0 0.0
  %142 = vmatprep.subr.mxu0 0.0
  %143 = vmatpush1.msra.mxu0 0.0
  %144 = vmatprep.subr.mxu0 0.0
  %145 = vmatpush1.msra.mxu0 0.0
  %146 = vmatprep.subr.mxu0 0.0
  %147 = vmatpush1.msra.mxu0 0.0
  %148 = vmatprep.subr.mxu0 0.0
  %149 = vmatpush1.msra.mxu0 0.0
  %150 = vmatprep.subr.mxu0 0.0
  %151 = vmatpush1.msra.mxu0 0.0
  %152 = vmatprep.subr.mxu0 0.0
  %153 = vmatpush1.msra.mxu0 0.0
  %154 = vmatprep.subr.mxu0 0.0
  %155 = vmatpush1.msra.mxu0 0.0
  %156 = vmatprep.subr.mxu0 0.0
  %157 = vmatpush1.msra.mxu0 0.0
  %158 = vmatprep.mubr.f32.mxu0 0.0
  %159 = vmatmul.mubr.f32.gmra.mrb[0].mxu0 %v79
  %v160 = vpop.f32.mrb[0].mxu0
  %v161 = vadd.f32 0.0, %v160
  %v162 = vpop.f32.mrb[0].mxu0
  %v163 = vadd.f32 0.0, %v162
  %164 = vdwg.mxu0
  %165 = vmatprep.subr.mxu0 %v88
  %166 = vmatpush1.msra.mxu0 %v86
  %167 = vmatprep.subr.mxu0 0.0
  %168 = vmatpush1.msra.mxu0 0.0
  %169 = vmatprep.subr.mxu0 0.0
  %170 = vmatpush1.msra.mxu0 0.0
  %171 = vmatprep.subr.mxu0 0.0
  %172 = vmatpush1.msra.mxu0 0.0
  %173 = vmatprep.subr.mxu0 0.0
  %174 = vmatpush1.msra.mxu0 0.0
  %175 = vmatprep.subr.mxu0 0.0
  %176 = vmatpush1.msra.mxu0 0.0
  %177 = vmatprep.subr.mxu0 0.0
  %178 = vmatpush1.msra.mxu0 0.0
  %179 = vmatprep.subr.mxu0 0.0
  %180 = vmatpush1.msra.mxu0 0.0
  %181 = vmatprep.subr.mxu0 0.0
  %182 = vmatpush1.msra.mxu0 0.0
  %183 = vmatprep.subr.mxu0 0.0
  %184 = vmatpush1.msra.mxu0 0.0
  %185 = vmatprep.subr.mxu0 0.0
  %186 = vmatpush1.msra.mxu0 0.0
  %187 = vmatprep.subr.mxu0 0.0
  %188 = vmatpush1.msra.mxu0 0.0
  %189 = vmatprep.subr.mxu0 0.0
  %190 = vmatpush1.msra.mxu0 0.0
  %191 = vmatprep.subr.mxu0 0.0
  %192 = vmatpush1.msra.mxu0 0.0
  %193 = vmatprep.subr.mxu0 0.0
  %194 = vmatpush1.msra.mxu0 0.0
  %195 = vmatprep.subr.mxu0 0.0
  %196 = vmatpush1.msra.mxu0 0.0
  %197 = vmatprep.subr.mxu0 0.0
  %198 = vmatpush1.msra.mxu0 0.0
  %199 = vmatprep.subr.mxu0 0.0
  %200 = vmatpush1.msra.mxu0 0.0
  %201 = vmatprep.subr.mxu0 0.0
  %202 = vmatpush1.msra.mxu0 0.0
  %203 = vmatprep.subr.mxu0 0.0
  %204 = vmatpush1.msra.mxu0 0.0
  %205 = vmatprep.subr.mxu0 0.0
  %206 = vmatpush1.msra.mxu0 0.0
  %207 = vmatprep.subr.mxu0 0.0
  %208 = vmatpush1.msra.mxu0 0.0
  %209 = vmatprep.subr.mxu0 0.0
  %210 = vmatpush1.msra.mxu0 0.0
  %211 = vmatprep.subr.mxu0 0.0
  %212 = vmatpush1.msra.mxu0 0.0
  %213 = vmatprep.subr.mxu0 0.0
  %214 = vmatpush1.msra.mxu0 0.0
  %215 = vmatprep.subr.mxu0 0.0
  %216 = vmatpush1.msra.mxu0 0.0
  %217 = vmatprep.subr.mxu0 0.0
  %218 = vmatpush1.msra.mxu0 0.0
  %219 = vmatprep.subr.mxu0 0.0
  %220 = vmatpush1.msra.mxu0 0.0
  %221 = vmatprep.subr.mxu0 0.0
  %222 = vmatpush1.msra.mxu0 0.0
  %223 = vmatprep.subr.mxu0 0.0
  %224 = vmatpush1.msra.mxu0 0.0
  %225 = vmatprep.subr.mxu0 0.0
  %226 = vmatpush1.msra.mxu0 0.0
  %227 = vmatprep.subr.mxu0 0.0
  %228 = vmatpush1.msra.mxu0 0.0
  %229 = vmatprep.mubr.f32.mxu0 0.0
  %230 = vmatmul.mubr.f32.gmra.mrb[0].mxu0 %v79
  %v231 = vpop.f32.mrb[0].mxu0
  %v232 = vadd.f32 0.0, %v231
  %v233 = vpop.f32.mrb[0].mxu0
  %v234 = vadd.f32 0.0, %v233
  %235 = vdwg.mxu0
  %236 = vmatprep.subr.mxu0 %v92
  %237 = vmatpush1.msra.mxu0 %v90
  %238 = vmatprep.subr.mxu0 0.0
  %239 = vmatpush1.msra.mxu0 0.0
  %240 = vmatprep.subr.mxu0 0.0
  %241 = vmatpush1.msra.mxu0 0.0
  %242 = vmatprep.subr.mxu0 0.0
  %243 = vmatpush1.msra.mxu0 0.0
  %244 = vmatprep.subr.mxu0 0.0
  %245 = vmatpush1.msra.mxu0 0.0
  %246 = vmatprep.subr.mxu0 0.0
  %247 = vmatpush1.msra.mxu0 0.0
  %248 = vmatprep.subr.mxu0 0.0
  %249 = vmatpush1.msra.mxu0 0.0
  %250 = vmatprep.subr.mxu0 0.0
  %251 = vmatpush1.msra.mxu0 0.0
  %252 = vmatprep.subr.mxu0 0.0
  %253 = vmatpush1.msra.mxu0 0.0
  %254 = vmatprep.subr.mxu0 0.0
  %255 = vmatpush1.msra.mxu0 0.0
  %256 = vmatprep.subr.mxu0 0.0
  %257 = vmatpush1.msra.mxu0 0.0
  %258 = vmatprep.subr.mxu0 0.0
  %259 = vmatpush1.msra.mxu0 0.0
  %260 = vmatprep.subr.mxu0 0.0
  %261 = vmatpush1.msra.mxu0 0.0
  %262 = vmatprep.subr.mxu0 0.0
  %263 = vmatpush1.msra.mxu0 0.0
  %264 = vmatprep.subr.mxu0 0.0
  %265 = vmatpush1.msra.mxu0 0.0
  %266 = vmatprep.subr.mxu0 0.0
  %267 = vmatpush1.msra.mxu0 0.0
  %268 = vmatprep.subr.mxu0 0.0
  %269 = vmatpush1.msra.mxu0 0.0
  %270 = vmatprep.subr.mxu0 0.0
  %271 = vmatpush1.msra.mxu0 0.0
  %272 = vmatprep.subr.mxu0 0.0
  %273 = vmatpush1.msra.mxu0 0.0
  %274 = vmatprep.subr.mxu0 0.0
  %275 = vmatpush1.msra.mxu0 0.0
  %276 = vmatprep.subr.mxu0 0.0
  %277 = vmatpush1.msra.mxu0 0.0
  %278 = vmatprep.subr.mxu0 0.0
  %279 = vmatpush1.msra.mxu0 0.0
  %280 = vmatprep.subr.mxu0 0.0
  %281 = vmatpush1.msra.mxu0 0.0
  %282 = vmatprep.subr.mxu0 0.0
  %283 = vmatpush1.msra.mxu0 0.0
  %284 = vmatprep.subr.mxu0 0.0
  %285 = vmatpush1.msra.mxu0 0.0
  %286 = vmatprep.subr.mxu0 0.0
  %287 = vmatpush1.msra.mxu0 0.0
  %288 = vmatprep.subr.mxu0 0.0
  %289 = vmatpush1.msra.mxu0 0.0
  %290 = vmatprep.subr.mxu0 0.0
  %291 = vmatpush1.msra.mxu0 0.0
  %292 = vmatprep.subr.mxu0 0.0
  %293 = vmatpush1.msra.mxu0 0.0
  %294 = vmatprep.subr.mxu0 0.0
  %295 = vmatpush1.msra.mxu0 0.0
  %296 = vmatprep.subr.mxu0 0.0
  %297 = vmatpush1.msra.mxu0 0.0
  %298 = vmatprep.subr.mxu0 0.0
  %299 = vmatpush1.msra.mxu0 0.0
  %300 = vmatprep.mubr.f32.mxu0 0.0
  %301 = vmatmul.mubr.f32.gmra.mrb[0].mxu0 %v79
  %v302 = vpop.f32.mrb[0].mxu0
  %v303 = vadd.f32 0.0, %v302
  %v304 = vpop.f32.mrb[0].mxu0
  %v305 = vadd.f32 0.0, %v304
  %306 = vdwg.mxu0
  %v308 = vsel %vm77, %v50, 0
  %v310 = vsel %vm81, %v47, 0
  %v312 = vsel %vm81, %v56, 0
  %v314 = vsel %vm81, %v48, 0
  %v316 = vsel %vm81, %v57, 0
  %v318 = vsel %vm81, %v49, 0
  %v320 = vsel %vm81, %v58, 0
  %322 = vmatprep.subr.mxu0 %v312
  %323 = vmatpush1.msra.mxu0 %v310
  %324 = vmatprep.subr.mxu0 0.0
  %325 = vmatpush1.msra.mxu0 0.0
  %326 = vmatprep.subr.mxu0 0.0
  %327 = vmatpush1.msra.mxu0 0.0
  %328 = vmatprep.subr.mxu0 0.0
  %329 = vmatpush1.msra.mxu0 0.0
  %330 = vmatprep.subr.mxu0 0.0
  %331 = vmatpush1.msra.mxu0 0.0
  %332 = vmatprep.subr.mxu0 0.0
  %333 = vmatpush1.msra.mxu0 0.0
  %334 = vmatprep.subr.mxu0 0.0
  %335 = vmatpush1.msra.mxu0 0.0
  %336 = vmatprep.subr.mxu0 0.0
  %337 = vmatpush1.msra.mxu0 0.0
  %338 = vmatprep.subr.mxu0 0.0
  %339 = vmatpush1.msra.mxu0 0.0
  %340 = vmatprep.subr.mxu0 0.0
  %341 = vmatpush1.msra.mxu0 0.0
  %342 = vmatprep.subr.mxu0 0.0
  %343 = vmatpush1.msra.mxu0 0.0
  %344 = vmatprep.subr.mxu0 0.0
  %345 = vmatpush1.msra.mxu0 0.0
  %346 = vmatprep.subr.mxu0 0.0
  %347 = vmatpush1.msra.mxu0 0.0
  %348 = vmatprep.subr.mxu0 0.0
  %349 = vmatpush1.msra.mxu0 0.0
  %350 = vmatprep.subr.mxu0 0.0
  %351 = vmatpush1.msra.mxu0 0.0
  %352 = vmatprep.subr.mxu0 0.0
  %353 = vmatpush1.msra.mxu0 0.0
  %354 = vmatprep.subr.mxu0 0.0
  %355 = vmatpush1.msra.mxu0 0.0
  %356 = vmatprep.subr.mxu0 0.0
  %357 = vmatpush1.msra.mxu0 0.0
  %358 = vmatprep.subr.mxu0 0.0
  %359 = vmatpush1.msra.mxu0 0.0
  %360 = vmatprep.subr.mxu0 0.0
  %361 = vmatpush1.msra.mxu0 0.0
  %362 = vmatprep.subr.mxu0 0.0
  %363 = vmatpush1.msra.mxu0 0.0
  %364 = vmatprep.subr.mxu0 0.0
  %365 = vmatpush1.msra.mxu0 0.0
  %366 = vmatprep.subr.mxu0 0.0
  %367 = vmatpush1.msra.mxu0 0.0
  %368 = vmatprep.subr.mxu0 0.0
  %369 = vmatpush1.msra.mxu0 0.0
  %370 = vmatprep.subr.mxu0 0.0
  %371 = vmatpush1.msra.mxu0 0.0
  %372 = vmatprep.subr.mxu0 0.0
  %373 = vmatpush1.msra.mxu0 0.0
  %374 = vmatprep.subr.mxu0 0.0
  %375 = vmatpush1.msra.mxu0 0.0
  %376 = vmatprep.subr.mxu0 0.0
  %377 = vmatpush1.msra.mxu0 0.0
  %378 = vmatprep.subr.mxu0 0.0
  %379 = vmatpush1.msra.mxu0 0.0
  %380 = vmatprep.subr.mxu0 0.0
  %381 = vmatpush1.msra.mxu0 0.0
  %382 = vmatprep.subr.mxu0 0.0
  %383 = vmatpush1.msra.mxu0 0.0
  %384 = vmatprep.subr.mxu0 0.0
  %385 = vmatpush1.msra.mxu0 0.0
  %386 = vmatprep.mubr.f32.mxu0 0.0
  %387 = vmatmul.mubr.f32.gmra.mrb[0].mxu0 %v308
  %v388 = vpop.f32.mrb[0].mxu0
  %v389 = vadd.f32 %v161, %v388
  %v390 = vpop.f32.mrb[0].mxu0
  %v391 = vadd.f32 %v163, %v390
  %392 = vdwg.mxu0
  %393 = vmatprep.subr.mxu0 %v316
  %394 = vmatpush1.msra.mxu0 %v314
  %395 = vmatprep.subr.mxu0 0.0
  %396 = vmatpush1.msra.mxu0 0.0
  %397 = vmatprep.subr.mxu0 0.0
  %398 = vmatpush1.msra.mxu0 0.0
  %399 = vmatprep.subr.mxu0 0.0
  %400 = vmatpush1.msra.mxu0 0.0
  %401 = vmatprep.subr.mxu0 0.0
  %402 = vmatpush1.msra.mxu0 0.0
  %403 = vmatprep.subr.mxu0 0.0
  %404 = vmatpush1.msra.mxu0 0.0
  %405 = vmatprep.subr.mxu0 0.0
  %406 = vmatpush1.msra.mxu0 0.0
  %407 = vmatprep.subr.mxu0 0.0
  %408 = vmatpush1.msra.mxu0 0.0
  %409 = vmatprep.subr.mxu0 0.0
  %410 = vmatpush1.msra.mxu0 0.0
  %411 = vmatprep.subr.mxu0 0.0
  %412 = vmatpush1.msra.mxu0 0.0
  %413 = vmatprep.subr.mxu0 0.0
  %414 = vmatpush1.msra.mxu0 0.0
  %415 = vmatprep.subr.mxu0 0.0
  %416 = vmatpush1.msra.mxu0 0.0
  %417 = vmatprep.subr.mxu0 0.0
  %418 = vmatpush1.msra.mxu0 0.0
  %419 = vmatprep.subr.mxu0 0.0
  %420 = vmatpush1.msra.mxu0 0.0
  %421 = vmatprep.subr.mxu0 0.0
  %422 = vmatpush1.msra.mxu0 0.0
  %423 = vmatprep.subr.mxu0 0.0
  %424 = vmatpush1.msra.mxu0 0.0
  %425 = vmatprep.subr.mxu0 0.0
  %426 = vmatpush1.msra.mxu0 0.0
  %427 = vmatprep.subr.mxu0 0.0
  %428 = vmatpush1.msra.mxu0 0.0
  %429 = vmatprep.subr.mxu0 0.0
  %430 = vmatpush1.msra.mxu0 0.0
  %431 = vmatprep.subr.mxu0 0.0
  %432 = vmatpush1.msra.mxu0 0.0
  %433 = vmatprep.subr.mxu0 0.0
  %434 = vmatpush1.msra.mxu0 0.0
  %435 = vmatprep.subr.mxu0 0.0
  %436 = vmatpush1.msra.mxu0 0.0
  %437 = vmatprep.subr.mxu0 0.0
  %438 = vmatpush1.msra.mxu0 0.0
  %439 = vmatprep.subr.mxu0 0.0
  %440 = vmatpush1.msra.mxu0 0.0
  %441 = vmatprep.subr.mxu0 0.0
  %442 = vmatpush1.msra.mxu0 0.0
  %443 = vmatprep.subr.mxu0 0.0
  %444 = vmatpush1.msra.mxu0 0.0
  %445 = vmatprep.subr.mxu0 0.0
  %446 = vmatpush1.msra.mxu0 0.0
  %447 = vmatprep.subr.mxu0 0.0
  %448 = vmatpush1.msra.mxu0 0.0
  %449 = vmatprep.subr.mxu0 0.0
  %450 = vmatpush1.msra.mxu0 0.0
  %451 = vmatprep.subr.mxu0 0.0
  %452 = vmatpush1.msra.mxu0 0.0
  %453 = vmatprep.subr.mxu0 0.0
  %454 = vmatpush1.msra.mxu0 0.0
  %455 = vmatprep.subr.mxu0 0.0
  %456 = vmatpush1.msra.mxu0 0.0
  %457 = vmatprep.mubr.f32.mxu0 0.0
  %458 = vmatmul.mubr.f32.gmra.mrb[0].mxu0 %v308
  %v459 = vpop.f32.mrb[0].mxu0
  %v460 = vadd.f32 %v232, %v459
  %v461 = vpop.f32.mrb[0].mxu0
  %v462 = vadd.f32 %v234, %v461
  %463 = vdwg.mxu0
  %464 = vmatprep.subr.mxu0 %v320
  %465 = vmatpush1.msra.mxu0 %v318
  %466 = vmatprep.subr.mxu0 0.0
  %467 = vmatpush1.msra.mxu0 0.0
  %468 = vmatprep.subr.mxu0 0.0
  %469 = vmatpush1.msra.mxu0 0.0
  %470 = vmatprep.subr.mxu0 0.0
  %471 = vmatpush1.msra.mxu0 0.0
  %472 = vmatprep.subr.mxu0 0.0
  %473 = vmatpush1.msra.mxu0 0.0
  %474 = vmatprep.subr.mxu0 0.0
  %475 = vmatpush1.msra.mxu0 0.0
  %476 = vmatprep.subr.mxu0 0.0
  %477 = vmatpush1.msra.mxu0 0.0
  %478 = vmatprep.subr.mxu0 0.0
  %479 = vmatpush1.msra.mxu0 0.0
  %480 = vmatprep.subr.mxu0 0.0
  %481 = vmatpush1.msra.mxu0 0.0
  %482 = vmatprep.subr.mxu0 0.0
  %483 = vmatpush1.msra.mxu0 0.0
  %484 = vmatprep.subr.mxu0 0.0
  %485 = vmatpush1.msra.mxu0 0.0
  %486 = vmatprep.subr.mxu0 0.0
  %487 = vmatpush1.msra.mxu0 0.0
  %488 = vmatprep.subr.mxu0 0.0
  %489 = vmatpush1.msra.mxu0 0.0
  %490 = vmatprep.subr.mxu0 0.0
  %491 = vmatpush1.msra.mxu0 0.0
  %492 = vmatprep.subr.mxu0 0.0
  %493 = vmatpush1.msra.mxu0 0.0
  %494 = vmatprep.subr.mxu0 0.0
  %495 = vmatpush1.msra.mxu0 0.0
  %496 = vmatprep.subr.mxu0 0.0
  %497 = vmatpush1.msra.mxu0 0.0
  %498 = vmatprep.subr.mxu0 0.0
  %499 = vmatpush1.msra.mxu0 0.0
  %500 = vmatprep.subr.mxu0 0.0
  %501 = vmatpush1.msra.mxu0 0.0
  %502 = vmatprep.subr.mxu0 0.0
  %503 = vmatpush1.msra.mxu0 0.0
  %504 = vmatprep.subr.mxu0 0.0
  %505 = vmatpush1.msra.mxu0 0.0
  %506 = vmatprep.subr.mxu0 0.0
  %507 = vmatpush1.msra.mxu0 0.0
  %508 = vmatprep.subr.mxu0 0.0
  %509 = vmatpush1.msra.mxu0 0.0
  %510 = vmatprep.subr.mxu0 0.0
  %511 = vmatpush1.msra.mxu0 0.0
  %512 = vmatprep.subr.mxu0 0.0
  %513 = vmatpush1.msra.mxu0 0.0
  %514 = vmatprep.subr.mxu0 0.0
  %515 = vmatpush1.msra.mxu0 0.0
  %516 = vmatprep.subr.mxu0 0.0
  %517 = vmatpush1.msra.mxu0 0.0
  %518 = vmatprep.subr.mxu0 0.0
  %519 = vmatpush1.msra.mxu0 0.0
  %520 = vmatprep.subr.mxu0 0.0
  %521 = vmatpush1.msra.mxu0 0.0
  %522 = vmatprep.subr.mxu0 0.0
  %523 = vmatpush1.msra.mxu0 0.0
  %524 = vmatprep.subr.mxu0 0.0
  %525 = vmatpush1.msra.mxu0 0.0
  %526 = vmatprep.subr.mxu0 0.0
  %527 = vmatpush1.msra.mxu0 0.0
  %528 = vmatprep.mubr.f32.mxu0 0.0
  %529 = vmatmul.mubr.f32.gmra.mrb[0].mxu0 %v308
  %v530 = vpop.f32.mrb[0].mxu0
  %v531 = vadd.f32 %v303, %v530
  %v532 = vpop.f32.mrb[0].mxu0
  %v533 = vadd.f32 %v305, %v532
  %534 = vdwg.mxu0
  %v535 = vld [vmem:[%s0] sm:$0xff]
  %v536 = vld [vmem:[%s0 + $0x8] sm:$0xff]
  %v537 = vld [vmem:[%s0 + $0x10] sm:$0xff]
  %s538 = scalar_lea.vmem %s1, 16
  %v539 = vld [vmem:[%s538] sm:$0x3f]
  %v543 = vcombine.high %v535, %v535
  %v544 = vcombine.high %v536, %v536
  %v545 = vcombine.high %v537, %v537
  %546 = vrot.lane.b32.xlu0 %v535, 126
  %v547 = vpop.permute.xlu0 %546
  %548 = vrot.lane.b32.xlu0 %v543, 126
  %v549 = vpop.permute.xlu0 %548
  %550 = vrot.lane.b32.xlu0 %v536, 126
  %v551 = vpop.permute.xlu0 %550
  %552 = vrot.lane.b32.xlu0 %v544, 126
  %v553 = vpop.permute.xlu0 %552
  %554 = vrot.lane.b32.xlu0 %v537, 126
  %v555 = vpop.permute.xlu0 %554
  %556 = vrot.lane.b32.xlu0 %v545, 126
  %v557 = vpop.permute.xlu0 %556
  %vm558 = vcmask 1031168
  %v559 = vsel %vm558, %v547, %v549
  %v560 = vsel %vm558, %v549, %v551
  %v561 = vsel %vm558, %v551, %v553
  %v562 = vsel %vm558, %v553, %v555
  %v563 = vsel %vm558, %v555, %v557
  %v565 = vsel %vm77, %v539, 0
  %v567 = vsel %vm81, %v559, 0
  %v569 = vsel %vm81, %v560, 0
  %v571 = vsel %vm81, %v561, 0
  %v573 = vsel %vm81, %v562, 0
  %v575 = vsel %vm81, %v563, 0
  %v577 = vsel %vm81, %v557, 0
  %579 = vmatprep.subr.mxu0 %v569
  %580 = vmatpush1.msra.mxu0 %v567
  %581 = vmatprep.subr.mxu0 0.0
  %582 = vmatpush1.msra.mxu0 0.0
  %583 = vmatprep.subr.mxu0 0.0
  %584 = vmatpush1.msra.mxu0 0.0
  %585 = vmatprep.subr.mxu0 0.0
  %586 = vmatpush1.msra.mxu0 0.0
  %587 = vmatprep.subr.mxu0 0.0
  %588 = vmatpush1.msra.mxu0 0.0
  %589 = vmatprep.subr.mxu0 0.0
  %590 = vmatpush1.msra.mxu0 0.0
  %591 = vmatprep.subr.mxu0 0.0
  %592 = vmatpush1.msra.mxu0 0.0
  %593 = vmatprep.subr.mxu0 0.0
  %594 = vmatpush1.msra.mxu0 0.0
  %595 = vmatprep.subr.mxu0 0.0
  %596 = vmatpush1.msra.mxu0 0.0
  %597 = vmatprep.subr.mxu0 0.0
  %598 = vmatpush1.msra.mxu0 0.0
  %599 = vmatprep.subr.mxu0 0.0
  %600 = vmatpush1.msra.mxu0 0.0
  %601 = vmatprep.subr.mxu0 0.0
  %602 = vmatpush1.msra.mxu0 0.0
  %603 = vmatprep.subr.mxu0 0.0
  %604 = vmatpush1.msra.mxu0 0.0
  %605 = vmatprep.subr.mxu0 0.0
  %606 = vmatpush1.msra.mxu0 0.0
  %607 = vmatprep.subr.mxu0 0.0
  %608 = vmatpush1.msra.mxu0 0.0
  %609 = vmatprep.subr.mxu0 0.0
  %610 = vmatpush1.msra.mxu0 0.0
  %611 = vmatprep.subr.mxu0 0.0
  %612 = vmatpush1.msra.mxu0 0.0
  %613 = vmatprep.subr.mxu0 0.0
  %614 = vmatpush1.msra.mxu0 0.0
  %615 = vmatprep.subr.mxu0 0.0
  %616 = vmatpush1.msra.mxu0 0.0
  %617 = vmatprep.subr.mxu0 0.0
  %618 = vmatpush1.msra.mxu0 0.0
  %619 = vmatprep.subr.mxu0 0.0
  %620 = vmatpush1.msra.mxu0 0.0
  %621 = vmatprep.subr.mxu0 0.0
  %622 = vmatpush1.msra.mxu0 0.0
  %623 = vmatprep.subr.mxu0 0.0
  %624 = vmatpush1.msra.mxu0 0.0
  %625 = vmatprep.subr.mxu0 0.0
  %626 = vmatpush1.msra.mxu0 0.0
  %627 = vmatprep.subr.mxu0 0.0
  %628 = vmatpush1.msra.mxu0 0.0
  %629 = vmatprep.subr.mxu0 0.0
  %630 = vmatpush1.msra.mxu0 0.0
  %631 = vmatprep.subr.mxu0 0.0
  %632 = vmatpush1.msra.mxu0 0.0
  %633 = vmatprep.subr.mxu0 0.0
  %634 = vmatpush1.msra.mxu0 0.0
  %635 = vmatprep.subr.mxu0 0.0
  %636 = vmatpush1.msra.mxu0 0.0
  %637 = vmatprep.subr.mxu0 0.0
  %638 = vmatpush1.msra.mxu0 0.0
  %639 = vmatprep.subr.mxu0 0.0
  %640 = vmatpush1.msra.mxu0 0.0
  %641 = vmatprep.subr.mxu0 0.0
  %642 = vmatpush1.msra.mxu0 0.0
  %643 = vmatprep.mubr.f32.mxu0 0.0
  %644 = vmatmul.mubr.f32.gmra.mrb[0].mxu0 %v565
  %v645 = vpop.f32.mrb[0].mxu0
  %v646 = vadd.f32 0.0, %v645
  %v647 = vpop.f32.mrb[0].mxu0
  %v648 = vadd.f32 0.0, %v647
  %649 = vdwg.mxu0
  %650 = vmatprep.subr.mxu0 %v573
  %651 = vmatpush1.msra.mxu0 %v571
  %652 = vmatprep.subr.mxu0 0.0
  %653 = vmatpush1.msra.mxu0 0.0
  %654 = vmatprep.subr.mxu0 0.0
  %655 = vmatpush1.msra.mxu0 0.0
  %656 = vmatprep.subr.mxu0 0.0
  %657 = vmatpush1.msra.mxu0 0.0
  %658 = vmatprep.subr.mxu0 0.0
  %659 = vmatpush1.msra.mxu0 0.0
  %660 = vmatprep.subr.mxu0 0.0
  %661 = vmatpush1.msra.mxu0 0.0
  %662 = vmatprep.subr.mxu0 0.0
  %663 = vmatpush1.msra.mxu0 0.0
  %664 = vmatprep.subr.mxu0 0.0
  %665 = vmatpush1.msra.mxu0 0.0
  %666 = vmatprep.subr.mxu0 0.0
  %667 = vmatpush1.msra.mxu0 0.0
  %668 = vmatprep.subr.mxu0 0.0
  %669 = vmatpush1.msra.mxu0 0.0
  %670 = vmatprep.subr.mxu0 0.0
  %671 = vmatpush1.msra.mxu0 0.0
  %672 = vmatprep.subr.mxu0 0.0
  %673 = vmatpush1.msra.mxu0 0.0
  %674 = vmatprep.subr.mxu0 0.0
  %675 = vmatpush1.msra.mxu0 0.0
  %676 = vmatprep.subr.mxu0 0.0
  %677 = vmatpush1.msra.mxu0 0.0
  %678 = vmatprep.subr.mxu0 0.0
  %679 = vmatpush1.msra.mxu0 0.0
  %680 = vmatprep.subr.mxu0 0.0
  %681 = vmatpush1.msra.mxu0 0.0
  %682 = vmatprep.subr.mxu0 0.0
  %683 = vmatpush1.msra.mxu0 0.0
  %684 = vmatprep.subr.mxu0 0.0
  %685 = vmatpush1.msra.mxu0 0.0
  %686 = vmatprep.subr.mxu0 0.0
  %687 = vmatpush1.msra.mxu0 0.0
  %688 = vmatprep.subr.mxu0 0.0
  %689 = vmatpush1.msra.mxu0 0.0
  %690 = vmatprep.subr.mxu0 0.0
  %691 = vmatpush1.msra.mxu0 0.0
  %692 = vmatprep.subr.mxu0 0.0
  %693 = vmatpush1.msra.mxu0 0.0
  %694 = vmatprep.subr.mxu0 0.0
  %695 = vmatpush1.msra.mxu0 0.0
  %696 = vmatprep.subr.mxu0 0.0
  %697 = vmatpush1.msra.mxu0 0.0
  %698 = vmatprep.subr.mxu0 0.0
  %699 = vmatpush1.msra.mxu0 0.0
  %700 = vmatprep.subr.mxu0 0.0
  %701 = vmatpush1.msra.mxu0 0.0
  %702 = vmatprep.subr.mxu0 0.0
  %703 = vmatpush1.msra.mxu0 0.0
  %704 = vmatprep.subr.mxu0 0.0
  %705 = vmatpush1.msra.mxu0 0.0
  %706 = vmatprep.subr.mxu0 0.0
  %707 = vmatpush1.msra.mxu0 0.0
  %708 = vmatprep.subr.mxu0 0.0
  %709 = vmatpush1.msra.mxu0 0.0
  %710 = vmatprep.subr.mxu0 0.0
  %711 = vmatpush1.msra.mxu0 0.0
  %712 = vmatprep.subr.mxu0 0.0
  %713 = vmatpush1.msra.mxu0 0.0
  %714 = vmatprep.mubr.f32.mxu0 0.0
  %715 = vmatmul.mubr.f32.gmra.mrb[0].mxu0 %v565
  %v716 = vpop.f32.mrb[0].mxu0
  %v717 = vadd.f32 0.0, %v716
  %v718 = vpop.f32.mrb[0].mxu0
  %v719 = vadd.f32 0.0, %v718
  %720 = vdwg.mxu0
  %721 = vmatprep.subr.mxu0 %v577
  %722 = vmatpush1.msra.mxu0 %v575
  %723 = vmatprep.subr.mxu0 0.0
  %724 = vmatpush1.msra.mxu0 0.0
  %725 = vmatprep.subr.mxu0 0.0
  %726 = vmatpush1.msra.mxu0 0.0
  %727 = vmatprep.subr.mxu0 0.0
  %728 = vmatpush1.msra.mxu0 0.0
  %729 = vmatprep.subr.mxu0 0.0
  %730 = vmatpush1.msra.mxu0 0.0
  %731 = vmatprep.subr.mxu0 0.0
  %732 = vmatpush1.msra.mxu0 0.0
  %733 = vmatprep.subr.mxu0 0.0
  %734 = vmatpush1.msra.mxu0 0.0
  %735 = vmatprep.subr.mxu0 0.0
  %736 = vmatpush1.msra.mxu0 0.0
  %737 = vmatprep.subr.mxu0 0.0
  %738 = vmatpush1.msra.mxu0 0.0
  %739 = vmatprep.subr.mxu0 0.0
  %740 = vmatpush1.msra.mxu0 0.0
  %741 = vmatprep.subr.mxu0 0.0
  %742 = vmatpush1.msra.mxu0 0.0
  %743 = vmatprep.subr.mxu0 0.0
  %744 = vmatpush1.msra.mxu0 0.0
  %745 = vmatprep.subr.mxu0 0.0
  %746 = vmatpush1.msra.mxu0 0.0
  %747 = vmatprep.subr.mxu0 0.0
  %748 = vmatpush1.msra.mxu0 0.0
  %749 = vmatprep.subr.mxu0 0.0
  %750 = vmatpush1.msra.mxu0 0.0
  %751 = vmatprep.subr.mxu0 0.0
  %752 = vmatpush1.msra.mxu0 0.0
  %753 = vmatprep.subr.mxu0 0.0
  %754 = vmatpush1.msra.mxu0 0.0
  %755 = vmatprep.subr.mxu0 0.0
  %756 = vmatpush1.msra.mxu0 0.0
  %757 = vmatprep.subr.mxu0 0.0
  %758 = vmatpush1.msra.mxu0 0.0
  %759 = vmatprep.subr.mxu0 0.0
  %760 = vmatpush1.msra.mxu0 0.0
  %761 = vmatprep.subr.mxu0 0.0
  %762 = vmatpush1.msra.mxu0 0.0
  %763 = vmatprep.subr.mxu0 0.0
  %764 = vmatpush1.msra.mxu0 0.0
  %765 = vmatprep.subr.mxu0 0.0
  %766 = vmatpush1.msra.mxu0 0.0
  %767 = vmatprep.subr.mxu0 0.0
  %768 = vmatpush1.msra.mxu0 0.0
  %769 = vmatprep.subr.mxu0 0.0
  %770 = vmatpush1.msra.mxu0 0.0
  %771 = vmatprep.subr.mxu0 0.0
  %772 = vmatpush1.msra.mxu0 0.0
  %773 = vmatprep.subr.mxu0 0.0
  %774 = vmatpush1.msra.mxu0 0.0
  %775 = vmatprep.subr.mxu0 0.0
  %776 = vmatpush1.msra.mxu0 0.0
  %777 = vmatprep.subr.mxu0 0.0
  %778 = vmatpush1.msra.mxu0 0.0
  %779 = vmatprep.subr.mxu0 0.0
  %780 = vmatpush1.msra.mxu0 0.0
  %781 = vmatprep.subr.mxu0 0.0
  %782 = vmatpush1.msra.mxu0 0.0
  %783 = vmatprep.subr.mxu0 0.0
  %784 = vmatpush1.msra.mxu0 0.0
  %785 = vmatprep.mubr.f32.mxu0 0.0
  %786 = vmatmul.mubr.f32.gmra.mrb[0].mxu0 %v565
  %v787 = vpop.f32.mrb[0].mxu0
  %v788 = vadd.f32 0.0, %v787
  %v789 = vpop.f32.mrb[0].mxu0
  %v790 = vadd.f32 0.0, %v789
  %791 = vdwg.mxu0
  %v792 = vadd.f32 %v389, %v646
  %v793 = vadd.f32 %v391, %v648
  %v794 = vadd.f32 %v460, %v717
  %v795 = vadd.f32 %v462, %v719
  %v796 = vadd.f32 %v531, %v788
  %v797 = vadd.f32 %v533, %v790
  %v798 = vld [vmem:[%s0] sm:$0xff]
  %v799 = vld [vmem:[%s0 + $0x8] sm:$0xff]
  %v800 = vld [vmem:[%s0 + $0x10] sm:$0xff]
  %s801 = scalar_lea.vmem %s1, 24
  %v802 = vld [vmem:[%s801] sm:$0x3f]
  %v806 = vcombine.high %v798, %v798
  %v807 = vcombine.high %v799, %v799
  %v808 = vcombine.high %v800, %v800
  %809 = vrot.lane.b32.xlu0 %v798, 110
  %v810 = vpop.permute.xlu0 %809
  %811 = vrot.lane.b32.xlu0 %v806, 110
  %v812 = vpop.permute.xlu0 %811
  %813 = vrot.lane.b32.xlu0 %v799, 110
  %v814 = vpop.permute.xlu0 %813
  %815 = vrot.lane.b32.xlu0 %v807, 110
  %v816 = vpop.permute.xlu0 %815
  %817 = vrot.lane.b32.xlu0 %v800, 110
  %v818 = vpop.permute.xlu0 %817
  %819 = vrot.lane.b32.xlu0 %v808, 110
  %v820 = vpop.permute.xlu0 %819
  %vm821 = vcmask 900096
  %v822 = vsel %vm821, %v810, %v812
  %v823 = vsel %vm821, %v812, %v814
  %v824 = vsel %vm821, %v814, %v816
  %v825 = vsel %vm821, %v816, %v818
  %v826 = vsel %vm821, %v818, %v820
  %v828 = vsel %vm77, %v802, 0
  %v830 = vsel %vm81, %v822, 0
  %v832 = vsel %vm81, %v823, 0
  %v834 = vsel %vm81, %v824, 0
  %v836 = vsel %vm81, %v825, 0
  %v838 = vsel %vm81, %v826, 0
  %v840 = vsel %vm81, %v820, 0
  %842 = vmatprep.subr.mxu0 %v832
  %843 = vmatpush1.msra.mxu0 %v830
  %844 = vmatprep.subr.mxu0 0.0
  %845 = vmatpush1.msra.mxu0 0.0
  %846 = vmatprep.subr.mxu0 0.0
  %847 = vmatpush1.msra.mxu0 0.0
  %848 = vmatprep.subr.mxu0 0.0
  %849 = vmatpush1.msra.mxu0 0.0
  %850 = vmatprep.subr.mxu0 0.0
  %851 = vmatpush1.msra.mxu0 0.0
  %852 = vmatprep.subr.mxu0 0.0
  %853 = vmatpush1.msra.mxu0 0.0
  %854 = vmatprep.subr.mxu0 0.0
  %855 = vmatpush1.msra.mxu0 0.0
  %856 = vmatprep.subr.mxu0 0.0
  %857 = vmatpush1.msra.mxu0 0.0
  %858 = vmatprep.subr.mxu0 0.0
  %859 = vmatpush1.msra.mxu0 0.0
  %860 = vmatprep.subr.mxu0 0.0
  %861 = vmatpush1.msra.mxu0 0.0
  %862 = vmatprep.subr.mxu0 0.0
  %863 = vmatpush1.msra.mxu0 0.0
  %864 = vmatprep.subr.mxu0 0.0
  %865 = vmatpush1.msra.mxu0 0.0
  %866 = vmatprep.subr.mxu0 0.0
  %867 = vmatpush1.msra.mxu0 0.0
  %868 = vmatprep.subr.mxu0 0.0
  %869 = vmatpush1.msra.mxu0 0.0
  %870 = vmatprep.subr.mxu0 0.0
  %871 = vmatpush1.msra.mxu0 0.0
  %872 = vmatprep.subr.mxu0 0.0
  %873 = vmatpush1.msra.mxu0 0.0
  %874 = vmatprep.subr.mxu0 0.0
  %875 = vmatpush1.msra.mxu0 0.0
  %876 = vmatprep.subr.mxu0 0.0
  %877 = vmatpush1.msra.mxu0 0.0
  %878 = vmatprep.subr.mxu0 0.0
  %879 = vmatpush1.msra.mxu0 0.0
  %880 = vmatprep.subr.mxu0 0.0
  %881 = vmatpush1.msra.mxu0 0.0
  %882 = vmatprep.subr.mxu0 0.0
  %883 = vmatpush1.msra.mxu0 0.0
  %884 = vmatprep.subr.mxu0 0.0
  %885 = vmatpush1.msra.mxu0 0.0
  %886 = vmatprep.subr.mxu0 0.0
  %887 = vmatpush1.msra.mxu0 0.0
  %888 = vmatprep.subr.mxu0 0.0
  %889 = vmatpush1.msra.mxu0 0.0
  %890 = vmatprep.subr.mxu0 0.0
  %891 = vmatpush1.msra.mxu0 0.0
  %892 = vmatprep.subr.mxu0 0.0
  %893 = vmatpush1.msra.mxu0 0.0
  %894 = vmatprep.subr.mxu0 0.0
  %895 = vmatpush1.msra.mxu0 0.0
  %896 = vmatprep.subr.mxu0 0.0
  %897 = vmatpush1.msra.mxu0 0.0
  %898 = vmatprep.subr.mxu0 0.0
  %899 = vmatpush1.msra.mxu0 0.0
  %900 = vmatprep.subr.mxu0 0.0
  %901 = vmatpush1.msra.mxu0 0.0
  %902 = vmatprep.subr.mxu0 0.0
  %903 = vmatpush1.msra.mxu0 0.0
  %904 = vmatprep.subr.mxu0 0.0
  %905 = vmatpush1.msra.mxu0 0.0
  %906 = vmatprep.mubr.f32.mxu0 0.0
  %907 = vmatmul.mubr.f32.gmra.mrb[0].mxu0 %v828
  %v908 = vpop.f32.mrb[0].mxu0
  %v909 = vadd.f32 0.0, %v908
  %v910 = vpop.f32.mrb[0].mxu0
  %v911 = vadd.f32 0.0, %v910
  %912 = vdwg.mxu0
  %913 = vmatprep.subr.mxu0 %v836
  %914 = vmatpush1.msra.mxu0 %v834
  %915 = vmatprep.subr.mxu0 0.0
  %916 = vmatpush1.msra.mxu0 0.0
  %917 = vmatprep.subr.mxu0 0.0
  %918 = vmatpush1.msra.mxu0 0.0
  %919 = vmatprep.subr.mxu0 0.0
  %920 = vmatpush1.msra.mxu0 0.0
  %921 = vmatprep.subr.mxu0 0.0
  %922 = vmatpush1.msra.mxu0 0.0
  %923 = vmatprep.subr.mxu0 0.0
  %924 = vmatpush1.msra.mxu0 0.0
  %925 = vmatprep.subr.mxu0 0.0
  %926 = vmatpush1.msra.mxu0 0.0
  %927 = vmatprep.subr.mxu0 0.0
  %928 = vmatpush1.msra.mxu0 0.0
  %929 = vmatprep.subr.mxu0 0.0
  %930 = vmatpush1.msra.mxu0 0.0
  %931 = vmatprep.subr.mxu0 0.0
  %932 = vmatpush1.msra.mxu0 0.0
  %933 = vmatprep.subr.mxu0 0.0
  %934 = vmatpush1.msra.mxu0 0.0
  %935 = vmatprep.subr.mxu0 0.0
  %936 = vmatpush1.msra.mxu0 0.0
  %937 = vmatprep.subr.mxu0 0.0
  %938 = vmatpush1.msra.mxu0 0.0
  %939 = vmatprep.subr.mxu0 0.0
  %940 = vmatpush1.msra.mxu0 0.0
  %941 = vmatprep.subr.mxu0 0.0
  %942 = vmatpush1.msra.mxu0 0.0
  %943 = vmatprep.subr.mxu0 0.0
  %944 = vmatpush1.msra.mxu0 0.0
  %945 = vmatprep.subr.mxu0 0.0
  %946 = vmatpush1.msra.mxu0 0.0
  %947 = vmatprep.subr.mxu0 0.0
  %948 = vmatpush1.msra.mxu0 0.0
  %949 = vmatprep.subr.mxu0 0.0
  %950 = vmatpush1.msra.mxu0 0.0
  %951 = vmatprep.subr.mxu0 0.0
  %952 = vmatpush1.msra.mxu0 0.0
  %953 = vmatprep.subr.mxu0 0.0
  %954 = vmatpush1.msra.mxu0 0.0
  %955 = vmatprep.subr.mxu0 0.0
  %956 = vmatpush1.msra.mxu0 0.0
  %957 = vmatprep.subr.mxu0 0.0
  %958 = vmatpush1.msra.mxu0 0.0
  %959 = vmatprep.subr.mxu0 0.0
  %960 = vmatpush1.msra.mxu0 0.0
  %961 = vmatprep.subr.mxu0 0.0
  %962 = vmatpush1.msra.mxu0 0.0
  %963 = vmatprep.subr.mxu0 0.0
  %964 = vmatpush1.msra.mxu0 0.0
  %965 = vmatprep.subr.mxu0 0.0
  %966 = vmatpush1.msra.mxu0 0.0
  %967 = vmatprep.subr.mxu0 0.0
  %968 = vmatpush1.msra.mxu0 0.0
  %969 = vmatprep.subr.mxu0 0.0
  %970 = vmatpush1.msra.mxu0 0.0
  %971 = vmatprep.subr.mxu0 0.0
  %972 = vmatpush1.msra.mxu0 0.0
  %973 = vmatprep.subr.mxu0 0.0
  %974 = vmatpush1.msra.mxu0 0.0
  %975 = vmatprep.subr.mxu0 0.0
  %976 = vmatpush1.msra.mxu0 0.0
  %977 = vmatprep.mubr.f32.mxu0 0.0
  %978 = vmatmul.mubr.f32.gmra.mrb[0].mxu0 %v828
  %v979 = vpop.f32.mrb[0].mxu0
  %v980 = vadd.f32 0.0, %v979
  %v981 = vpop.f32.mrb[0].mxu0
  %v982 = vadd.f32 0.0, %v981
  %983 = vdwg.mxu0
  %984 = vmatprep.subr.mxu0 %v840
  %985 = vmatpush1.msra.mxu0 %v838
  %986 = vmatprep.subr.mxu0 0.0
  %987 = vmatpush1.msra.mxu0 0.0
  %988 = vmatprep.subr.mxu0 0.0
  %989 = vmatpush1.msra.mxu0 0.0
  %990 = vmatprep.subr.mxu0 0.0
  %991 = vmatpush1.msra.mxu0 0.0
  %992 = vmatprep.subr.mxu0 0.0
  %993 = vmatpush1.msra.mxu0 0.0
  %994 = vmatprep.subr.mxu0 0.0
  %995 = vmatpush1.msra.mxu0 0.0
  %996 = vmatprep.subr.mxu0 0.0
  %997 = vmatpush1.msra.mxu0 0.0
  %998 = vmatprep.subr.mxu0 0.0
  %999 = vmatpush1.msra.mxu0 0.0
  %1000 = vmatprep.subr.mxu0 0.0
  %1001 = vmatpush1.msra.mxu0 0.0
  %1002 = vmatprep.subr.mxu0 0.0
  %1003 = vmatpush1.msra.mxu0 0.0
  %1004 = vmatprep.subr.mxu0 0.0
  %1005 = vmatpush1.msra.mxu0 0.0
  %1006 = vmatprep.subr.mxu0 0.0
  %1007 = vmatpush1.msra.mxu0 0.0
  %1008 = vmatprep.subr.mxu0 0.0
  %1009 = vmatpush1.msra.mxu0 0.0
  %1010 = vmatprep.subr.mxu0 0.0
  %1011 = vmatpush1.msra.mxu0 0.0
  %1012 = vmatprep.subr.mxu0 0.0
  %1013 = vmatpush1.msra.mxu0 0.0
  %1014 = vmatprep.subr.mxu0 0.0
  %1015 = vmatpush1.msra.mxu0 0.0
  %1016 = vmatprep.subr.mxu0 0.0
  %1017 = vmatpush1.msra.mxu0 0.0
  %1018 = vmatprep.subr.mxu0 0.0
  %1019 = vmatpush1.msra.mxu0 0.0
  %1020 = vmatprep.subr.mxu0 0.0
  %1021 = vmatpush1.msra.mxu0 0.0
  %1022 = vmatprep.subr.mxu0 0.0
  %1023 = vmatpush1.msra.mxu0 0.0
  %1024 = vmatprep.subr.mxu0 0.0
  %1025 = vmatpush1.msra.mxu0 0.0
  %1026 = vmatprep.subr.mxu0 0.0
  %1027 = vmatpush1.msra.mxu0 0.0
  %1028 = vmatprep.subr.mxu0 0.0
  %1029 = vmatpush1.msra.mxu0 0.0
  %1030 = vmatprep.subr.mxu0 0.0
  %1031 = vmatpush1.msra.mxu0 0.0
  %1032 = vmatprep.subr.mxu0 0.0
  %1033 = vmatpush1.msra.mxu0 0.0
  %1034 = vmatprep.subr.mxu0 0.0
  %1035 = vmatpush1.msra.mxu0 0.0
  %1036 = vmatprep.subr.mxu0 0.0
  %1037 = vmatpush1.msra.mxu0 0.0
  %1038 = vmatprep.subr.mxu0 0.0
  %1039 = vmatpush1.msra.mxu0 0.0
  %1040 = vmatprep.subr.mxu0 0.0
  %1041 = vmatpush1.msra.mxu0 0.0
  %1042 = vmatprep.subr.mxu0 0.0
  %1043 = vmatpush1.msra.mxu0 0.0
  %1044 = vmatprep.subr.mxu0 0.0
  %1045 = vmatpush1.msra.mxu0 0.0
  %1046 = vmatprep.subr.mxu0 0.0
  %1047 = vmatpush1.msra.mxu0 0.0
  %1048 = vmatprep.mubr.f32.mxu0 0.0
  %1049 = vmatmul.mubr.f32.gmra.mrb[0].mxu0 %v828
  %v1050 = vpop.f32.mrb[0].mxu0
  %v1051 = vadd.f32 0.0, %v1050
  %v1052 = vpop.f32.mrb[0].mxu0
  %v1053 = vadd.f32 0.0, %v1052
  %1054 = vdwg.mxu0
  %v1055 = vadd.f32 %v792, %v909
  %v1056 = vadd.f32 %v793, %v911
  %v1057 = vadd.f32 %v794, %v980
  %v1058 = vadd.f32 %v795, %v982
  %v1059 = vadd.f32 %v796, %v1051
  %v1060 = vadd.f32 %v797, %v1053
  %v1061 = vld [vmem:[%s0] sm:$0xff]
  %v1062 = vld [vmem:[%s0 + $0x8] sm:$0xff]
  %v1063 = vld [vmem:[%s0 + $0x10] sm:$0xff]
  %s1064 = scalar_lea.vmem %s1, 32
  %v1065 = vld [vmem:[%s1064] sm:$0x3f]
  %v1069 = vcombine.high %v1061, %v1061
  %v1070 = vcombine.high %v1062, %v1062
  %v1071 = vcombine.high %v1063, %v1063
  %1072 = vrot.lane.b32.xlu0 %v1061, 109
  %v1073 = vpop.permute.xlu0 %1072
  %1074 = vrot.lane.b32.xlu0 %v1069, 109
  %v1075 = vpop.permute.xlu0 %1074
  %1076 = vrot.lane.b32.xlu0 %v1062, 109
  %v1077 = vpop.permute.xlu0 %1076
  %1078 = vrot.lane.b32.xlu0 %v1070, 109
  %v1079 = vpop.permute.xlu0 %1078
  %1080 = vrot.lane.b32.xlu0 %v1063, 109
  %v1081 = vpop.permute.xlu0 %1080
  %1082 = vrot.lane.b32.xlu0 %v1071, 109
  %v1083 = vpop.permute.xlu0 %1082
  %vm1084 = vcmask 891904
  %v1085 = vsel %vm1084, %v1073, %v1075
  %v1086 = vsel %vm1084, %v1075, %v1077
  %v1087 = vsel %vm1084, %v1077, %v1079
  %v1088 = vsel %vm1084, %v1079, %v1081
  %v1089 = vsel %vm1084, %v1081, %v1083
  %v1091 = vsel %vm77, %v1065, 0
  %v1093 = vsel %vm81, %v1085, 0
  %v1095 = vsel %vm81, %v1086, 0
  %v1097 = vsel %vm81, %v1087, 0
  %v1099 = vsel %vm81, %v1088, 0
  %v1101 = vsel %vm81, %v1089, 0
  %v1103 = vsel %vm81, %v1083, 0
  %1105 = vmatprep.subr.mxu0 %v1095
  %1106 = vmatpush1.msra.mxu0 %v1093
  %1107 = vmatprep.subr.mxu0 0.0
  %1108 = vmatpush1.msra.mxu0 0.0
  %1109 = vmatprep.subr.mxu0 0.0
  %1110 = vmatpush1.msra.mxu0 0.0
  %1111 = vmatprep.subr.mxu0 0.0
  %1112 = vmatpush1.msra.mxu0 0.0
  %1113 = vmatprep.subr.mxu0 0.0
  %1114 = vmatpush1.msra.mxu0 0.0
  %1115 = vmatprep.subr.mxu0 0.0
  %1116 = vmatpush1.msra.mxu0 0.0
  %1117 = vmatprep.subr.mxu0 0.0
  %1118 = vmatpush1.msra.mxu0 0.0
  %1119 = vmatprep.subr.mxu0 0.0
  %1120 = vmatpush1.msra.mxu0 0.0
  %1121 = vmatprep.subr.mxu0 0.0
  %1122 = vmatpush1.msra.mxu0 0.0
  %1123 = vmatprep.subr.mxu0 0.0
  %1124 = vmatpush1.msra.mxu0 0.0
  %1125 = vmatprep.subr.mxu0 0.0
  %1126 = vmatpush1.msra.mxu0 0.0
  %1127 = vmatprep.subr.mxu0 0.0
  %1128 = vmatpush1.msra.mxu0 0.0
  %1129 = vmatprep.subr.mxu0 0.0
  %1130 = vmatpush1.msra.mxu0 0.0
  %1131 = vmatprep.subr.mxu0 0.0
  %1132 = vmatpush1.msra.mxu0 0.0
  %1133 = vmatprep.subr.mxu0 0.0
  %1134 = vmatpush1.msra.mxu0 0.0
  %1135 = vmatprep.subr.mxu0 0.0
  %1136 = vmatpush1.msra.mxu0 0.0
  %1137 = vmatprep.subr.mxu0 0.0
  %1138 = vmatpush1.msra.mxu0 0.0
  %1139 = vmatprep.subr.mxu0 0.0
  %1140 = vmatpush1.msra.mxu0 0.0
  %1141 = vmatprep.subr.mxu0 0.0
  %1142 = vmatpush1.msra.mxu0 0.0
  %1143 = vmatprep.subr.mxu0 0.0
  %1144 = vmatpush1.msra.mxu0 0.0
  %1145 = vmatprep.subr.mxu0 0.0
  %1146 = vmatpush1.msra.mxu0 0.0
  %1147 = vmatprep.subr.mxu0 0.0
  %1148 = vmatpush1.msra.mxu0 0.0
  %1149 = vmatprep.subr.mxu0 0.0
  %1150 = vmatpush1.msra.mxu0 0.0
  %1151 = vmatprep.subr.mxu0 0.0
  %1152 = vmatpush1.msra.mxu0 0.0
  %1153 = vmatprep.subr.mxu0 0.0
  %1154 = vmatpush1.msra.mxu0 0.0
  %1155 = vmatprep.subr.mxu0 0.0
  %1156 = vmatpush1.msra.mxu0 0.0
  %1157 = vmatprep.subr.mxu0 0.0
  %1158 = vmatpush1.msra.mxu0 0.0
  %1159 = vmatprep.subr.mxu0 0.0
  %1160 = vmatpush1.msra.mxu0 0.0
  %1161 = vmatprep.subr.mxu0 0.0
  %1162 = vmatpush1.msra.mxu0 0.0
  %1163 = vmatprep.subr.mxu0 0.0
  %1164 = vmatpush1.msra.mxu0 0.0
  %1165 = vmatprep.subr.mxu0 0.0
  %1166 = vmatpush1.msra.mxu0 0.0
  %1167 = vmatprep.subr.mxu0 0.0
  %1168 = vmatpush1.msra.mxu0 0.0
  %1169 = vmatprep.mubr.f32.mxu0 0.0
  %1170 = vmatmul.mubr.f32.gmra.mrb[0].mxu0 %v1091
  %v1171 = vpop.f32.mrb[0].mxu0
  %v1172 = vadd.f32 0.0, %v1171
  %v1173 = vpop.f32.mrb[0].mxu0
  %v1174 = vadd.f32 0.0, %v1173
  %1175 = vdwg.mxu0
  %1176 = vmatprep.subr.mxu0 %v1099
  %1177 = vmatpush1.msra.mxu0 %v1097
  %1178 = vmatprep.subr.mxu0 0.0
  %1179 = vmatpush1.msra.mxu0 0.0
  %1180 = vmatprep.subr.mxu0 0.0
  %1181 = vmatpush1.msra.mxu0 0.0
  %1182 = vmatprep.subr.mxu0 0.0
  %1183 = vmatpush1.msra.mxu0 0.0
  %1184 = vmatprep.subr.mxu0 0.0
  %1185 = vmatpush1.msra.mxu0 0.0
  %1186 = vmatprep.subr.mxu0 0.0
  %1187 = vmatpush1.msra.mxu0 0.0
  %1188 = vmatprep.subr.mxu0 0.0
  %1189 = vmatpush1.msra.mxu0 0.0
  %1190 = vmatprep.subr.mxu0 0.0
  %1191 = vmatpush1.msra.mxu0 0.0
  %1192 = vmatprep.subr.mxu0 0.0
  %1193 = vmatpush1.msra.mxu0 0.0
  %1194 = vmatprep.subr.mxu0 0.0
  %1195 = vmatpush1.msra.mxu0 0.0
  %1196 = vmatprep.subr.mxu0 0.0
  %1197 = vmatpush1.msra.mxu0 0.0
  %1198 = vmatprep.subr.mxu0 0.0
  %1199 = vmatpush1.msra.mxu0 0.0
  %1200 = vmatprep.subr.mxu0 0.0
  %1201 = vmatpush1.msra.mxu0 0.0
  %1202 = vmatprep.subr.mxu0 0.0
  %1203 = vmatpush1.msra.mxu0 0.0
  %1204 = vmatprep.subr.mxu0 0.0
  %1205 = vmatpush1.msra.mxu0 0.0
  %1206 = vmatprep.subr.mxu0 0.0
  %1207 = vmatpush1.msra.mxu0 0.0
  %1208 = vmatprep.subr.mxu0 0.0
  %1209 = vmatpush1.msra.mxu0 0.0
  %1210 = vmatprep.subr.mxu0 0.0
  %1211 = vmatpush1.msra.mxu0 0.0
  %1212 = vmatprep.subr.mxu0 0.0
  %1213 = vmatpush1.msra.mxu0 0.0
  %1214 = vmatprep.subr.mxu0 0.0
  %1215 = vmatpush1.msra.mxu0 0.0
  %1216 = vmatprep.subr.mxu0 0.0
  %1217 = vmatpush1.msra.mxu0 0.0
  %1218 = vmatprep.subr.mxu0 0.0
  %1219 = vmatpush1.msra.mxu0 0.0
  %1220 = vmatprep.subr.mxu0 0.0
  %1221 = vmatpush1.msra.mxu0 0.0
  %1222 = vmatprep.subr.mxu0 0.0
  %1223 = vmatpush1.msra.mxu0 0.0
  %1224 = vmatprep.subr.mxu0 0.0
  %1225 = vmatpush1.msra.mxu0 0.0
  %1226 = vmatprep.subr.mxu0 0.0
  %1227 = vmatpush1.msra.mxu0 0.0
  %1228 = vmatprep.subr.mxu0 0.0
  %1229 = vmatpush1.msra.mxu0 0.0
  %1230 = vmatprep.subr.mxu0 0.0
  %1231 = vmatpush1.msra.mxu0 0.0
  %1232 = vmatprep.subr.mxu0 0.0
  %1233 = vmatpush1.msra.mxu0 0.0
  %1234 = vmatprep.subr.mxu0 0.0
  %1235 = vmatpush1.msra.mxu0 0.0
  %1236 = vmatprep.subr.mxu0 0.0
  %1237 = vmatpush1.msra.mxu0 0.0
  %1238 = vmatprep.subr.mxu0 0.0
  %1239 = vmatpush1.msra.mxu0 0.0
  %1240 = vmatprep.mubr.f32.mxu0 0.0
  %1241 = vmatmul.mubr.f32.gmra.mrb[0].mxu0 %v1091
  %v1242 = vpop.f32.mrb[0].mxu0
  %v1243 = vadd.f32 0.0, %v1242
  %v1244 = vpop.f32.mrb[0].mxu0
  %v1245 = vadd.f32 0.0, %v1244
  %1246 = vdwg.mxu0
  %1247 = vmatprep.subr.mxu0 %v1103
  %1248 = vmatpush1.msra.mxu0 %v1101
  %1249 = vmatprep.subr.mxu0 0.0
  %1250 = vmatpush1.msra.mxu0 0.0
  %1251 = vmatprep.subr.mxu0 0.0
  %1252 = vmatpush1.msra.mxu0 0.0
  %1253 = vmatprep.subr.mxu0 0.0
  %1254 = vmatpush1.msra.mxu0 0.0
  %1255 = vmatprep.subr.mxu0 0.0
  %1256 = vmatpush1.msra.mxu0 0.0
  %1257 = vmatprep.subr.mxu0 0.0
  %1258 = vmatpush1.msra.mxu0 0.0
  %1259 = vmatprep.subr.mxu0 0.0
  %1260 = vmatpush1.msra.mxu0 0.0
  %1261 = vmatprep.subr.mxu0 0.0
  %1262 = vmatpush1.msra.mxu0 0.0
  %1263 = vmatprep.subr.mxu0 0.0
  %1264 = vmatpush1.msra.mxu0 0.0
  %1265 = vmatprep.subr.mxu0 0.0
  %1266 = vmatpush1.msra.mxu0 0.0
  %1267 = vmatprep.subr.mxu0 0.0
  %1268 = vmatpush1.msra.mxu0 0.0
  %1269 = vmatprep.subr.mxu0 0.0
  %1270 = vmatpush1.msra.mxu0 0.0
  %1271 = vmatprep.subr.mxu0 0.0
  %1272 = vmatpush1.msra.mxu0 0.0
  %1273 = vmatprep.subr.mxu0 0.0
  %1274 = vmatpush1.msra.mxu0 0.0
  %1275 = vmatprep.subr.mxu0 0.0
  %1276 = vmatpush1.msra.mxu0 0.0
  %1277 = vmatprep.subr.mxu0 0.0
  %1278 = vmatpush1.msra.mxu0 0.0
  %1279 = vmatprep.subr.mxu0 0.0
  %1280 = vmatpush1.msra.mxu0 0.0
  %1281 = vmatprep.subr.mxu0 0.0
  %1282 = vmatpush1.msra.mxu0 0.0
  %1283 = vmatprep.subr.mxu0 0.0
  %1284 = vmatpush1.msra.mxu0 0.0
  %1285 = vmatprep.subr.mxu0 0.0
  %1286 = vmatpush1.msra.mxu0 0.0
  %1287 = vmatprep.subr.mxu0 0.0
  %1288 = vmatpush1.msra.mxu0 0.0
  %1289 = vmatprep.subr.mxu0 0.0
  %1290 = vmatpush1.msra.mxu0 0.0
  %1291 = vmatprep.subr.mxu0 0.0
  %1292 = vmatpush1.msra.mxu0 0.0
  %1293 = vmatprep.subr.mxu0 0.0
  %1294 = vmatpush1.msra.mxu0 0.0
  %1295 = vmatprep.subr.mxu0 0.0
  %1296 = vmatpush1.msra.mxu0 0.0
  %1297 = vmatprep.subr.mxu0 0.0
  %1298 = vmatpush1.msra.mxu0 0.0
  %1299 = vmatprep.subr.mxu0 0.0
  %1300 = vmatpush1.msra.mxu0 0.0
  %1301 = vmatprep.subr.mxu0 0.0
  %1302 = vmatpush1.msra.mxu0 0.0
  %1303 = vmatprep.subr.mxu0 0.0
  %1304 = vmatpush1.msra.mxu0 0.0
  %1305 = vmatprep.subr.mxu0 0.0
  %1306 = vmatpush1.msra.mxu0 0.0
  %1307 = vmatprep.subr.mxu0 0.0
  %1308 = vmatpush1.msra.mxu0 0.0
  %1309 = vmatprep.subr.mxu0 0.0
  %1310 = vmatpush1.msra.mxu0 0.0
  %1311 = vmatprep.mubr.f32.mxu0 0.0
  %1312 = vmatmul.mubr.f32.gmra.mrb[0].mxu0 %v1091
  %v1313 = vpop.f32.mrb[0].mxu0
  %v1314 = vadd.f32 0.0, %v1313
  %v1315 = vpop.f32.mrb[0].mxu0
  %v1316 = vadd.f32 0.0, %v1315
  %1317 = vdwg.mxu0
  %v1318 = vadd.f32 %v1055, %v1172
  %v1319 = vadd.f32 %v1056, %v1174
  %v1320 = vadd.f32 %v1057, %v1243
  %v1321 = vadd.f32 %v1058, %v1245
  %v1322 = vadd.f32 %v1059, %v1314
  %v1323 = vadd.f32 %v1060, %v1316
  %v1324 = vld [vmem:[%s0] sm:$0xff]
  %v1325 = vld [vmem:[%s0 + $0x8] sm:$0xff]
  %v1326 = vld [vmem:[%s0 + $0x10] sm:$0xff]
  %s1327 = scalar_lea.vmem %s1, 40
  %v1328 = vld [vmem:[%s1327] sm:$0x3f]
  %v1332 = vcombine.high %v1324, %v1324
  %v1333 = vcombine.high %v1325, %v1325
  %v1334 = vcombine.high %v1326, %v1326
  %1335 = vrot.lane.b32.xlu0 %v1324, 108
  %v1336 = vpop.permute.xlu0 %1335
  %1337 = vrot.lane.b32.xlu0 %v1332, 108
  %v1338 = vpop.permute.xlu0 %1337
  %1339 = vrot.lane.b32.xlu0 %v1325, 108
  %v1340 = vpop.permute.xlu0 %1339
  %1341 = vrot.lane.b32.xlu0 %v1333, 108
  %v1342 = vpop.permute.xlu0 %1341
  %1343 = vrot.lane.b32.xlu0 %v1326, 108
  %v1344 = vpop.permute.xlu0 %1343
  %1345 = vrot.lane.b32.xlu0 %v1334, 108
  %v1346 = vpop.permute.xlu0 %1345
  %vm1347 = vcmask 883712
  %v1348 = vsel %vm1347, %v1336, %v1338
  %v1349 = vsel %vm1347, %v1338, %v1340
  %v1350 = vsel %vm1347, %v1340, %v1342
  %v1351 = vsel %vm1347, %v1342, %v1344
  %v1352 = vsel %vm1347, %v1344, %v1346
  %v1354 = vsel %vm77, %v1328, 0
  %v1356 = vsel %vm81, %v1348, 0
  %v1358 = vsel %vm81, %v1349, 0
  %v1360 = vsel %vm81, %v1350, 0
  %v1362 = vsel %vm81, %v1351, 0
  %v1364 = vsel %vm81, %v1352, 0
  %v1366 = vsel %vm81, %v1346, 0
  %1368 = vmatprep.subr.mxu0 %v1358
  %1369 = vmatpush1.msra.mxu0 %v1356
  %1370 = vmatprep.subr.mxu0 0.0
  %1371 = vmatpush1.msra.mxu0 0.0
  %1372 = vmatprep.subr.mxu0 0.0
  %1373 = vmatpush1.msra.mxu0 0.0
  %1374 = vmatprep.subr.mxu0 0.0
  %1375 = vmatpush1.msra.mxu0 0.0
  %1376 = vmatprep.subr.mxu0 0.0
  %1377 = vmatpush1.msra.mxu0 0.0
  %1378 = vmatprep.subr.mxu0 0.0
  %1379 = vmatpush1.msra.mxu0 0.0
  %1380 = vmatprep.subr.mxu0 0.0
  %1381 = vmatpush1.msra.mxu0 0.0
  %1382 = vmatprep.subr.mxu0 0.0
  %1383 = vmatpush1.msra.mxu0 0.0
  %1384 = vmatprep.subr.mxu0 0.0
  %1385 = vmatpush1.msra.mxu0 0.0
  %1386 = vmatprep.subr.mxu0 0.0
  %1387 = vmatpush1.msra.mxu0 0.0
  %1388 = vmatprep.subr.mxu0 0.0
  %1389 = vmatpush1.msra.mxu0 0.0
  %1390 = vmatprep.subr.mxu0 0.0
  %1391 = vmatpush1.msra.mxu0 0.0
  %1392 = vmatprep.subr.mxu0 0.0
  %1393 = vmatpush1.msra.mxu0 0.0
  %1394 = vmatprep.subr.mxu0 0.0
  %1395 = vmatpush1.msra.mxu0 0.0
  %1396 = vmatprep.subr.mxu0 0.0
  %1397 = vmatpush1.msra.mxu0 0.0
  %1398 = vmatprep.subr.mxu0 0.0
  %1399 = vmatpush1.msra.mxu0 0.0
  %1400 = vmatprep.subr.mxu0 0.0
  %1401 = vmatpush1.msra.mxu0 0.0
  %1402 = vmatprep.subr.mxu0 0.0
  %1403 = vmatpush1.msra.mxu0 0.0
  %1404 = vmatprep.subr.mxu0 0.0
  %1405 = vmatpush1.msra.mxu0 0.0
  %1406 = vmatprep.subr.mxu0 0.0
  %1407 = vmatpush1.msra.mxu0 0.0
  %1408 = vmatprep.subr.mxu0 0.0
  %1409 = vmatpush1.msra.mxu0 0.0
  %1410 = vmatprep.subr.mxu0 0.0
  %1411 = vmatpush1.msra.mxu0 0.0
  %1412 = vmatprep.subr.mxu0 0.0
  %1413 = vmatpush1.msra.mxu0 0.0
  %1414 = vmatprep.subr.mxu0 0.0
  %1415 = vmatpush1.msra.mxu0 0.0
  %1416 = vmatprep.subr.mxu0 0.0
  %1417 = vmatpush1.msra.mxu0 0.0
  %1418 = vmatprep.subr.mxu0 0.0
  %1419 = vmatpush1.msra.mxu0 0.0
  %1420 = vmatprep.subr.mxu0 0.0
  %1421 = vmatpush1.msra.mxu0 0.0
  %1422 = vmatprep.subr.mxu0 0.0
  %1423 = vmatpush1.msra.mxu0 0.0
  %1424 = vmatprep.subr.mxu0 0.0
  %1425 = vmatpush1.msra.mxu0 0.0
  %1426 = vmatprep.subr.mxu0 0.0
  %1427 = vmatpush1.msra.mxu0 0.0
  %1428 = vmatprep.subr.mxu0 0.0
  %1429 = vmatpush1.msra.mxu0 0.0
  %1430 = vmatprep.subr.mxu0 0.0
  %1431 = vmatpush1.msra.mxu0 0.0
  %1432 = vmatprep.mubr.f32.mxu0 0.0
  %1433 = vmatmul.mubr.f32.gmra.mrb[0].mxu0 %v1354
  %v1434 = vpop.f32.mrb[0].mxu0
  %v1435 = vadd.f32 0.0, %v1434
  %v1436 = vpop.f32.mrb[0].mxu0
  %v1437 = vadd.f32 0.0, %v1436
  %1438 = vdwg.mxu0
  %1439 = vmatprep.subr.mxu0 %v1362
  %1440 = vmatpush1.msra.mxu0 %v1360
  %1441 = vmatprep.subr.mxu0 0.0
  %1442 = vmatpush1.msra.mxu0 0.0
  %1443 = vmatprep.subr.mxu0 0.0
  %1444 = vmatpush1.msra.mxu0 0.0
  %1445 = vmatprep.subr.mxu0 0.0
  %1446 = vmatpush1.msra.mxu0 0.0
  %1447 = vmatprep.subr.mxu0 0.0
  %1448 = vmatpush1.msra.mxu0 0.0
  %1449 = vmatprep.subr.mxu0 0.0
  %1450 = vmatpush1.msra.mxu0 0.0
  %1451 = vmatprep.subr.mxu0 0.0
  %1452 = vmatpush1.msra.mxu0 0.0
  %1453 = vmatprep.subr.mxu0 0.0
  %1454 = vmatpush1.msra.mxu0 0.0
  %1455 = vmatprep.subr.mxu0 0.0
  %1456 = vmatpush1.msra.mxu0 0.0
  %1457 = vmatprep.subr.mxu0 0.0
  %1458 = vmatpush1.msra.mxu0 0.0
  %1459 = vmatprep.subr.mxu0 0.0
  %1460 = vmatpush1.msra.mxu0 0.0
  %1461 = vmatprep.subr.mxu0 0.0
  %1462 = vmatpush1.msra.mxu0 0.0
  %1463 = vmatprep.subr.mxu0 0.0
  %1464 = vmatpush1.msra.mxu0 0.0
  %1465 = vmatprep.subr.mxu0 0.0
  %1466 = vmatpush1.msra.mxu0 0.0
  %1467 = vmatprep.subr.mxu0 0.0
  %1468 = vmatpush1.msra.mxu0 0.0
  %1469 = vmatprep.subr.mxu0 0.0
  %1470 = vmatpush1.msra.mxu0 0.0
  %1471 = vmatprep.subr.mxu0 0.0
  %1472 = vmatpush1.msra.mxu0 0.0
  %1473 = vmatprep.subr.mxu0 0.0
  %1474 = vmatpush1.msra.mxu0 0.0
  %1475 = vmatprep.subr.mxu0 0.0
  %1476 = vmatpush1.msra.mxu0 0.0
  %1477 = vmatprep.subr.mxu0 0.0
  %1478 = vmatpush1.msra.mxu0 0.0
  %1479 = vmatprep.subr.mxu0 0.0
  %1480 = vmatpush1.msra.mxu0 0.0
  %1481 = vmatprep.subr.mxu0 0.0
  %1482 = vmatpush1.msra.mxu0 0.0
  %1483 = vmatprep.subr.mxu0 0.0
  %1484 = vmatpush1.msra.mxu0 0.0
  %1485 = vmatprep.subr.mxu0 0.0
  %1486 = vmatpush1.msra.mxu0 0.0
  %1487 = vmatprep.subr.mxu0 0.0
  %1488 = vmatpush1.msra.mxu0 0.0
  %1489 = vmatprep.subr.mxu0 0.0
  %1490 = vmatpush1.msra.mxu0 0.0
  %1491 = vmatprep.subr.mxu0 0.0
  %1492 = vmatpush1.msra.mxu0 0.0
  %1493 = vmatprep.subr.mxu0 0.0
  %1494 = vmatpush1.msra.mxu0 0.0
  %1495 = vmatprep.subr.mxu0 0.0
  %1496 = vmatpush1.msra.mxu0 0.0
  %1497 = vmatprep.subr.mxu0 0.0
  %1498 = vmatpush1.msra.mxu0 0.0
  %1499 = vmatprep.subr.mxu0 0.0
  %1500 = vmatpush1.msra.mxu0 0.0
  %1501 = vmatprep.subr.mxu0 0.0
  %1502 = vmatpush1.msra.mxu0 0.0
  %1503 = vmatprep.mubr.f32.mxu0 0.0
  %1504 = vmatmul.mubr.f32.gmra.mrb[0].mxu0 %v1354
  %v1505 = vpop.f32.mrb[0].mxu0
  %v1506 = vadd.f32 0.0, %v1505
  %v1507 = vpop.f32.mrb[0].mxu0
  %v1508 = vadd.f32 0.0, %v1507
  %1509 = vdwg.mxu0
  %1510 = vmatprep.subr.mxu0 %v1366
  %1511 = vmatpush1.msra.mxu0 %v1364
  %1512 = vmatprep.subr.mxu0 0.0
  %1513 = vmatpush1.msra.mxu0 0.0
  %1514 = vmatprep.subr.mxu0 0.0
  %1515 = vmatpush1.msra.mxu0 0.0
  %1516 = vmatprep.subr.mxu0 0.0
  %1517 = vmatpush1.msra.mxu0 0.0
  %1518 = vmatprep.subr.mxu0 0.0
  %1519 = vmatpush1.msra.mxu0 0.0
  %1520 = vmatprep.subr.mxu0 0.0
  %1521 = vmatpush1.msra.mxu0 0.0
  %1522 = vmatprep.subr.mxu0 0.0
  %1523 = vmatpush1.msra.mxu0 0.0
  %1524 = vmatprep.subr.mxu0 0.0
  %1525 = vmatpush1.msra.mxu0 0.0
  %1526 = vmatprep.subr.mxu0 0.0
  %1527 = vmatpush1.msra.mxu0 0.0
  %1528 = vmatprep.subr.mxu0 0.0
  %1529 = vmatpush1.msra.mxu0 0.0
  %1530 = vmatprep.subr.mxu0 0.0
  %1531 = vmatpush1.msra.mxu0 0.0
  %1532 = vmatprep.subr.mxu0 0.0
  %1533 = vmatpush1.msra.mxu0 0.0
  %1534 = vmatprep.subr.mxu0 0.0
  %1535 = vmatpush1.msra.mxu0 0.0
  %1536 = vmatprep.subr.mxu0 0.0
  %1537 = vmatpush1.msra.mxu0 0.0
  %1538 = vmatprep.subr.mxu0 0.0
  %1539 = vmatpush1.msra.mxu0 0.0
  %1540 = vmatprep.subr.mxu0 0.0
  %1541 = vmatpush1.msra.mxu0 0.0
  %1542 = vmatprep.subr.mxu0 0.0
  %1543 = vmatpush1.msra.mxu0 0.0
  %1544 = vmatprep.subr.mxu0 0.0
  %1545 = vmatpush1.msra.mxu0 0.0
  %1546 = vmatprep.subr.mxu0 0.0
  %1547 = vmatpush1.msra.mxu0 0.0
  %1548 = vmatprep.subr.mxu0 0.0
  %1549 = vmatpush1.msra.mxu0 0.0
  %1550 = vmatprep.subr.mxu0 0.0
  %1551 = vmatpush1.msra.mxu0 0.0
  %1552 = vmatprep.subr.mxu0 0.0
  %1553 = vmatpush1.msra.mxu0 0.0
  %1554 = vmatprep.subr.mxu0 0.0
  %1555 = vmatpush1.msra.mxu0 0.0
  %1556 = vmatprep.subr.mxu0 0.0
  %1557 = vmatpush1.msra.mxu0 0.0
  %1558 = vmatprep.subr.mxu0 0.0
  %1559 = vmatpush1.msra.mxu0 0.0
  %1560 = vmatprep.subr.mxu0 0.0
  %1561 = vmatpush1.msra.mxu0 0.0
  %1562 = vmatprep.subr.mxu0 0.0
  %1563 = vmatpush1.msra.mxu0 0.0
  %1564 = vmatprep.subr.mxu0 0.0
  %1565 = vmatpush1.msra.mxu0 0.0
  %1566 = vmatprep.subr.mxu0 0.0
  %1567 = vmatpush1.msra.mxu0 0.0
  %1568 = vmatprep.subr.mxu0 0.0
  %1569 = vmatpush1.msra.mxu0 0.0
  %1570 = vmatprep.subr.mxu0 0.0
  %1571 = vmatpush1.msra.mxu0 0.0
  %1572 = vmatprep.subr.mxu0 0.0
  %1573 = vmatpush1.msra.mxu0 0.0
  %1574 = vmatprep.mubr.f32.mxu0 0.0
  %1575 = vmatmul.mubr.f32.gmra.mrb[0].mxu0 %v1354
  %v1576 = vpop.f32.mrb[0].mxu0
  %v1577 = vadd.f32 0.0, %v1576
  %v1578 = vpop.f32.mrb[0].mxu0
  %v1579 = vadd.f32 0.0, %v1578
  %1580 = vdwg.mxu0
  %v1581 = vadd.f32 %v1318, %v1435
  %v1582 = vadd.f32 %v1319, %v1437
  %v1583 = vadd.f32 %v1320, %v1506
  %v1584 = vadd.f32 %v1321, %v1508
  %v1585 = vadd.f32 %v1322, %v1577
  %v1586 = vadd.f32 %v1323, %v1579
  %v1587 = vld [vmem:[%s0] sm:$0xff]
  %v1588 = vld [vmem:[%s0 + $0x8] sm:$0xff]
  %v1589 = vld [vmem:[%s0 + $0x10] sm:$0xff]
  %s1590 = scalar_lea.vmem %s1, 48
  %v1591 = vld [vmem:[%s1590] sm:$0x3f]
  %v1595 = vcombine.high %v1587, %v1587
  %v1596 = vcombine.high %v1588, %v1588
  %v1597 = vcombine.high %v1589, %v1589
  %1598 = vrot.lane.b32.xlu0 %v1587, 92
  %v1599 = vpop.permute.xlu0 %1598
  %1600 = vrot.lane.b32.xlu0 %v1595, 92
  %v1601 = vpop.permute.xlu0 %1600
  %1602 = vrot.lane.b32.xlu0 %v1588, 92
  %v1603 = vpop.permute.xlu0 %1602
  %1604 = vrot.lane.b32.xlu0 %v1596, 92
  %v1605 = vpop.permute.xlu0 %1604
  %1606 = vrot.lane.b32.xlu0 %v1589, 92
  %v1607 = vpop.permute.xlu0 %1606
  %1608 = vrot.lane.b32.xlu0 %v1597, 92
  %v1609 = vpop.permute.xlu0 %1608
  %vm1610 = vcmask 752640
  %v1611 = vsel %vm1610, %v1599, %v1601
  %v1612 = vsel %vm1610, %v1601, %v1603
  %v1613 = vsel %vm1610, %v1603, %v1605
  %v1614 = vsel %vm1610, %v1605, %v1607
  %v1615 = vsel %vm1610, %v1607, %v1609
  %v1617 = vsel %vm77, %v1591, 0
  %v1619 = vsel %vm81, %v1611, 0
  %v1621 = vsel %vm81, %v1612, 0
  %v1623 = vsel %vm81, %v1613, 0
  %v1625 = vsel %vm81, %v1614, 0
  %v1627 = vsel %vm81, %v1615, 0
  %v1629 = vsel %vm81, %v1609, 0
  %1631 = vmatprep.subr.mxu0 %v1621
  %1632 = vmatpush1.msra.mxu0 %v1619
  %1633 = vmatprep.subr.mxu0 0.0
  %1634 = vmatpush1.msra.mxu0 0.0
  %1635 = vmatprep.subr.mxu0 0.0
  %1636 = vmatpush1.msra.mxu0 0.0
  %1637 = vmatprep.subr.mxu0 0.0
  %1638 = vmatpush1.msra.mxu0 0.0
  %1639 = vmatprep.subr.mxu0 0.0
  %1640 = vmatpush1.msra.mxu0 0.0
  %1641 = vmatprep.subr.mxu0 0.0
  %1642 = vmatpush1.msra.mxu0 0.0
  %1643 = vmatprep.subr.mxu0 0.0
  %1644 = vmatpush1.msra.mxu0 0.0
  %1645 = vmatprep.subr.mxu0 0.0
  %1646 = vmatpush1.msra.mxu0 0.0
  %1647 = vmatprep.subr.mxu0 0.0
  %1648 = vmatpush1.msra.mxu0 0.0
  %1649 = vmatprep.subr.mxu0 0.0
  %1650 = vmatpush1.msra.mxu0 0.0
  %1651 = vmatprep.subr.mxu0 0.0
  %1652 = vmatpush1.msra.mxu0 0.0
  %1653 = vmatprep.subr.mxu0 0.0
  %1654 = vmatpush1.msra.mxu0 0.0
  %1655 = vmatprep.subr.mxu0 0.0
  %1656 = vmatpush1.msra.mxu0 0.0
  %1657 = vmatprep.subr.mxu0 0.0
  %1658 = vmatpush1.msra.mxu0 0.0
  %1659 = vmatprep.subr.mxu0 0.0
  %1660 = vmatpush1.msra.mxu0 0.0
  %1661 = vmatprep.subr.mxu0 0.0
  %1662 = vmatpush1.msra.mxu0 0.0
  %1663 = vmatprep.subr.mxu0 0.0
  %1664 = vmatpush1.msra.mxu0 0.0
  %1665 = vmatprep.subr.mxu0 0.0
  %1666 = vmatpush1.msra.mxu0 0.0
  %1667 = vmatprep.subr.mxu0 0.0
  %1668 = vmatpush1.msra.mxu0 0.0
  %1669 = vmatprep.subr.mxu0 0.0
  %1670 = vmatpush1.msra.mxu0 0.0
  %1671 = vmatprep.subr.mxu0 0.0
  %1672 = vmatpush1.msra.mxu0 0.0
  %1673 = vmatprep.subr.mxu0 0.0
  %1674 = vmatpush1.msra.mxu0 0.0
  %1675 = vmatprep.subr.mxu0 0.0
  %1676 = vmatpush1.msra.mxu0 0.0
  %1677 = vmatprep.subr.mxu0 0.0
  %1678 = vmatpush1.msra.mxu0 0.0
  %1679 = vmatprep.subr.mxu0 0.0
  %1680 = vmatpush1.msra.mxu0 0.0
  %1681 = vmatprep.subr.mxu0 0.0
  %1682 = vmatpush1.msra.mxu0 0.0
  %1683 = vmatprep.subr.mxu0 0.0
  %1684 = vmatpush1.msra.mxu0 0.0
  %1685 = vmatprep.subr.mxu0 0.0
  %1686 = vmatpush1.msra.mxu0 0.0
  %1687 = vmatprep.subr.mxu0 0.0
  %1688 = vmatpush1.msra.mxu0 0.0
  %1689 = vmatprep.subr.mxu0 0.0
  %1690 = vmatpush1.msra.mxu0 0.0
  %1691 = vmatprep.subr.mxu0 0.0
  %1692 = vmatpush1.msra.mxu0 0.0
  %1693 = vmatprep.subr.mxu0 0.0
  %1694 = vmatpush1.msra.mxu0 0.0
  %1695 = vmatprep.mubr.f32.mxu0 0.0
  %1696 = vmatmul.mubr.f32.gmra.mrb[0].mxu0 %v1617
  %v1697 = vpop.f32.mrb[0].mxu0
  %v1698 = vadd.f32 0.0, %v1697
  %v1699 = vpop.f32.mrb[0].mxu0
  %v1700 = vadd.f32 0.0, %v1699
  %1701 = vdwg.mxu0
  %1702 = vmatprep.subr.mxu0 %v1625
  %1703 = vmatpush1.msra.mxu0 %v1623
  %1704 = vmatprep.subr.mxu0 0.0
  %1705 = vmatpush1.msra.mxu0 0.0
  %1706 = vmatprep.subr.mxu0 0.0
  %1707 = vmatpush1.msra.mxu0 0.0
  %1708 = vmatprep.subr.mxu0 0.0
  %1709 = vmatpush1.msra.mxu0 0.0
  %1710 = vmatprep.subr.mxu0 0.0
  %1711 = vmatpush1.msra.mxu0 0.0
  %1712 = vmatprep.subr.mxu0 0.0
  %1713 = vmatpush1.msra.mxu0 0.0
  %1714 = vmatprep.subr.mxu0 0.0
  %1715 = vmatpush1.msra.mxu0 0.0
  %1716 = vmatprep.subr.mxu0 0.0
  %1717 = vmatpush1.msra.mxu0 0.0
  %1718 = vmatprep.subr.mxu0 0.0
  %1719 = vmatpush1.msra.mxu0 0.0
  %1720 = vmatprep.subr.mxu0 0.0
  %1721 = vmatpush1.msra.mxu0 0.0
  %1722 = vmatprep.subr.mxu0 0.0
  %1723 = vmatpush1.msra.mxu0 0.0
  %1724 = vmatprep.subr.mxu0 0.0
  %1725 = vmatpush1.msra.mxu0 0.0
  %1726 = vmatprep.subr.mxu0 0.0
  %1727 = vmatpush1.msra.mxu0 0.0
  %1728 = vmatprep.subr.mxu0 0.0
  %1729 = vmatpush1.msra.mxu0 0.0
  %1730 = vmatprep.subr.mxu0 0.0
  %1731 = vmatpush1.msra.mxu0 0.0
  %1732 = vmatprep.subr.mxu0 0.0
  %1733 = vmatpush1.msra.mxu0 0.0
  %1734 = vmatprep.subr.mxu0 0.0
  %1735 = vmatpush1.msra.mxu0 0.0
  %1736 = vmatprep.subr.mxu0 0.0
  %1737 = vmatpush1.msra.mxu0 0.0
  %1738 = vmatprep.subr.mxu0 0.0
  %1739 = vmatpush1.msra.mxu0 0.0
  %1740 = vmatprep.subr.mxu0 0.0
  %1741 = vmatpush1.msra.mxu0 0.0
  %1742 = vmatprep.subr.mxu0 0.0
  %1743 = vmatpush1.msra.mxu0 0.0
  %1744 = vmatprep.subr.mxu0 0.0
  %1745 = vmatpush1.msra.mxu0 0.0
  %1746 = vmatprep.subr.mxu0 0.0
  %1747 = vmatpush1.msra.mxu0 0.0
  %1748 = vmatprep.subr.mxu0 0.0
  %1749 = vmatpush1.msra.mxu0 0.0
  %1750 = vmatprep.subr.mxu0 0.0
  %1751 = vmatpush1.msra.mxu0 0.0
  %1752 = vmatprep.subr.mxu0 0.0
  %1753 = vmatpush1.msra.mxu0 0.0
  %1754 = vmatprep.subr.mxu0 0.0
  %1755 = vmatpush1.msra.mxu0 0.0
  %1756 = vmatprep.subr.mxu0 0.0
  %1757 = vmatpush1.msra.mxu0 0.0
  %1758 = vmatprep.subr.mxu0 0.0
  %1759 = vmatpush1.msra.mxu0 0.0
  %1760 = vmatprep.subr.mxu0 0.0
  %1761 = vmatpush1.msra.mxu0 0.0
  %1762 = vmatprep.subr.mxu0 0.0
  %1763 = vmatpush1.msra.mxu0 0.0
  %1764 = vmatprep.subr.mxu0 0.0
  %1765 = vmatpush1.msra.mxu0 0.0
  %1766 = vmatprep.mubr.f32.mxu0 0.0
  %1767 = vmatmul.mubr.f32.gmra.mrb[0].mxu0 %v1617
  %v1768 = vpop.f32.mrb[0].mxu0
  %v1769 = vadd.f32 0.0, %v1768
  %v1770 = vpop.f32.mrb[0].mxu0
  %v1771 = vadd.f32 0.0, %v1770
  %1772 = vdwg.mxu0
  %1773 = vmatprep.subr.mxu0 %v1629
  %1774 = vmatpush1.msra.mxu0 %v1627
  %1775 = vmatprep.subr.mxu0 0.0
  %1776 = vmatpush1.msra.mxu0 0.0
  %1777 = vmatprep.subr.mxu0 0.0
  %1778 = vmatpush1.msra.mxu0 0.0
  %1779 = vmatprep.subr.mxu0 0.0
  %1780 = vmatpush1.msra.mxu0 0.0
  %1781 = vmatprep.subr.mxu0 0.0
  %1782 = vmatpush1.msra.mxu0 0.0
  %1783 = vmatprep.subr.mxu0 0.0
  %1784 = vmatpush1.msra.mxu0 0.0
  %1785 = vmatprep.subr.mxu0 0.0
  %1786 = vmatpush1.msra.mxu0 0.0
  %1787 = vmatprep.subr.mxu0 0.0
  %1788 = vmatpush1.msra.mxu0 0.0
  %1789 = vmatprep.subr.mxu0 0.0
  %1790 = vmatpush1.msra.mxu0 0.0
  %1791 = vmatprep.subr.mxu0 0.0
  %1792 = vmatpush1.msra.mxu0 0.0
  %1793 = vmatprep.subr.mxu0 0.0
  %1794 = vmatpush1.msra.mxu0 0.0
  %1795 = vmatprep.subr.mxu0 0.0
  %1796 = vmatpush1.msra.mxu0 0.0
  %1797 = vmatprep.subr.mxu0 0.0
  %1798 = vmatpush1.msra.mxu0 0.0
  %1799 = vmatprep.subr.mxu0 0.0
  %1800 = vmatpush1.msra.mxu0 0.0
  %1801 = vmatprep.subr.mxu0 0.0
  %1802 = vmatpush1.msra.mxu0 0.0
  %1803 = vmatprep.subr.mxu0 0.0
  %1804 = vmatpush1.msra.mxu0 0.0
  %1805 = vmatprep.subr.mxu0 0.0
  %1806 = vmatpush1.msra.mxu0 0.0
  %1807 = vmatprep.subr.mxu0 0.0
  %1808 = vmatpush1.msra.mxu0 0.0
  %1809 = vmatprep.subr.mxu0 0.0
  %1810 = vmatpush1.msra.mxu0 0.0
  %1811 = vmatprep.subr.mxu0 0.0
  %1812 = vmatpush1.msra.mxu0 0.0
  %1813 = vmatprep.subr.mxu0 0.0
  %1814 = vmatpush1.msra.mxu0 0.0
  %1815 = vmatprep.subr.mxu0 0.0
  %1816 = vmatpush1.msra.mxu0 0.0
  %1817 = vmatprep.subr.mxu0 0.0
  %1818 = vmatpush1.msra.mxu0 0.0
  %1819 = vmatprep.subr.mxu0 0.0
  %1820 = vmatpush1.msra.mxu0 0.0
  %1821 = vmatprep.subr.mxu0 0.0
  %1822 = vmatpush1.msra.mxu0 0.0
  %1823 = vmatprep.subr.mxu0 0.0
  %1824 = vmatpush1.msra.mxu0 0.0
  %1825 = vmatprep.subr.mxu0 0.0
  %1826 = vmatpush1.msra.mxu0 0.0
  %1827 = vmatprep.subr.mxu0 0.0
  %1828 = vmatpush1.msra.mxu0 0.0
  %1829 = vmatprep.subr.mxu0 0.0
  %1830 = vmatpush1.msra.mxu0 0.0
  %1831 = vmatprep.subr.mxu0 0.0
  %1832 = vmatpush1.msra.mxu0 0.0
  %1833 = vmatprep.subr.mxu0 0.0
  %1834 = vmatpush1.msra.mxu0 0.0
  %1835 = vmatprep.subr.mxu0 0.0
  %1836 = vmatpush1.msra.mxu0 0.0
  %1837 = vmatprep.mubr.f32.mxu0 0.0
  %1838 = vmatmul.mubr.f32.gmra.mrb[0].mxu0 %v1617
  %v1839 = vpop.f32.mrb[0].mxu0
  %v1840 = vadd.f32 0.0, %v1839
  %v1841 = vpop.f32.mrb[0].mxu0
  %v1842 = vadd.f32 0.0, %v1841
  %1843 = vdwg.mxu0
  %v1844 = vadd.f32 %v1581, %v1698
  %v1845 = vadd.f32 %v1582, %v1700
  %v1846 = vadd.f32 %v1583, %v1769
  %v1847 = vadd.f32 %v1584, %v1771
  %v1848 = vadd.f32 %v1585, %v1840
  %v1849 = vadd.f32 %v1586, %v1842
  %v1850 = vld [vmem:[%s0] sm:$0xff]
  %v1851 = vld [vmem:[%s0 + $0x8] sm:$0xff]
  %v1852 = vld [vmem:[%s0 + $0x10] sm:$0xff]
  %s1853 = scalar_lea.vmem %s1, 56
  %v1854 = vld [vmem:[%s1853] sm:$0x3f]
  %v1858 = vcombine.high %v1850, %v1850
  %v1859 = vcombine.high %v1851, %v1851
  %v1860 = vcombine.high %v1852, %v1852
  %1861 = vrot.lane.b32.xlu0 %v1850, 91
  %v1862 = vpop.permute.xlu0 %1861
  %1863 = vrot.lane.b32.xlu0 %v1858, 91
  %v1864 = vpop.permute.xlu0 %1863
  %1865 = vrot.lane.b32.xlu0 %v1851, 91
  %v1866 = vpop.permute.xlu0 %1865
  %1867 = vrot.lane.b32.xlu0 %v1859, 91
  %v1868 = vpop.permute.xlu0 %1867
  %1869 = vrot.lane.b32.xlu0 %v1852, 91
  %v1870 = vpop.permute.xlu0 %1869
  %1871 = vrot.lane.b32.xlu0 %v1860, 91
  %v1872 = vpop.permute.xlu0 %1871
  %vm1873 = vcmask 744448
  %v1874 = vsel %vm1873, %v1862, %v1864
  %v1875 = vsel %vm1873, %v1864, %v1866
  %v1876 = vsel %vm1873, %v1866, %v1868
  %v1877 = vsel %vm1873, %v1868, %v1870
  %v1878 = vsel %vm1873, %v1870, %v1872
  %v1880 = vsel %vm77, %v1854, 0
  %v1882 = vsel %vm81, %v1874, 0
  %v1884 = vsel %vm81, %v1875, 0
  %v1886 = vsel %vm81, %v1876, 0
  %v1888 = vsel %vm81, %v1877, 0
  %v1890 = vsel %vm81, %v1878, 0
  %v1892 = vsel %vm81, %v1872, 0
  %1894 = vmatprep.subr.mxu0 %v1884
  %1895 = vmatpush1.msra.mxu0 %v1882
  %1896 = vmatprep.subr.mxu0 0.0
  %1897 = vmatpush1.msra.mxu0 0.0
  %1898 = vmatprep.subr.mxu0 0.0
  %1899 = vmatpush1.msra.mxu0 0.0
  %1900 = vmatprep.subr.mxu0 0.0
  %1901 = vmatpush1.msra.mxu0 0.0
  %1902 = vmatprep.subr.mxu0 0.0
  %1903 = vmatpush1.msra.mxu0 0.0
  %1904 = vmatprep.subr.mxu0 0.0
  %1905 = vmatpush1.msra.mxu0 0.0
  %1906 = vmatprep.subr.mxu0 0.0
  %1907 = vmatpush1.msra.mxu0 0.0
  %1908 = vmatprep.subr.mxu0 0.0
  %1909 = vmatpush1.msra.mxu0 0.0
  %1910 = vmatprep.subr.mxu0 0.0
  %1911 = vmatpush1.msra.mxu0 0.0
  %1912 = vmatprep.subr.mxu0 0.0
  %1913 = vmatpush1.msra.mxu0 0.0
  %1914 = vmatprep.subr.mxu0 0.0
  %1915 = vmatpush1.msra.mxu0 0.0
  %1916 = vmatprep.subr.mxu0 0.0
  %1917 = vmatpush1.msra.mxu0 0.0
  %1918 = vmatprep.subr.mxu0 0.0
  %1919 = vmatpush1.msra.mxu0 0.0
  %1920 = vmatprep.subr.mxu0 0.0
  %1921 = vmatpush1.msra.mxu0 0.0
  %1922 = vmatprep.subr.mxu0 0.0
  %1923 = vmatpush1.msra.mxu0 0.0
  %1924 = vmatprep.subr.mxu0 0.0
  %1925 = vmatpush1.msra.mxu0 0.0
  %1926 = vmatprep.subr.mxu0 0.0
  %1927 = vmatpush1.msra.mxu0 0.0
  %1928 = vmatprep.subr.mxu0 0.0
  %1929 = vmatpush1.msra.mxu0 0.0
  %1930 = vmatprep.subr.mxu0 0.0
  %1931 = vmatpush1.msra.mxu0 0.0
  %1932 = vmatprep.subr.mxu0 0.0
  %1933 = vmatpush1.msra.mxu0 0.0
  %1934 = vmatprep.subr.mxu0 0.0
  %1935 = vmatpush1.msra.mxu0 0.0
  %1936 = vmatprep.subr.mxu0 0.0
  %1937 = vmatpush1.msra.mxu0 0.0
  %1938 = vmatprep.subr.mxu0 0.0
  %1939 = vmatpush1.msra.mxu0 0.0
  %1940 = vmatprep.subr.mxu0 0.0
  %1941 = vmatpush1.msra.mxu0 0.0
  %1942 = vmatprep.subr.mxu0 0.0
  %1943 = vmatpush1.msra.mxu0 0.0
  %1944 = vmatprep.subr.mxu0 0.0
  %1945 = vmatpush1.msra.mxu0 0.0
  %1946 = vmatprep.subr.mxu0 0.0
  %1947 = vmatpush1.msra.mxu0 0.0
  %1948 = vmatprep.subr.mxu0 0.0
  %1949 = vmatpush1.msra.mxu0 0.0
  %1950 = vmatprep.subr.mxu0 0.0
  %1951 = vmatpush1.msra.mxu0 0.0
  %1952 = vmatprep.subr.mxu0 0.0
  %1953 = vmatpush1.msra.mxu0 0.0
  %1954 = vmatprep.subr.mxu0 0.0
  %1955 = vmatpush1.msra.mxu0 0.0
  %1956 = vmatprep.subr.mxu0 0.0
  %1957 = vmatpush1.msra.mxu0 0.0
  %1958 = vmatprep.mubr.f32.mxu0 0.0
  %1959 = vmatmul.mubr.f32.gmra.mrb[0].mxu0 %v1880
  %v1960 = vpop.f32.mrb[0].mxu0
  %v1961 = vadd.f32 0.0, %v1960
  %v1962 = vpop.f32.mrb[0].mxu0
  %v1963 = vadd.f32 0.0, %v1962
  %1964 = vdwg.mxu0
  %1965 = vmatprep.subr.mxu0 %v1888
  %1966 = vmatpush1.msra.mxu0 %v1886
  %1967 = vmatprep.subr.mxu0 0.0
  %1968 = vmatpush1.msra.mxu0 0.0
  %1969 = vmatprep.subr.mxu0 0.0
  %1970 = vmatpush1.msra.mxu0 0.0
  %1971 = vmatprep.subr.mxu0 0.0
  %1972 = vmatpush1.msra.mxu0 0.0
  %1973 = vmatprep.subr.mxu0 0.0
  %1974 = vmatpush1.msra.mxu0 0.0
  %1975 = vmatprep.subr.mxu0 0.0
  %1976 = vmatpush1.msra.mxu0 0.0
  %1977 = vmatprep.subr.mxu0 0.0
  %1978 = vmatpush1.msra.mxu0 0.0
  %1979 = vmatprep.subr.mxu0 0.0
  %1980 = vmatpush1.msra.mxu0 0.0
  %1981 = vmatprep.subr.mxu0 0.0
  %1982 = vmatpush1.msra.mxu0 0.0
  %1983 = vmatprep.subr.mxu0 0.0
  %1984 = vmatpush1.msra.mxu0 0.0
  %1985 = vmatprep.subr.mxu0 0.0
  %1986 = vmatpush1.msra.mxu0 0.0
  %1987 = vmatprep.subr.mxu0 0.0
  %1988 = vmatpush1.msra.mxu0 0.0
  %1989 = vmatprep.subr.mxu0 0.0
  %1990 = vmatpush1.msra.mxu0 0.0
  %1991 = vmatprep.subr.mxu0 0.0
  %1992 = vmatpush1.msra.mxu0 0.0
  %1993 = vmatprep.subr.mxu0 0.0
  %1994 = vmatpush1.msra.mxu0 0.0
  %1995 = vmatprep.subr.mxu0 0.0
  %1996 = vmatpush1.msra.mxu0 0.0
  %1997 = vmatprep.subr.mxu0 0.0
  %1998 = vmatpush1.msra.mxu0 0.0
  %1999 = vmatprep.subr.mxu0 0.0
  %2000 = vmatpush1.msra.mxu0 0.0
  %2001 = vmatprep.subr.mxu0 0.0
  %2002 = vmatpush1.msra.mxu0 0.0
  %2003 = vmatprep.subr.mxu0 0.0
  %2004 = vmatpush1.msra.mxu0 0.0
  %2005 = vmatprep.subr.mxu0 0.0
  %2006 = vmatpush1.msra.mxu0 0.0
  %2007 = vmatprep.subr.mxu0 0.0
  %2008 = vmatpush1.msra.mxu0 0.0
  %2009 = vmatprep.subr.mxu0 0.0
  %2010 = vmatpush1.msra.mxu0 0.0
  %2011 = vmatprep.subr.mxu0 0.0
  %2012 = vmatpush1.msra.mxu0 0.0
  %2013 = vmatprep.subr.mxu0 0.0
  %2014 = vmatpush1.msra.mxu0 0.0
  %2015 = vmatprep.subr.mxu0 0.0
  %2016 = vmatpush1.msra.mxu0 0.0
  %2017 = vmatprep.subr.mxu0 0.0
  %2018 = vmatpush1.msra.mxu0 0.0
  %2019 = vmatprep.subr.mxu0 0.0
  %2020 = vmatpush1.msra.mxu0 0.0
  %2021 = vmatprep.subr.mxu0 0.0
  %2022 = vmatpush1.msra.mxu0 0.0
  %2023 = vmatprep.subr.mxu0 0.0
  %2024 = vmatpush1.msra.mxu0 0.0
  %2025 = vmatprep.subr.mxu0 0.0
  %2026 = vmatpush1.msra.mxu0 0.0
  %2027 = vmatprep.subr.mxu0 0.0
  %2028 = vmatpush1.msra.mxu0 0.0
  %2029 = vmatprep.mubr.f32.mxu0 0.0
  %2030 = vmatmul.mubr.f32.gmra.mrb[0].mxu0 %v1880
  %v2031 = vpop.f32.mrb[0].mxu0
  %v2032 = vadd.f32 0.0, %v2031
  %v2033 = vpop.f32.mrb[0].mxu0
  %v2034 = vadd.f32 0.0, %v2033
  %2035 = vdwg.mxu0
  %2036 = vmatprep.subr.mxu0 %v1892
  %2037 = vmatpush1.msra.mxu0 %v1890
  %2038 = vmatprep.subr.mxu0 0.0
  %2039 = vmatpush1.msra.mxu0 0.0
  %2040 = vmatprep.subr.mxu0 0.0
  %2041 = vmatpush1.msra.mxu0 0.0
  %2042 = vmatprep.subr.mxu0 0.0
  %2043 = vmatpush1.msra.mxu0 0.0
  %2044 = vmatprep.subr.mxu0 0.0
  %2045 = vmatpush1.msra.mxu0 0.0
  %2046 = vmatprep.subr.mxu0 0.0
  %2047 = vmatpush1.msra.mxu0 0.0
  %2048 = vmatprep.subr.mxu0 0.0
  %2049 = vmatpush1.msra.mxu0 0.0
  %2050 = vmatprep.subr.mxu0 0.0
  %2051 = vmatpush1.msra.mxu0 0.0
  %2052 = vmatprep.subr.mxu0 0.0
  %2053 = vmatpush1.msra.mxu0 0.0
  %2054 = vmatprep.subr.mxu0 0.0
  %2055 = vmatpush1.msra.mxu0 0.0
  %2056 = vmatprep.subr.mxu0 0.0
  %2057 = vmatpush1.msra.mxu0 0.0
  %2058 = vmatprep.subr.mxu0 0.0
  %2059 = vmatpush1.msra.mxu0 0.0
  %2060 = vmatprep.subr.mxu0 0.0
  %2061 = vmatpush1.msra.mxu0 0.0
  %2062 = vmatprep.subr.mxu0 0.0
  %2063 = vmatpush1.msra.mxu0 0.0
  %2064 = vmatprep.subr.mxu0 0.0
  %2065 = vmatpush1.msra.mxu0 0.0
  %2066 = vmatprep.subr.mxu0 0.0
  %2067 = vmatpush1.msra.mxu0 0.0
  %2068 = vmatprep.subr.mxu0 0.0
  %2069 = vmatpush1.msra.mxu0 0.0
  %2070 = vmatprep.subr.mxu0 0.0
  %2071 = vmatpush1.msra.mxu0 0.0
  %2072 = vmatprep.subr.mxu0 0.0
  %2073 = vmatpush1.msra.mxu0 0.0
  %2074 = vmatprep.subr.mxu0 0.0
  %2075 = vmatpush1.msra.mxu0 0.0
  %2076 = vmatprep.subr.mxu0 0.0
  %2077 = vmatpush1.msra.mxu0 0.0
  %2078 = vmatprep.subr.mxu0 0.0
  %2079 = vmatpush1.msra.mxu0 0.0
  %2080 = vmatprep.subr.mxu0 0.0
  %2081 = vmatpush1.msra.mxu0 0.0
  %2082 = vmatprep.subr.mxu0 0.0
  %2083 = vmatpush1.msra.mxu0 0.0
  %2084 = vmatprep.subr.mxu0 0.0
  %2085 = vmatpush1.msra.mxu0 0.0
  %2086 = vmatprep.subr.mxu0 0.0
  %2087 = vmatpush1.msra.mxu0 0.0
  %2088 = vmatprep.subr.mxu0 0.0
  %2089 = vmatpush1.msra.mxu0 0.0
  %2090 = vmatprep.subr.mxu0 0.0
  %2091 = vmatpush1.msra.mxu0 0.0
  %2092 = vmatprep.subr.mxu0 0.0
  %2093 = vmatpush1.msra.mxu0 0.0
  %2094 = vmatprep.subr.mxu0 0.0
  %2095 = vmatpush1.msra.mxu0 0.0
  %2096 = vmatprep.subr.mxu0 0.0
  %2097 = vmatpush1.msra.mxu0 0.0
  %2098 = vmatprep.subr.mxu0 0.0
  %2099 = vmatpush1.msra.mxu0 0.0
  %2100 = vmatprep.mubr.f32.mxu0 0.0
  %2101 = vmatmul.mubr.f32.gmra.mrb[0].mxu0 %v1880
  %v2102 = vpop.f32.mrb[0].mxu0
  %v2103 = vadd.f32 0.0, %v2102
  %v2104 = vpop.f32.mrb[0].mxu0
  %v2105 = vadd.f32 0.0, %v2104
  %2106 = vdwg.mxu0
  %v2107 = vadd.f32 %v1844, %v1961
  %v2108 = vadd.f32 %v1845, %v1963
  %v2109 = vadd.f32 %v1846, %v2032
  %v2110 = vadd.f32 %v1847, %v2034
  %v2111 = vadd.f32 %v1848, %v2103
  %v2112 = vadd.f32 %v1849, %v2105
  %v2113 = vld [vmem:[%s0] sm:$0xff]
  %v2114 = vld [vmem:[%s0 + $0x8] sm:$0xff]
  %v2115 = vld [vmem:[%s0 + $0x10] sm:$0xff]
  %s2116 = scalar_lea.vmem %s1, 64
  %v2117 = vld [vmem:[%s2116] sm:$0x3f]
  %v2121 = vcombine.high %v2113, %v2113
  %v2122 = vcombine.high %v2114, %v2114
  %v2123 = vcombine.high %v2115, %v2115
  %2124 = vrot.lane.b32.xlu0 %v2113, 90
  %v2125 = vpop.permute.xlu0 %2124
  %2126 = vrot.lane.b32.xlu0 %v2121, 90
  %v2127 = vpop.permute.xlu0 %2126
  %2128 = vrot.lane.b32.xlu0 %v2114, 90
  %v2129 = vpop.permute.xlu0 %2128
  %2130 = vrot.lane.b32.xlu0 %v2122, 90
  %v2131 = vpop.permute.xlu0 %2130
  %2132 = vrot.lane.b32.xlu0 %v2115, 90
  %v2133 = vpop.permute.xlu0 %2132
  %2134 = vrot.lane.b32.xlu0 %v2123, 90
  %v2135 = vpop.permute.xlu0 %2134
  %vm2136 = vcmask 736256
  %v2137 = vsel %vm2136, %v2125, %v2127
  %v2138 = vsel %vm2136, %v2127, %v2129
  %v2139 = vsel %vm2136, %v2129, %v2131
  %v2140 = vsel %vm2136, %v2131, %v2133
  %v2141 = vsel %vm2136, %v2133, %v2135
  %v2143 = vsel %vm77, %v2117, 0
  %v2145 = vsel %vm81, %v2137, 0
  %v2147 = vsel %vm81, %v2138, 0
  %v2149 = vsel %vm81, %v2139, 0
  %v2151 = vsel %vm81, %v2140, 0
  %v2153 = vsel %vm81, %v2141, 0
  %v2155 = vsel %vm81, %v2135, 0
  %2157 = vmatprep.subr.mxu0 %v2147
  %2158 = vmatpush1.msra.mxu0 %v2145
  %2159 = vmatprep.subr.mxu0 0.0
  %2160 = vmatpush1.msra.mxu0 0.0
  %2161 = vmatprep.subr.mxu0 0.0
  %2162 = vmatpush1.msra.mxu0 0.0
  %2163 = vmatprep.subr.mxu0 0.0
  %2164 = vmatpush1.msra.mxu0 0.0
  %2165 = vmatprep.subr.mxu0 0.0
  %2166 = vmatpush1.msra.mxu0 0.0
  %2167 = vmatprep.subr.mxu0 0.0
  %2168 = vmatpush1.msra.mxu0 0.0
  %2169 = vmatprep.subr.mxu0 0.0
  %2170 = vmatpush1.msra.mxu0 0.0
  %2171 = vmatprep.subr.mxu0 0.0
  %2172 = vmatpush1.msra.mxu0 0.0
  %2173 = vmatprep.subr.mxu0 0.0
  %2174 = vmatpush1.msra.mxu0 0.0
  %2175 = vmatprep.subr.mxu0 0.0
  %2176 = vmatpush1.msra.mxu0 0.0
  %2177 = vmatprep.subr.mxu0 0.0
  %2178 = vmatpush1.msra.mxu0 0.0
  %2179 = vmatprep.subr.mxu0 0.0
  %2180 = vmatpush1.msra.mxu0 0.0
  %2181 = vmatprep.subr.mxu0 0.0
  %2182 = vmatpush1.msra.mxu0 0.0
  %2183 = vmatprep.subr.mxu0 0.0
  %2184 = vmatpush1.msra.mxu0 0.0
  %2185 = vmatprep.subr.mxu0 0.0
  %2186 = vmatpush1.msra.mxu0 0.0
  %2187 = vmatprep.subr.mxu0 0.0
  %2188 = vmatpush1.msra.mxu0 0.0
  %2189 = vmatprep.subr.mxu0 0.0
  %2190 = vmatpush1.msra.mxu0 0.0
  %2191 = vmatprep.subr.mxu0 0.0
  %2192 = vmatpush1.msra.mxu0 0.0
  %2193 = vmatprep.subr.mxu0 0.0
  %2194 = vmatpush1.msra.mxu0 0.0
  %2195 = vmatprep.subr.mxu0 0.0
  %2196 = vmatpush1.msra.mxu0 0.0
  %2197 = vmatprep.subr.mxu0 0.0
  %2198 = vmatpush1.msra.mxu0 0.0
  %2199 = vmatprep.subr.mxu0 0.0
  %2200 = vmatpush1.msra.mxu0 0.0
  %2201 = vmatprep.subr.mxu0 0.0
  %2202 = vmatpush1.msra.mxu0 0.0
  %2203 = vmatprep.subr.mxu0 0.0
  %2204 = vmatpush1.msra.mxu0 0.0
  %2205 = vmatprep.subr.mxu0 0.0
  %2206 = vmatpush1.msra.mxu0 0.0
  %2207 = vmatprep.subr.mxu0 0.0
  %2208 = vmatpush1.msra.mxu0 0.0
  %2209 = vmatprep.subr.mxu0 0.0
  %2210 = vmatpush1.msra.mxu0 0.0
  %2211 = vmatprep.subr.mxu0 0.0
  %2212 = vmatpush1.msra.mxu0 0.0
  %2213 = vmatprep.subr.mxu0 0.0
  %2214 = vmatpush1.msra.mxu0 0.0
  %2215 = vmatprep.subr.mxu0 0.0
  %2216 = vmatpush1.msra.mxu0 0.0
  %2217 = vmatprep.subr.mxu0 0.0
  %2218 = vmatpush1.msra.mxu0 0.0
  %2219 = vmatprep.subr.mxu0 0.0
  %2220 = vmatpush1.msra.mxu0 0.0
  %2221 = vmatprep.mubr.f32.mxu0 0.0
  %2222 = vmatmul.mubr.f32.gmra.mrb[0].mxu0 %v2143
  %v2223 = vpop.f32.mrb[0].mxu0
  %v2224 = vadd.f32 0.0, %v2223
  %v2225 = vpop.f32.mrb[0].mxu0
  %v2226 = vadd.f32 0.0, %v2225
  %2227 = vdwg.mxu0
  %2228 = vmatprep.subr.mxu0 %v2151
  %2229 = vmatpush1.msra.mxu0 %v2149
  %2230 = vmatprep.subr.mxu0 0.0
  %2231 = vmatpush1.msra.mxu0 0.0
  %2232 = vmatprep.subr.mxu0 0.0
  %2233 = vmatpush1.msra.mxu0 0.0
  %2234 = vmatprep.subr.mxu0 0.0
  %2235 = vmatpush1.msra.mxu0 0.0
  %2236 = vmatprep.subr.mxu0 0.0
  %2237 = vmatpush1.msra.mxu0 0.0
  %2238 = vmatprep.subr.mxu0 0.0
  %2239 = vmatpush1.msra.mxu0 0.0
  %2240 = vmatprep.subr.mxu0 0.0
  %2241 = vmatpush1.msra.mxu0 0.0
  %2242 = vmatprep.subr.mxu0 0.0
  %2243 = vmatpush1.msra.mxu0 0.0
  %2244 = vmatprep.subr.mxu0 0.0
  %2245 = vmatpush1.msra.mxu0 0.0
  %2246 = vmatprep.subr.mxu0 0.0
  %2247 = vmatpush1.msra.mxu0 0.0
  %2248 = vmatprep.subr.mxu0 0.0
  %2249 = vmatpush1.msra.mxu0 0.0
  %2250 = vmatprep.subr.mxu0 0.0
  %2251 = vmatpush1.msra.mxu0 0.0
  %2252 = vmatprep.subr.mxu0 0.0
  %2253 = vmatpush1.msra.mxu0 0.0
  %2254 = vmatprep.subr.mxu0 0.0
  %2255 = vmatpush1.msra.mxu0 0.0
  %2256 = vmatprep.subr.mxu0 0.0
  %2257 = vmatpush1.msra.mxu0 0.0
  %2258 = vmatprep.subr.mxu0 0.0
  %2259 = vmatpush1.msra.mxu0 0.0
  %2260 = vmatprep.subr.mxu0 0.0
  %2261 = vmatpush1.msra.mxu0 0.0
  %2262 = vmatprep.subr.mxu0 0.0
  %2263 = vmatpush1.msra.mxu0 0.0
  %2264 = vmatprep.subr.mxu0 0.0
  %2265 = vmatpush1.msra.mxu0 0.0
  %2266 = vmatprep.subr.mxu0 0.0
  %2267 = vmatpush1.msra.mxu0 0.0
  %2268 = vmatprep.subr.mxu0 0.0
  %2269 = vmatpush1.msra.mxu0 0.0
  %2270 = vmatprep.subr.mxu0 0.0
  %2271 = vmatpush1.msra.mxu0 0.0
  %2272 = vmatprep.subr.mxu0 0.0
  %2273 = vmatpush1.msra.mxu0 0.0
  %2274 = vmatprep.subr.mxu0 0.0
  %2275 = vmatpush1.msra.mxu0 0.0
  %2276 = vmatprep.subr.mxu0 0.0
  %2277 = vmatpush1.msra.mxu0 0.0
  %2278 = vmatprep.subr.mxu0 0.0
  %2279 = vmatpush1.msra.mxu0 0.0
  %2280 = vmatprep.subr.mxu0 0.0
  %2281 = vmatpush1.msra.mxu0 0.0
  %2282 = vmatprep.subr.mxu0 0.0
  %2283 = vmatpush1.msra.mxu0 0.0
  %2284 = vmatprep.subr.mxu0 0.0
  %2285 = vmatpush1.msra.mxu0 0.0
  %2286 = vmatprep.subr.mxu0 0.0
  %2287 = vmatpush1.msra.mxu0 0.0
  %2288 = vmatprep.subr.mxu0 0.0
  %2289 = vmatpush1.msra.mxu0 0.0
  %2290 = vmatprep.subr.mxu0 0.0
  %2291 = vmatpush1.msra.mxu0 0.0
  %2292 = vmatprep.mubr.f32.mxu0 0.0
  %2293 = vmatmul.mubr.f32.gmra.mrb[0].mxu0 %v2143
  %v2294 = vpop.f32.mrb[0].mxu0
  %v2295 = vadd.f32 0.0, %v2294
  %v2296 = vpop.f32.mrb[0].mxu0
  %v2297 = vadd.f32 0.0, %v2296
  %2298 = vdwg.mxu0
  %2299 = vmatprep.subr.mxu0 %v2155
  %2300 = vmatpush1.msra.mxu0 %v2153
  %2301 = vmatprep.subr.mxu0 0.0
  %2302 = vmatpush1.msra.mxu0 0.0
  %2303 = vmatprep.subr.mxu0 0.0
  %2304 = vmatpush1.msra.mxu0 0.0
  %2305 = vmatprep.subr.mxu0 0.0
  %2306 = vmatpush1.msra.mxu0 0.0
  %2307 = vmatprep.subr.mxu0 0.0
  %2308 = vmatpush1.msra.mxu0 0.0
  %2309 = vmatprep.subr.mxu0 0.0
  %2310 = vmatpush1.msra.mxu0 0.0
  %2311 = vmatprep.subr.mxu0 0.0
  %2312 = vmatpush1.msra.mxu0 0.0
  %2313 = vmatprep.subr.mxu0 0.0
  %2314 = vmatpush1.msra.mxu0 0.0
  %2315 = vmatprep.subr.mxu0 0.0
  %2316 = vmatpush1.msra.mxu0 0.0
  %2317 = vmatprep.subr.mxu0 0.0
  %2318 = vmatpush1.msra.mxu0 0.0
  %2319 = vmatprep.subr.mxu0 0.0
  %2320 = vmatpush1.msra.mxu0 0.0
  %2321 = vmatprep.subr.mxu0 0.0
  %2322 = vmatpush1.msra.mxu0 0.0
  %2323 = vmatprep.subr.mxu0 0.0
  %2324 = vmatpush1.msra.mxu0 0.0
  %2325 = vmatprep.subr.mxu0 0.0
  %2326 = vmatpush1.msra.mxu0 0.0
  %2327 = vmatprep.subr.mxu0 0.0
  %2328 = vmatpush1.msra.mxu0 0.0
  %2329 = vmatprep.subr.mxu0 0.0
  %2330 = vmatpush1.msra.mxu0 0.0
  %2331 = vmatprep.subr.mxu0 0.0
  %2332 = vmatpush1.msra.mxu0 0.0
  %2333 = vmatprep.subr.mxu0 0.0
  %2334 = vmatpush1.msra.mxu0 0.0
  %2335 = vmatprep.subr.mxu0 0.0
  %2336 = vmatpush1.msra.mxu0 0.0
  %2337 = vmatprep.subr.mxu0 0.0
  %2338 = vmatpush1.msra.mxu0 0.0
  %2339 = vmatprep.subr.mxu0 0.0
  %2340 = vmatpush1.msra.mxu0 0.0
  %2341 = vmatprep.subr.mxu0 0.0
  %2342 = vmatpush1.msra.mxu0 0.0
  %2343 = vmatprep.subr.mxu0 0.0
  %2344 = vmatpush1.msra.mxu0 0.0
  %2345 = vmatprep.subr.mxu0 0.0
  %2346 = vmatpush1.msra.mxu0 0.0
  %2347 = vmatprep.subr.mxu0 0.0
  %2348 = vmatpush1.msra.mxu0 0.0
  %2349 = vmatprep.subr.mxu0 0.0
  %2350 = vmatpush1.msra.mxu0 0.0
  %2351 = vmatprep.subr.mxu0 0.0
  %2352 = vmatpush1.msra.mxu0 0.0
  %2353 = vmatprep.subr.mxu0 0.0
  %2354 = vmatpush1.msra.mxu0 0.0
  %2355 = vmatprep.subr.mxu0 0.0
  %2356 = vmatpush1.msra.mxu0 0.0
  %2357 = vmatprep.subr.mxu0 0.0
  %2358 = vmatpush1.msra.mxu0 0.0
  %2359 = vmatprep.subr.mxu0 0.0
  %2360 = vmatpush1.msra.mxu0 0.0
  %2361 = vmatprep.subr.mxu0 0.0
  %2362 = vmatpush1.msra.mxu0 0.0
  %2363 = vmatprep.mubr.f32.mxu0 0.0
  %2364 = vmatmul.mubr.f32.gmra.mrb[0].mxu0 %v2143
  %v2365 = vpop.f32.mrb[0].mxu0
  %v2366 = vadd.f32 0.0, %v2365
  %v2367 = vpop.f32.mrb[0].mxu0
  %v2368 = vadd.f32 0.0, %v2367
  %2369 = vdwg.mxu0
  %v2370 = vadd.f32 %v2107, %v2224
  %v2371 = vadd.f32 %v2108, %v2226
  %v2372 = vadd.f32 %v2109, %v2295
  %v2373 = vadd.f32 %v2110, %v2297
  %v2374 = vadd.f32 %v2111, %v2366
  %v2375 = vadd.f32 %v2112, %v2368
  %v2376 = vld [vmem:[%s3] sm:$0x3f]
  %v2378 = vlaneseq
  %v2379 = vshrl.u32 %v2378, 7
  %v2380 = vsub.s32 0, %v2379
  %v2381 = vrot.slane %v2376, %v2380
  %v2382 = vlaneseq
  %v2383 = vshrl.u32 %v2382, 7
  %v2384 = vsub.s32 1, %v2383
  %v2385 = vrot.slane %v2376, %v2384
  %v2386 = vlaneseq
  %v2387 = vshrl.u32 %v2386, 7
  %v2388 = vsub.s32 2, %v2387
  %v2389 = vrot.slane %v2376, %v2388
  %v2390 = vlaneseq
  %v2391 = vshrl.u32 %v2390, 7
  %v2392 = vsub.s32 3, %v2391
  %v2393 = vrot.slane %v2376, %v2392
  %v2394 = vlaneseq
  %v2395 = vshrl.u32 %v2394, 7
  %v2396 = vsub.s32 4, %v2395
  %v2397 = vrot.slane %v2376, %v2396
  %v2398 = vlaneseq
  %v2399 = vshrl.u32 %v2398, 7
  %v2400 = vsub.s32 5, %v2399
  %v2401 = vrot.slane %v2376, %v2400
  %v2408 = vmul.f32 %v2370, %v2381
  %v2409 = vmul.f32 %v2371, %v2385
  %v2410 = vmul.f32 %v2372, %v2389
  %v2411 = vmul.f32 %v2373, %v2393
  %v2412 = vmul.f32 %v2374, %v2397
  %v2413 = vmul.f32 %v2375, %v2401
  %vm2414 = vcmask 1045504
  %v2415 = vsel %vm2414, %v2408, 0.0
  %v2416 = vsel %vm2414, %v2409, 0.0
  %v2417 = vadd.f32 %v2415, %v2416
  %v2418 = vsel %vm2414, %v2410, 0.0
  %v2419 = vadd.f32 %v2417, %v2418
  %v2420 = vsel %vm2414, %v2411, 0.0
  %v2421 = vadd.f32 %v2419, %v2420
  %v2422 = vsel %vm2414, %v2412, 0.0
  %v2423 = vadd.f32 %v2421, %v2422
  %vm2424 = vcmask 62464
  %v2425 = vsel %vm2424, %v2413, 0.0
  %v2426 = vadd.f32 %v2423, %v2425
  %2427 = vadd.xlane.f32.xlu0 %v2426
  %v2428 = vpop.xlane.xlu0 %2427
  %v2429 = vmul.f32 %v2408, %v2408
  %v2430 = vmul.f32 %v2409, %v2409
  %v2431 = vmul.f32 %v2410, %v2410
  %v2432 = vmul.f32 %v2411, %v2411
  %v2433 = vmul.f32 %v2412, %v2412
  %v2434 = vmul.f32 %v2413, %v2413
  %v2435 = vsel %vm2414, %v2429, 0.0
  %v2436 = vsel %vm2414, %v2430, 0.0
  %v2437 = vadd.f32 %v2435, %v2436
  %v2438 = vsel %vm2414, %v2431, 0.0
  %v2439 = vadd.f32 %v2437, %v2438
  %v2440 = vsel %vm2414, %v2432, 0.0
  %v2441 = vadd.f32 %v2439, %v2440
  %v2442 = vsel %vm2414, %v2433, 0.0
  %v2443 = vadd.f32 %v2441, %v2442
  %v2444 = vsel %vm2424, %v2434, 0.0
  %v2445 = vadd.f32 %v2443, %v2444
  %2446 = vadd.xlane.f32.xlu0 %v2445
  %v2447 = vpop.xlane.xlu0 %2446
  %v2448 = vmul.f32 %v2428, 0.001953125
  %v2449 = vmul.f32 %v2447, 0.001953125
  %v2450 = vmul.f32 %v2448, %v2448
  %v2451 = vsub.f32 %v2449, %v2450
  %v2452 = vld [vmem:[%s2] sm:$0x3f]
  %v2453 = vadd.f32 %v2451, 1e-05
  %v2454 = vrsqrt.pop %v2453
  %v2455 = vmul.f32 %v2452, %v2454
  %s2456 = scalar_lea.vmem %s2, 8
  %v2457 = vld [vmem:[%s2456] sm:$0x3f]
  %v2458 = vmul.f32 %v2448, %v2455
  %v2459 = vsub.f32 %v2457, %v2458
  %2461 = vset.pattern.permute.xlu0 0
  %2462 = vperm.xlu0 %2461, %v2455
  %v2463 = vpop.permute.xlu0 %2462
  %v2465 = vmul.f32 %v2370, %v2463
  %v2466 = vmul.f32 %v2371, %v2463
  %v2467 = vmul.f32 %v2372, %v2463
  %v2468 = vmul.f32 %v2373, %v2463
  %v2469 = vmul.f32 %v2374, %v2463
  %v2470 = vmul.f32 %v2375, %v2463
  %2472 = vset.pattern.permute.xlu0 0
  %2473 = vperm.xlu0 %2472, %v2459
  %v2474 = vpop.permute.xlu0 %2473
  %v2476 = vadd.f32 %v2465, %v2474
  %v2477 = vadd.f32 %v2466, %v2474
  %v2478 = vadd.f32 %v2467, %v2474
  %v2479 = vadd.f32 %v2468, %v2474
  %v2480 = vadd.f32 %v2469, %v2474
  %v2481 = vadd.f32 %v2470, %v2474
  %v2482 = vmax.f32 %v2476, 0.0
  %v2483 = vmax.f32 %v2477, 0.0
  %v2484 = vmax.f32 %v2478, 0.0
  %v2485 = vmax.f32 %v2479, 0.0
  %v2486 = vmax.f32 %v2480, 0.0
  %v2487 = vmax.f32 %v2481, 0.0
  %2488 = vst [vmem:[#allocation2] sm:$0x3f] %v2482
  %2489 = vst [vmem:[#allocation2 + $0x8] sm:$0x3f] %v2483
  %2490 = vst [vmem:[#allocation2 + $0x10] sm:$0x3f] %v2484
  %2491 = vst [vmem:[#allocation2 + $0x18] sm:$0x3f] %v2485
  %2492 = vst [vmem:[#allocation2 + $0x20] sm:$0x3f] %v2486
  %2493 = vst.msk [vmem:[#allocation2 + $0x28] sm:$0x3f] %vm2424, %v2487
  %v2494 = vld [vmem:[#allocation2] sm:$0x3f]
  %v2495 = vld [vmem:[#allocation2 + $0x8] sm:$0x3f]
  %v2496 = vld [vmem:[#allocation2 + $0x10] sm:$0x3f]
  %v2497 = vld [vmem:[#allocation2 + $0x18] sm:$0x3f]
  %v2498 = vld [vmem:[#allocation2 + $0x20] sm:$0x3f]
  %2504 = vrot.lane.b32.xlu0 %v2494, 127
  %v2505 = vpop.permute.xlu0 %2504
  %2506 = vrot.lane.b32.xlu0 %v2495, 127
  %v2507 = vpop.permute.xlu0 %2506
  %2508 = vrot.lane.b32.xlu0 %v2496, 127
  %v2509 = vpop.permute.xlu0 %2508
  %2510 = vrot.lane.b32.xlu0 %v2497, 127
  %v2511 = vpop.permute.xlu0 %2510
  %2512 = vrot.lane.b32.xlu0 %v2498, 127
  %v2513 = vpop.permute.xlu0 %2512
  %v2514 = vsel %vm71, %v2505, %v2507
  %v2515 = vsel %vm71, %v2507, %v2509
  %v2516 = vsel %vm71, %v2509, %v2511
  %v2517 = vsel %vm71, %v2511, %v2513
  %v2523 = vmax.f32 %v2494, %v2514
  %v2524 = vmax.f32 %v2495, %v2515
  %v2525 = vmax.f32 %v2496, %v2516
  %v2526 = vmax.f32 %v2497, %v2517
  %v2527 = vmax.f32 %v2498, %v2513
  %v2528 = vld [vmem:[#allocation2 + $0x28] sm:$0x3f]
  %2530 = vrot.lane.b32.xlu0 %v2528, 127
  %v2531 = vpop.permute.xlu0 %2530
  %v2532 = vsel %vm71, %v2513, %v2531
  %v2535 = vmax.f32 %v2498, %v2532
  %v2536 = vmax.f32 %v2528, %v2531
  %2543 = vrot.lane.b32.xlu0 %v2523, 110
  %v2544 = vpop.permute.xlu0 %2543
  %2545 = vrot.lane.b32.xlu0 %v2524, 110
  %v2546 = vpop.permute.xlu0 %2545
  %2547 = vrot.lane.b32.xlu0 %v2525, 110
  %v2548 = vpop.permute.xlu0 %2547
  %2549 = vrot.lane.b32.xlu0 %v2526, 110
  %v2550 = vpop.permute.xlu0 %2549
  %2551 = vrot.lane.b32.xlu0 %v2535, 110
  %v2552 = vpop.permute.xlu0 %2551
  %2553 = vrot.lane.b32.xlu0 %v2536, 110
  %v2554 = vpop.permute.xlu0 %2553
  %v2555 = vsel %vm821, %v2544, %v2546
  %v2556 = vsel %vm821, %v2546, %v2548
  %v2557 = vsel %vm821, %v2548, %v2550
  %v2558 = vsel %vm821, %v2550, %v2552
  %v2559 = vsel %vm821, %v2552, %v2554
  %v2565 = vmax.f32 %v2523, %v2555
  %v2566 = vmax.f32 %v2524, %v2556
  %v2567 = vmax.f32 %v2525, %v2557
  %v2568 = vmax.f32 %v2526, %v2558
  %v2569 = vmax.f32 %v2527, %v2559
  %v2570 = vld [vmem:[%s4] sm:$0xff]
  %v2571 = vld [vmem:[%s4 + $0x8] sm:$0xff]
  %v2572 = vld [vmem:[%s4 + $0x10] sm:$0xff]
  %v2573 = vld [vmem:[%s4 + $0x18] sm:$0xff]
  %v2574 = vld [vmem:[%s4 + $0x20] sm:$0xff]
  %v2575 = vld [vmem:[%s4 + $0x28] sm:$0xff]
  %v2576 = vld [vmem:[%s4 + $0x30] sm:$0xff]
  %v2577 = vld [vmem:[%s4 + $0x38] sm:$0xff]
  %v2578 = vld [vmem:[%s4 + $0x40] sm:$0xff]
  %v2579 = vld [vmem:[%s4 + $0x48] sm:$0xff]
  %v2580 = vld [vmem:[%s4 + $0x50] sm:$0xff]
  %v2581 = vld [vmem:[%s4 + $0x58] sm:$0xff]
  %v2582 = vld [vmem:[%s4 + $0x60] sm:$0xff]
  %v2583 = vld [vmem:[%s4 + $0x68] sm:$0xff]
  %v2584 = vld [vmem:[%s4 + $0x70] sm:$0xff]
  %v2585 = vld [vmem:[%s4 + $0x78] sm:$0xff]
  %v2586 = vld [vmem:[%s4 + $0x80] sm:$0xff]
  %v2587 = vld [vmem:[%s4 + $0x88] sm:$0xff]
  %v2588 = vld [vmem:[%s4 + $0x90] sm:$0xff]
  %v2589 = vld [vmem:[%s4 + $0x98] sm:$0xff]
  %v2590 = vld [vmem:[%s4 + $0xa0] sm:$0xff]
  %v2591 = vld [vmem:[%s4 + $0xa8] sm:$0xff]
  %v2592 = vld [vmem:[%s4 + $0xb0] sm:$0xff]
  %v2593 = vld [vmem:[%s4 + $0xb8] sm:$0xff]
  %v2594 = vld [vmem:[%s4 + $0xc0] sm:$0xff]
  %v2595 = vld [vmem:[%s4 + $0xc8] sm:$0xff]
  %v2596 = vld [vmem:[%s4 + $0xd0] sm:$0xff]
  %v2597 = vld [vmem:[%s4 + $0xd8] sm:$0xff]
  %v2598 = vld [vmem:[%s4 + $0xe0] sm:$0xff]
  %v2599 = vld [vmem:[%s4 + $0xe8] sm:$0xff]
  %v2600 = vld [vmem:[%s4 + $0xf0] sm:$0xff]
  %v2601 = vld [vmem:[%s4 + $0xf8] sm:$0xff]
  %v2602 = vld [vmem:[%s4 + $0x100] sm:$0xff]
  %v2603 = vld [vmem:[%s4 + $0x108] sm:$0xff]
  %v2604 = vld [vmem:[%s4 + $0x110] sm:$0xff]
  %v2605 = vld [vmem:[%s4 + $0x118] sm:$0xff]
  %v2606 = vld [vmem:[%s4 + $0x120] sm:$0xff]
  %v2607 = vld [vmem:[%s4 + $0x128] sm:$0xff]
  %v2608 = vld [vmem:[%s4 + $0x130] sm:$0xff]
  %v2609 = vld [vmem:[%s4 + $0x138] sm:$0xff]
  %v2610 = vld [vmem:[%s4 + $0x140] sm:$0xff]
  %v2611 = vld [vmem:[%s4 + $0x148] sm:$0xff]
  %v2612 = vld [vmem:[%s4 + $0x150] sm:$0xff]
  %v2613 = vld [vmem:[%s4 + $0x158] sm:$0xff]
  %v2614 = vld [vmem:[%s4 + $0x160] sm:$0xff]
  %v2615 = vld [vmem:[%s4 + $0x168] sm:$0xff]
  %v2616 = vld [vmem:[%s4 + $0x170] sm:$0xff]
  %v2617 = vld [vmem:[%s4 + $0x178] sm:$0xff]
  %v2618 = vld [vmem:[%s4 + $0x180] sm:$0xff]
  %v2619 = vld [vmem:[%s4 + $0x188] sm:$0xff]
  %v2620 = vld [vmem:[%s4 + $0x190] sm:$0xff]
  %v2621 = vld [vmem:[%s4 + $0x198] sm:$0xff]
  %v2622 = vld [vmem:[%s4 + $0x1a0] sm:$0xff]
  %v2623 = vld [vmem:[%s4 + $0x1a8] sm:$0xff]
  %v2624 = vld [vmem:[%s4 + $0x1b0] sm:$0xff]
  %v2625 = vld [vmem:[%s4 + $0x1b8] sm:$0xff]
  %v2626 = vld [vmem:[%s4 + $0x1c0] sm:$0xff]
  %v2627 = vld [vmem:[%s4 + $0x1c8] sm:$0xff]
  %v2628 = vld [vmem:[%s4 + $0x1d0] sm:$0xff]
  %v2629 = vld [vmem:[%s4 + $0x1d8] sm:$0xff]
  %v2630 = vld [vmem:[%s4 + $0x1e0] sm:$0xff]
  %v2631 = vld [vmem:[%s4 + $0x1e8] sm:$0xff]
  %v2632 = vld [vmem:[%s4 + $0x1f0] sm:$0xff]
  %v2633 = vld [vmem:[%s4 + $0x1f8] sm:$0xff]
  %v2634 = vld [vmem:[%s4 + $0x200] sm:$0xff]
  %v2635 = vld [vmem:[%s4 + $0x208] sm:$0xff]
  %v2636 = vld [vmem:[%s4 + $0x210] sm:$0xff]
  %v2637 = vld [vmem:[%s4 + $0x218] sm:$0xff]
  %v2638 = vld [vmem:[%s4 + $0x220] sm:$0xff]
  %v2639 = vld [vmem:[%s4 + $0x228] sm:$0xff]
  %v2640 = vld [vmem:[%s4 + $0x230] sm:$0xff]
  %v2641 = vld [vmem:[%s4 + $0x238] sm:$0xff]
  %v2642 = vld [vmem:[%s4 + $0x240] sm:$0xff]
  %v2643 = vld [vmem:[%s4 + $0x248] sm:$0xff]
  %v2644 = vld [vmem:[%s4 + $0x250] sm:$0xff]
  %v2645 = vld [vmem:[%s4 + $0x258] sm:$0xff]
  %v2646 = vld [vmem:[%s4 + $0x260] sm:$0xff]
  %v2647 = vld [vmem:[%s4 + $0x268] sm:$0xff]
  %v2648 = vld [vmem:[%s4 + $0x270] sm:$0xff]
  %v2649 = vld [vmem:[%s4 + $0x278] sm:$0xff]
  %v2650 = vld [vmem:[%s4 + $0x280] sm:$0xff]
  %v2651 = vld [vmem:[%s4 + $0x288] sm:$0xff]
  %v2652 = vld [vmem:[%s4 + $0x290] sm:$0xff]
  %v2653 = vld [vmem:[%s4 + $0x298] sm:$0xff]
  %v2654 = vld [vmem:[%s4 + $0x2a0] sm:$0xff]
  %v2655 = vld [vmem:[%s4 + $0x2a8] sm:$0xff]
  %v2656 = vld [vmem:[%s4 + $0x2b0] sm:$0xff]
  %v2657 = vld [vmem:[%s4 + $0x2b8] sm:$0xff]
  %v2658 = vld [vmem:[%s4 + $0x2c0] sm:$0xff]
  %v2659 = vld [vmem:[%s4 + $0x2c8] sm:$0xff]
  %v2660 = vld [vmem:[%s4 + $0x2d0] sm:$0xff]
  %v2661 = vld [vmem:[%s4 + $0x2d8] sm:$0xff]
  %v2662 = vld [vmem:[%s4 + $0x2e0] sm:$0xff]
  %v2663 = vld [vmem:[%s4 + $0x2e8] sm:$0xff]
  %v2664 = vld [vmem:[%s4 + $0x2f0] sm:$0xff]
  %v2665 = vld [vmem:[%s4 + $0x2f8] sm:$0xff]
  %v2666 = vld [vmem:[%s4 + $0x300] sm:$0xff]
  %v2667 = vld [vmem:[%s4 + $0x308] sm:$0xff]
  %v2668 = vld [vmem:[%s4 + $0x310] sm:$0xff]
  %v2669 = vld [vmem:[%s4 + $0x318] sm:$0xff]
  %v2670 = vld [vmem:[%s4 + $0x320] sm:$0xff]
  %v2671 = vld [vmem:[%s4 + $0x328] sm:$0xff]
  %v2672 = vld [vmem:[%s4 + $0x330] sm:$0xff]
  %v2673 = vld [vmem:[%s4 + $0x338] sm:$0xff]
  %v2674 = vld [vmem:[%s4 + $0x340] sm:$0xff]
  %v2675 = vld [vmem:[%s4 + $0x348] sm:$0xff]
  %v2676 = vld [vmem:[%s4 + $0x350] sm:$0xff]
  %v2677 = vld [vmem:[%s4 + $0x358] sm:$0xff]
  %v2678 = vld [vmem:[%s4 + $0x360] sm:$0xff]
  %v2679 = vld [vmem:[%s4 + $0x368] sm:$0xff]
  %v2680 = vld [vmem:[%s4 + $0x370] sm:$0xff]
  %v2681 = vld [vmem:[%s4 + $0x378] sm:$0xff]
  %v2682 = vld [vmem:[%s4 + $0x380] sm:$0xff]
  %v2683 = vld [vmem:[%s4 + $0x388] sm:$0xff]
  %v2684 = vld [vmem:[%s4 + $0x390] sm:$0xff]
  %v2685 = vld [vmem:[%s4 + $0x398] sm:$0xff]
  %v2686 = vld [vmem:[%s4 + $0x3a0] sm:$0xff]
  %v2687 = vld [vmem:[%s4 + $0x3a8] sm:$0xff]
  %v2688 = vld [vmem:[%s4 + $0x3b0] sm:$0xff]
  %v2689 = vld [vmem:[%s4 + $0x3b8] sm:$0xff]
  %v2690 = vld [vmem:[%s4 + $0x3c0] sm:$0xff]
  %v2691 = vld [vmem:[%s4 + $0x3c8] sm:$0xff]
  %v2692 = vld [vmem:[%s4 + $0x3d0] sm:$0xff]
  %v2693 = vld [vmem:[%s4 + $0x3d8] sm:$0xff]
  %v2694 = vld [vmem:[%s4 + $0x3e0] sm:$0xff]
  %v2695 = vld [vmem:[%s4 + $0x3e8] sm:$0xff]
  %v2696 = vld [vmem:[%s4 + $0x3f0] sm:$0xff]
  %v2697 = vld [vmem:[%s4 + $0x3f8] sm:$0xff]
  %v2698 = vld [vmem:[%s4 + $0x400] sm:$0xff]
  %v2699 = vld [vmem:[%s4 + $0x408] sm:$0xff]
  %v2700 = vld [vmem:[%s4 + $0x410] sm:$0xff]
  %v2701 = vld [vmem:[%s4 + $0x418] sm:$0xff]
  %v2702 = vld [vmem:[%s4 + $0x420] sm:$0xff]
  %v2703 = vld [vmem:[%s4 + $0x428] sm:$0xff]
  %v2704 = vld [vmem:[%s4 + $0x430] sm:$0xff]
  %v2705 = vld [vmem:[%s4 + $0x438] sm:$0xff]
  %v2706 = vld [vmem:[%s4 + $0x440] sm:$0xff]
  %v2707 = vld [vmem:[%s4 + $0x448] sm:$0xff]
  %v2708 = vld [vmem:[%s4 + $0x450] sm:$0xff]
  %v2709 = vld [vmem:[%s4 + $0x458] sm:$0xff]
  %v2710 = vld [vmem:[%s4 + $0x460] sm:$0xff]
  %v2711 = vld [vmem:[%s4 + $0x468] sm:$0xff]
  %v2712 = vld [vmem:[%s4 + $0x470] sm:$0xff]
  %v2713 = vld [vmem:[%s4 + $0x478] sm:$0xff]
  %v2714 = vld [vmem:[%s4 + $0x480] sm:$0xff]
  %v2715 = vld [vmem:[%s4 + $0x488] sm:$0xff]
  %v2716 = vld [vmem:[%s4 + $0x490] sm:$0xff]
  %v2717 = vld [vmem:[%s4 + $0x498] sm:$0xff]
  %v2718 = vld [vmem:[%s4 + $0x4a0] sm:$0xff]
  %v2719 = vld [vmem:[%s4 + $0x4a8] sm:$0xff]
  %v2720 = vld [vmem:[%s4 + $0x4b0] sm:$0xff]
  %v2721 = vld [vmem:[%s4 + $0x4b8] sm:$0xff]
  %v2722 = vld [vmem:[%s4 + $0x4c0] sm:$0xff]
  %v2723 = vld [vmem:[%s4 + $0x4c8] sm:$0xff]
  %v2724 = vld [vmem:[%s4 + $0x4d0] sm:$0xff]
  %v2725 = vld [vmem:[%s4 + $0x4d8] sm:$0xff]
  %v2726 = vld [vmem:[%s4 + $0x4e0] sm:$0x1f]
  %v2727 = vld [vmem:[%s4 + $0x4e8] sm:$0x1f]
  %vm2728 = vcmask 957440
  %v2730 = vsel %vm2728, %v2569, 0
  %vm2732 = vcmask 1044480
  %v2734 = vsel %vm2732, %v2726, 0
  %v2737 = vsel %vm2732, %v2727, 0
  %2739 = vmatprep.subr.mxu0 %v2571
  %2740 = vmatpush1.msra.mxu0 %v2570
  %2741 = vmatprep.subr.mxu0 %v2573
  %2742 = vmatpush1.msra.mxu0 %v2572
  %2743 = vmatprep.subr.mxu0 %v2575
  %2744 = vmatpush1.msra.mxu0 %v2574
  %2745 = vmatprep.subr.mxu0 %v2577
  %2746 = vmatpush1.msra.mxu0 %v2576
  %2747 = vmatprep.subr.mxu0 %v2579
  %2748 = vmatpush1.msra.mxu0 %v2578
  %2749 = vmatprep.subr.mxu0 %v2581
  %2750 = vmatpush1.msra.mxu0 %v2580
  %2751 = vmatprep.subr.mxu0 %v2583
  %2752 = vmatpush1.msra.mxu0 %v2582
  %2753 = vmatprep.subr.mxu0 %v2585
  %2754 = vmatpush1.msra.mxu0 %v2584
  %2755 = vmatprep.subr.mxu0 %v2587
  %2756 = vmatpush1.msra.mxu0 %v2586
  %2757 = vmatprep.subr.mxu0 %v2589
  %2758 = vmatpush1.msra.mxu0 %v2588
  %2759 = vmatprep.subr.mxu0 %v2591
  %2760 = vmatpush1.msra.mxu0 %v2590
  %2761 = vmatprep.subr.mxu0 %v2593
  %2762 = vmatpush1.msra.mxu0 %v2592
  %2763 = vmatprep.subr.mxu0 %v2595
  %2764 = vmatpush1.msra.mxu0 %v2594
  %2765 = vmatprep.subr.mxu0 %v2597
  %2766 = vmatpush1.msra.mxu0 %v2596
  %2767 = vmatprep.subr.mxu0 %v2599
  %2768 = vmatpush1.msra.mxu0 %v2598
  %2769 = vmatprep.subr.mxu0 %v2601
  %2770 = vmatpush1.msra.mxu0 %v2600
  %2771 = vmatprep.subr.mxu0 %v2603
  %2772 = vmatpush1.msra.mxu0 %v2602
  %2773 = vmatprep.subr.mxu0 %v2605
  %2774 = vmatpush1.msra.mxu0 %v2604
  %2775 = vmatprep.subr.mxu0 %v2607
  %2776 = vmatpush1.msra.mxu0 %v2606
  %2777 = vmatprep.subr.mxu0 %v2609
  %2778 = vmatpush1.msra.mxu0 %v2608
  %2779 = vmatprep.subr.mxu0 %v2611
  %2780 = vmatpush1.msra.mxu0 %v2610
  %2781 = vmatprep.subr.mxu0 %v2613
  %2782 = vmatpush1.msra.mxu0 %v2612
  %2783 = vmatprep.subr.mxu0 %v2615
  %2784 = vmatpush1.msra.mxu0 %v2614
  %2785 = vmatprep.subr.mxu0 %v2617
  %2786 = vmatpush1.msra.mxu0 %v2616
  %2787 = vmatprep.subr.mxu0 %v2619
  %2788 = vmatpush1.msra.mxu0 %v2618
  %2789 = vmatprep.subr.mxu0 %v2621
  %2790 = vmatpush1.msra.mxu0 %v2620
  %2791 = vmatprep.subr.mxu0 %v2623
  %2792 = vmatpush1.msra.mxu0 %v2622
  %2793 = vmatprep.subr.mxu0 %v2625
  %2794 = vmatpush1.msra.mxu0 %v2624
  %2795 = vmatprep.subr.mxu0 %v2627
  %2796 = vmatpush1.msra.mxu0 %v2626
  %2797 = vmatprep.subr.mxu0 %v2629
  %2798 = vmatpush1.msra.mxu0 %v2628
  %2799 = vmatprep.subr.mxu0 %v2631
  %2800 = vmatpush1.msra.mxu0 %v2630
  %2801 = vmatprep.subr.mxu0 %v2633
  %2802 = vmatpush1.msra.mxu0 %v2632
  %2803 = vmatprep.mubr.f32.mxu0 %v2566
  %2804 = vmatmul.mubr.f32.gmra.mrb[0].mxu0 %v2565
  %v2805 = vpop.f32.mrb[0].mxu0
  %v2806 = vadd.f32 0.0, %v2805
  %v2807 = vpop.f32.mrb[0].mxu0
  %v2808 = vadd.f32 0.0, %v2807
  %2809 = vdwg.mxu0
  %2810 = vmatprep.subr.mxu0 %v2635
  %2811 = vmatpush1.msra.mxu0 %v2634
  %2812 = vmatprep.subr.mxu0 %v2637
  %2813 = vmatpush1.msra.mxu0 %v2636
  %2814 = vmatprep.subr.mxu0 %v2639
  %2815 = vmatpush1.msra.mxu0 %v2638
  %2816 = vmatprep.subr.mxu0 %v2641
  %2817 = vmatpush1.msra.mxu0 %v2640
  %2818 = vmatprep.subr.mxu0 %v2643
  %2819 = vmatpush1.msra.mxu0 %v2642
  %2820 = vmatprep.subr.mxu0 %v2645
  %2821 = vmatpush1.msra.mxu0 %v2644
  %2822 = vmatprep.subr.mxu0 %v2647
  %2823 = vmatpush1.msra.mxu0 %v2646
  %2824 = vmatprep.subr.mxu0 %v2649
  %2825 = vmatpush1.msra.mxu0 %v2648
  %2826 = vmatprep.subr.mxu0 %v2651
  %2827 = vmatpush1.msra.mxu0 %v2650
  %2828 = vmatprep.subr.mxu0 %v2653
  %2829 = vmatpush1.msra.mxu0 %v2652
  %2830 = vmatprep.subr.mxu0 %v2655
  %2831 = vmatpush1.msra.mxu0 %v2654
  %2832 = vmatprep.subr.mxu0 %v2657
  %2833 = vmatpush1.msra.mxu0 %v2656
  %2834 = vmatprep.subr.mxu0 %v2659
  %2835 = vmatpush1.msra.mxu0 %v2658
  %2836 = vmatprep.subr.mxu0 %v2661
  %2837 = vmatpush1.msra.mxu0 %v2660
  %2838 = vmatprep.subr.mxu0 %v2663
  %2839 = vmatpush1.msra.mxu0 %v2662
  %2840 = vmatprep.subr.mxu0 %v2665
  %2841 = vmatpush1.msra.mxu0 %v2664
  %2842 = vmatprep.subr.mxu0 %v2667
  %2843 = vmatpush1.msra.mxu0 %v2666
  %2844 = vmatprep.subr.mxu0 %v2669
  %2845 = vmatpush1.msra.mxu0 %v2668
  %2846 = vmatprep.subr.mxu0 %v2671
  %2847 = vmatpush1.msra.mxu0 %v2670
  %2848 = vmatprep.subr.mxu0 %v2673
  %2849 = vmatpush1.msra.mxu0 %v2672
  %2850 = vmatprep.subr.mxu0 %v2675
  %2851 = vmatpush1.msra.mxu0 %v2674
  %2852 = vmatprep.subr.mxu0 %v2677
  %2853 = vmatpush1.msra.mxu0 %v2676
  %2854 = vmatprep.subr.mxu0 %v2679
  %2855 = vmatpush1.msra.mxu0 %v2678
  %2856 = vmatprep.subr.mxu0 %v2681
  %2857 = vmatpush1.msra.mxu0 %v2680
  %2858 = vmatprep.subr.mxu0 %v2683
  %2859 = vmatpush1.msra.mxu0 %v2682
  %2860 = vmatprep.subr.mxu0 %v2685
  %2861 = vmatpush1.msra.mxu0 %v2684
  %2862 = vmatprep.subr.mxu0 %v2687
  %2863 = vmatpush1.msra.mxu0 %v2686
  %2864 = vmatprep.subr.mxu0 %v2689
  %2865 = vmatpush1.msra.mxu0 %v2688
  %2866 = vmatprep.subr.mxu0 %v2691
  %2867 = vmatpush1.msra.mxu0 %v2690
  %2868 = vmatprep.subr.mxu0 %v2693
  %2869 = vmatpush1.msra.mxu0 %v2692
  %2870 = vmatprep.subr.mxu0 %v2695
  %2871 = vmatpush1.msra.mxu0 %v2694
  %2872 = vmatprep.subr.mxu0 %v2697
  %2873 = vmatpush1.msra.mxu0 %v2696
  %2874 = vmatprep.mubr.f32.mxu0 %v2568
  %2875 = vmatmul.mubr.f32.gmra.mrb[0].mxu0 %v2567
  %v2876 = vpop.f32.mrb[0].mxu0
  %v2877 = vadd.f32 %v2806, %v2876
  %v2878 = vpop.f32.mrb[0].mxu0
  %v2879 = vadd.f32 %v2808, %v2878
  %2880 = vdwg.mxu0
  %2881 = vmatprep.subr.mxu0 %v2699
  %2882 = vmatpush1.msra.mxu0 %v2698
  %2883 = vmatprep.subr.mxu0 %v2701
  %2884 = vmatpush1.msra.mxu0 %v2700
  %2885 = vmatprep.subr.mxu0 %v2703
  %2886 = vmatpush1.msra.mxu0 %v2702
  %2887 = vmatprep.subr.mxu0 %v2705
  %2888 = vmatpush1.msra.mxu0 %v2704
  %2889 = vmatprep.subr.mxu0 %v2707
  %2890 = vmatpush1.msra.mxu0 %v2706
  %2891 = vmatprep.subr.mxu0 %v2709
  %2892 = vmatpush1.msra.mxu0 %v2708
  %2893 = vmatprep.subr.mxu0 %v2711
  %2894 = vmatpush1.msra.mxu0 %v2710
  %2895 = vmatprep.subr.mxu0 %v2713
  %2896 = vmatpush1.msra.mxu0 %v2712
  %2897 = vmatprep.subr.mxu0 %v2715
  %2898 = vmatpush1.msra.mxu0 %v2714
  %2899 = vmatprep.subr.mxu0 %v2717
  %2900 = vmatpush1.msra.mxu0 %v2716
  %2901 = vmatprep.subr.mxu0 %v2719
  %2902 = vmatpush1.msra.mxu0 %v2718
  %2903 = vmatprep.subr.mxu0 %v2721
  %2904 = vmatpush1.msra.mxu0 %v2720
  %2905 = vmatprep.subr.mxu0 %v2723
  %2906 = vmatpush1.msra.mxu0 %v2722
  %2907 = vmatprep.subr.mxu0 %v2725
  %2908 = vmatpush1.msra.mxu0 %v2724
  %2909 = vmatprep.subr.mxu0 %v2737
  %2910 = vmatpush1.msra.mxu0 %v2734
  %2911 = vmatprep.subr.mxu0 0.0
  %2912 = vmatpush1.msra.mxu0 0.0
  %2913 = vmatprep.subr.mxu0 0.0
  %2914 = vmatpush1.msra.mxu0 0.0
  %2915 = vmatprep.subr.mxu0 0.0
  %2916 = vmatpush1.msra.mxu0 0.0
  %2917 = vmatprep.subr.mxu0 0.0
  %2918 = vmatpush1.msra.mxu0 0.0
  %2919 = vmatprep.subr.mxu0 0.0
  %2920 = vmatpush1.msra.mxu0 0.0
  %2921 = vmatprep.subr.mxu0 0.0
  %2922 = vmatpush1.msra.mxu0 0.0
  %2923 = vmatprep.subr.mxu0 0.0
  %2924 = vmatpush1.msra.mxu0 0.0
  %2925 = vmatprep.subr.mxu0 0.0
  %2926 = vmatpush1.msra.mxu0 0.0
  %2927 = vmatprep.subr.mxu0 0.0
  %2928 = vmatpush1.msra.mxu0 0.0
  %2929 = vmatprep.subr.mxu0 0.0
  %2930 = vmatpush1.msra.mxu0 0.0
  %2931 = vmatprep.subr.mxu0 0.0
  %2932 = vmatpush1.msra.mxu0 0.0
  %2933 = vmatprep.subr.mxu0 0.0
  %2934 = vmatpush1.msra.mxu0 0.0
  %2935 = vmatprep.subr.mxu0 0.0
  %2936 = vmatpush1.msra.mxu0 0.0
  %2937 = vmatprep.subr.mxu0 0.0
  %2938 = vmatpush1.msra.mxu0 0.0
  %2939 = vmatprep.subr.mxu0 0.0
  %2940 = vmatpush1.msra.mxu0 0.0
  %2941 = vmatprep.subr.mxu0 0.0
  %2942 = vmatpush1.msra.mxu0 0.0
  %2943 = vmatprep.subr.mxu0 0.0
  %2944 = vmatpush1.msra.mxu0 0.0
  %2945 = vmatprep.mubr.f32.mxu0 0.0
  %2946 = vmatmul.mubr.f32.gmra.mrb[0].mxu0 %v2730
  %v2947 = vpop.f32.mrb[0].mxu0
  %v2948 = vadd.f32 %v2877, %v2947
  %v2949 = vpop.f32.mrb[0].mxu0
  %v2950 = vadd.f32 %v2879, %v2949
  %2951 = vdwg.mxu0
  %2952 = vst [vmem:[#allocation4] sm:$0x3f] %v2948
  %vm2953 = vcmask 766976
  %2954 = vst.msk [vmem:[#allocation4 + $0x8] sm:$0x3f] %vm2953, %v2950
  %v2955 = vld [vmem:[#allocation4] sm:$0x3f]
  %v2956 = vld [vmem:[#allocation4 + $0x8] sm:$0x3f]
  %v2957 = vld [vmem:[%s5] sm:$0xff]
  %v2958 = vld [vmem:[%s5 + $0x8] sm:$0xf]
  %s2959 = scalar_lea.vmem %s5, 16
  %v2960 = vld [vmem:[%s2959] sm:$0xff]
  %v2961 = vld [vmem:[%s2959 + $0x8] sm:$0xf]
  %2964 = vrot.lane.b32.xlu0 %v2955, 127
  %v2965 = vpop.permute.xlu0 %2964
  %2966 = vrot.lane.b32.xlu0 %v2956, 127
  %v2967 = vpop.permute.xlu0 %2966
  %v2968 = vsel %vm71, %v2965, %v2967
  %vm2969 = vcmask 48128
  %v2971 = vsel %vm2969, %v2960, 0
  %v2974 = vsel %vm2969, %v2961, 0
  %v2976 = vsel %vm2414, %v2968, 0
  %v2978 = vsel %vm2414, %v2967, 0
  %2980 = vmatprep.subr.mxu0 %v2978
  %2981 = vmatpush1.msra.mxu0 %v2976
  %2982 = vmatprep.subr.mxu0 0.0
  %2983 = vmatpush1.msra.mxu0 0.0
  %2984 = vmatprep.subr.mxu0 0.0
  %2985 = vmatpush1.msra.mxu0 0.0
  %2986 = vmatprep.subr.mxu0 0.0
  %2987 = vmatpush1.msra.mxu0 0.0
  %2988 = vmatprep.subr.mxu0 0.0
  %2989 = vmatpush1.msra.mxu0 0.0
  %2990 = vmatprep.subr.mxu0 0.0
  %2991 = vmatpush1.msra.mxu0 0.0
  %2992 = vmatprep.subr.mxu0 0.0
  %2993 = vmatpush1.msra.mxu0 0.0
  %2994 = vmatprep.subr.mxu0 0.0
  %2995 = vmatpush1.msra.mxu0 0.0
  %2996 = vmatprep.subr.mxu0 0.0
  %2997 = vmatpush1.msra.mxu0 0.0
  %2998 = vmatprep.subr.mxu0 0.0
  %2999 = vmatpush1.msra.mxu0 0.0
  %3000 = vmatprep.subr.mxu0 0.0
  %3001 = vmatpush1.msra.mxu0 0.0
  %3002 = vmatprep.subr.mxu0 0.0
  %3003 = vmatpush1.msra.mxu0 0.0
  %3004 = vmatprep.subr.mxu0 0.0
  %3005 = vmatpush1.msra.mxu0 0.0
  %3006 = vmatprep.subr.mxu0 0.0
  %3007 = vmatpush1.msra.mxu0 0.0
  %3008 = vmatprep.subr.mxu0 0.0
  %3009 = vmatpush1.msra.mxu0 0.0
  %3010 = vmatprep.subr.mxu0 0.0
  %3011 = vmatpush1.msra.mxu0 0.0
  %3012 = vmatprep.subr.mxu0 0.0
  %3013 = vmatpush1.msra.mxu0 0.0
  %3014 = vmatprep.subr.mxu0 0.0
  %3015 = vmatpush1.msra.mxu0 0.0
  %3016 = vmatprep.subr.mxu0 0.0
  %3017 = vmatpush1.msra.mxu0 0.0
  %3018 = vmatprep.subr.mxu0 0.0
  %3019 = vmatpush1.msra.mxu0 0.0
  %3020 = vmatprep.subr.mxu0 0.0
  %3021 = vmatpush1.msra.mxu0 0.0
  %3022 = vmatprep.subr.mxu0 0.0
  %3023 = vmatpush1.msra.mxu0 0.0
  %3024 = vmatprep.subr.mxu0 0.0
  %3025 = vmatpush1.msra.mxu0 0.0
  %3026 = vmatprep.subr.mxu0 0.0
  %3027 = vmatpush1.msra.mxu0 0.0
  %3028 = vmatprep.subr.mxu0 0.0
  %3029 = vmatpush1.msra.mxu0 0.0
  %3030 = vmatprep.subr.mxu0 0.0
  %3031 = vmatpush1.msra.mxu0 0.0
  %3032 = vmatprep.subr.mxu0 0.0
  %3033 = vmatpush1.msra.mxu0 0.0
  %3034 = vmatprep.subr.mxu0 0.0
  %3035 = vmatpush1.msra.mxu0 0.0
  %3036 = vmatprep.subr.mxu0 0.0
  %3037 = vmatpush1.msra.mxu0 0.0
  %3038 = vmatprep.subr.mxu0 0.0
  %3039 = vmatpush1.msra.mxu0 0.0
  %3040 = vmatprep.subr.mxu0 0.0
  %3041 = vmatpush1.msra.mxu0 0.0
  %3042 = vmatprep.subr.mxu0 0.0
  %3043 = vmatpush1.msra.mxu0 0.0
  %3044 = vmatprep.mubr.f32.mxu0 0.0
  %3045 = vmatmul.mubr.f32.gmra.mrb[0].mxu0 %v2971
  %v3046 = vpop.f32.mrb[0].mxu0
  %v3047 = vadd.f32 0.0, %v3046
  %v3048 = vpop.f32.mrb[0].mxu0
  %v3049 = vadd.f32 0.0, %v3048
  %3050 = vmatprep.mubr.f32.mxu0 0.0
  %3051 = vmatmul.mubr.f32.gmra.mrb[0].mxu0 %v2974
  %v3052 = vpop.f32.mrb[0].mxu0
  %v3053 = vadd.f32 0.0, %v3052
  %v3054 = vpop.f32.mrb[0].mxu0
  %v3055 = vadd.f32 0.0, %v3054
  %3056 = vdwg.mxu0
  %v3058 = vsel %vm2969, %v2957, 0
  %v3061 = vsel %vm2969, %v2958, 0
  %v3063 = vsel %vm2414, %v2955, 0
  %v3065 = vsel %vm2414, %v2956, 0
  %3067 = vmatprep.subr.mxu0 %v3065
  %3068 = vmatpush1.msra.mxu0 %v3063
  %3069 = vmatprep.subr.mxu0 0.0
  %3070 = vmatpush1.msra.mxu0 0.0
  %3071 = vmatprep.subr.mxu0 0.0
  %3072 = vmatpush1.msra.mxu0 0.0
  %3073 = vmatprep.subr.mxu0 0.0
  %3074 = vmatpush1.msra.mxu0 0.0
  %3075 = vmatprep.subr.mxu0 0.0
  %3076 = vmatpush1.msra.mxu0 0.0
  %3077 = vmatprep.subr.mxu0 0.0
  %3078 = vmatpush1.msra.mxu0 0.0
  %3079 = vmatprep.subr.mxu0 0.0
  %3080 = vmatpush1.msra.mxu0 0.0
  %3081 = vmatprep.subr.mxu0 0.0
  %3082 = vmatpush1.msra.mxu0 0.0
  %3083 = vmatprep.subr.mxu0 0.0
  %3084 = vmatpush1.msra.mxu0 0.0
  %3085 = vmatprep.subr.mxu0 0.0
  %3086 = vmatpush1.msra.mxu0 0.0
  %3087 = vmatprep.subr.mxu0 0.0
  %3088 = vmatpush1.msra.mxu0 0.0
  %3089 = vmatprep.subr.mxu0 0.0
  %3090 = vmatpush1.msra.mxu0 0.0
  %3091 = vmatprep.subr.mxu0 0.0
  %3092 = vmatpush1.msra.mxu0 0.0
  %3093 = vmatprep.subr.mxu0 0.0
  %3094 = vmatpush1.msra.mxu0 0.0
  %3095 = vmatprep.subr.mxu0 0.0
  %3096 = vmatpush1.msra.mxu0 0.0
  %3097 = vmatprep.subr.mxu0 0.0
  %3098 = vmatpush1.msra.mxu0 0.0
  %3099 = vmatprep.subr.mxu0 0.0
  %3100 = vmatpush1.msra.mxu0 0.0
  %3101 = vmatprep.subr.mxu0 0.0
  %3102 = vmatpush1.msra.mxu0 0.0
  %3103 = vmatprep.subr.mxu0 0.0
  %3104 = vmatpush1.msra.mxu0 0.0
  %3105 = vmatprep.subr.mxu0 0.0
  %3106 = vmatpush1.msra.mxu0 0.0
  %3107 = vmatprep.subr.mxu0 0.0
  %3108 = vmatpush1.msra.mxu0 0.0
  %3109 = vmatprep.subr.mxu0 0.0
  %3110 = vmatpush1.msra.mxu0 0.0
  %3111 = vmatprep.subr.mxu0 0.0
  %3112 = vmatpush1.msra.mxu0 0.0
  %3113 = vmatprep.subr.mxu0 0.0
  %3114 = vmatpush1.msra.mxu0 0.0
  %3115 = vmatprep.subr.mxu0 0.0
  %3116 = vmatpush1.msra.mxu0 0.0
  %3117 = vmatprep.subr.mxu0 0.0
  %3118 = vmatpush1.msra.mxu0 0.0
  %3119 = vmatprep.subr.mxu0 0.0
  %3120 = vmatpush1.msra.mxu0 0.0
  %3121 = vmatprep.subr.mxu0 0.0
  %3122 = vmatpush1.msra.mxu0 0.0
  %3123 = vmatprep.subr.mxu0 0.0
  %3124 = vmatpush1.msra.mxu0 0.0
  %3125 = vmatprep.subr.mxu0 0.0
  %3126 = vmatpush1.msra.mxu0 0.0
  %3127 = vmatprep.subr.mxu0 0.0
  %3128 = vmatpush1.msra.mxu0 0.0
  %3129 = vmatprep.subr.mxu0 0.0
  %3130 = vmatpush1.msra.mxu0 0.0
  %3131 = vmatprep.mubr.f32.mxu0 0.0
  %3132 = vmatmul.mubr.f32.gmra.mrb[0].mxu0 %v3058
  %v3133 = vpop.f32.mrb[0].mxu0
  %v3134 = vadd.f32 %v3047, %v3133
  %v3135 = vpop.f32.mrb[0].mxu0
  %v3136 = vadd.f32 %v3049, %v3135
  %3137 = vmatprep.mubr.f32.mxu0 0.0
  %3138 = vmatmul.mubr.f32.gmra.mrb[0].mxu0 %v3061
  %v3139 = vpop.f32.mrb[0].mxu0
  %v3140 = vadd.f32 %v3053, %v3139
  %v3141 = vpop.f32.mrb[0].mxu0
  %v3142 = vadd.f32 %v3055, %v3141
  %3143 = vdwg.mxu0
  %s3144 = scalar_lea.vmem %s5, 32
  %v3145 = vld [vmem:[%s3144] sm:$0xff]
  %v3146 = vld [vmem:[%s3144 + $0x8] sm:$0xf]
  %3147 = vrot.lane.b32.xlu0 %v2955, 126
  %v3148 = vpop.permute.xlu0 %3147
  %3149 = vrot.lane.b32.xlu0 %v2956, 126
  %v3150 = vpop.permute.xlu0 %3149
  %v3151 = vsel %vm558, %v3148, %v3150
  %v3153 = vsel %vm2969, %v3145, 0
  %v3156 = vsel %vm2969, %v3146, 0
  %v3158 = vsel %vm2414, %v3151, 0
  %v3160 = vsel %vm2414, %v3150, 0
  %3162 = vmatprep.subr.mxu0 %v3160
  %3163 = vmatpush1.msra.mxu0 %v3158
  %3164 = vmatprep.subr.mxu0 0.0
  %3165 = vmatpush1.msra.mxu0 0.0
  %3166 = vmatprep.subr.mxu0 0.0
  %3167 = vmatpush1.msra.mxu0 0.0
  %3168 = vmatprep.subr.mxu0 0.0
  %3169 = vmatpush1.msra.mxu0 0.0
  %3170 = vmatprep.subr.mxu0 0.0
  %3171 = vmatpush1.msra.mxu0 0.0
  %3172 = vmatprep.subr.mxu0 0.0
  %3173 = vmatpush1.msra.mxu0 0.0
  %3174 = vmatprep.subr.mxu0 0.0
  %3175 = vmatpush1.msra.mxu0 0.0
  %3176 = vmatprep.subr.mxu0 0.0
  %3177 = vmatpush1.msra.mxu0 0.0
  %3178 = vmatprep.subr.mxu0 0.0
  %3179 = vmatpush1.msra.mxu0 0.0
  %3180 = vmatprep.subr.mxu0 0.0
  %3181 = vmatpush1.msra.mxu0 0.0
  %3182 = vmatprep.subr.mxu0 0.0
  %3183 = vmatpush1.msra.mxu0 0.0
  %3184 = vmatprep.subr.mxu0 0.0
  %3185 = vmatpush1.msra.mxu0 0.0
  %3186 = vmatprep.subr.mxu0 0.0
  %3187 = vmatpush1.msra.mxu0 0.0
  %3188 = vmatprep.subr.mxu0 0.0
  %3189 = vmatpush1.msra.mxu0 0.0
  %3190 = vmatprep.subr.mxu0 0.0
  %3191 = vmatpush1.msra.mxu0 0.0
  %3192 = vmatprep.subr.mxu0 0.0
  %3193 = vmatpush1.msra.mxu0 0.0
  %3194 = vmatprep.subr.mxu0 0.0
  %3195 = vmatpush1.msra.mxu0 0.0
  %3196 = vmatprep.subr.mxu0 0.0
  %3197 = vmatpush1.msra.mxu0 0.0
  %3198 = vmatprep.subr.mxu0 0.0
  %3199 = vmatpush1.msra.mxu0 0.0
  %3200 = vmatprep.subr.mxu0 0.0
  %3201 = vmatpush1.msra.mxu0 0.0
  %3202 = vmatprep.subr.mxu0 0.0
  %3203 = vmatpush1.msra.mxu0 0.0
  %3204 = vmatprep.subr.mxu0 0.0
  %3205 = vmatpush1.msra.mxu0 0.0
  %3206 = vmatprep.subr.mxu0 0.0
  %3207 = vmatpush1.msra.mxu0 0.0
  %3208 = vmatprep.subr.mxu0 0.0
  %3209 = vmatpush1.msra.mxu0 0.0
  %3210 = vmatprep.subr.mxu0 0.0
  %3211 = vmatpush1.msra.mxu0 0.0
  %3212 = vmatprep.subr.mxu0 0.0
  %3213 = vmatpush1.msra.mxu0 0.0
  %3214 = vmatprep.subr.mxu0 0.0
  %3215 = vmatpush1.msra.mxu0 0.0
  %3216 = vmatprep.subr.mxu0 0.0
  %3217 = vmatpush1.msra.mxu0 0.0
  %3218 = vmatprep.subr.mxu0 0.0
  %3219 = vmatpush1.msra.mxu0 0.0
  %3220 = vmatprep.subr.mxu0 0.0
  %3221 = vmatpush1.msra.mxu0 0.0
  %3222 = vmatprep.subr.mxu0 0.0
  %3223 = vmatpush1.msra.mxu0 0.0
  %3224 = vmatprep.subr.mxu0 0.0
  %3225 = vmatpush1.msra.mxu0 0.0
  %3226 = vmatprep.mubr.f32.mxu0 0.0
  %3227 = vmatmul.mubr.f32.gmra.mrb[0].mxu0 %v3153
  %v3228 = vpop.f32.mrb[0].mxu0
  %v3229 = vadd.f32 0.0, %v3228
  %v3230 = vpop.f32.mrb[0].mxu0
  %v3231 = vadd.f32 0.0, %v3230
  %3232 = vmatprep.mubr.f32.mxu0 0.0
  %3233 = vmatmul.mubr.f32.gmra.mrb[0].mxu0 %v3156
  %v3234 = vpop.f32.mrb[0].mxu0
  %v3235 = vadd.f32 0.0, %v3234
  %v3236 = vpop.f32.mrb[0].mxu0
  %v3237 = vadd.f32 0.0, %v3236
  %3238 = vdwg.mxu0
  %v3239 = vadd.f32 %v3134, %v3229
  %v3240 = vadd.f32 %v3136, %v3231
  %v3241 = vadd.f32 %v3140, %v3235
  %v3242 = vadd.f32 %v3142, %v3237
  %s3243 = scalar_lea.vmem %s5, 48
  %v3244 = vld [vmem:[%s3243] sm:$0xff]
  %v3245 = vld [vmem:[%s3243 + $0x8] sm:$0xf]
  %3246 = vrot.lane.b32.xlu0 %v2955, 118
  %v3247 = vpop.permute.xlu0 %3246
  %3248 = vrot.lane.b32.xlu0 %v2956, 118
  %v3249 = vpop.permute.xlu0 %3248
  %vm3250 = vcmask 965632
  %v3251 = vsel %vm3250, %v3247, %v3249
  %v3253 = vsel %vm2969, %v3244, 0
  %v3256 = vsel %vm2969, %v3245, 0
  %v3258 = vsel %vm2414, %v3251, 0
  %v3260 = vsel %vm2414, %v3249, 0
  %3262 = vmatprep.subr.mxu0 %v3260
  %3263 = vmatpush1.msra.mxu0 %v3258
  %3264 = vmatprep.subr.mxu0 0.0
  %3265 = vmatpush1.msra.mxu0 0.0
  %3266 = vmatprep.subr.mxu0 0.0
  %3267 = vmatpush1.msra.mxu0 0.0
  %3268 = vmatprep.subr.mxu0 0.0
  %3269 = vmatpush1.msra.mxu0 0.0
  %3270 = vmatprep.subr.mxu0 0.0
  %3271 = vmatpush1.msra.mxu0 0.0
  %3272 = vmatprep.subr.mxu0 0.0
  %3273 = vmatpush1.msra.mxu0 0.0
  %3274 = vmatprep.subr.mxu0 0.0
  %3275 = vmatpush1.msra.mxu0 0.0
  %3276 = vmatprep.subr.mxu0 0.0
  %3277 = vmatpush1.msra.mxu0 0.0
  %3278 = vmatprep.subr.mxu0 0.0
  %3279 = vmatpush1.msra.mxu0 0.0
  %3280 = vmatprep.subr.mxu0 0.0
  %3281 = vmatpush1.msra.mxu0 0.0
  %3282 = vmatprep.subr.mxu0 0.0
  %3283 = vmatpush1.msra.mxu0 0.0
  %3284 = vmatprep.subr.mxu0 0.0
  %3285 = vmatpush1.msra.mxu0 0.0
  %3286 = vmatprep.subr.mxu0 0.0
  %3287 = vmatpush1.msra.mxu0 0.0
  %3288 = vmatprep.subr.mxu0 0.0
  %3289 = vmatpush1.msra.mxu0 0.0
  %3290 = vmatprep.subr.mxu0 0.0
  %3291 = vmatpush1.msra.mxu0 0.0
  %3292 = vmatprep.subr.mxu0 0.0
  %3293 = vmatpush1.msra.mxu0 0.0
  %3294 = vmatprep.subr.mxu0 0.0
  %3295 = vmatpush1.msra.mxu0 0.0
  %3296 = vmatprep.subr.mxu0 0.0
  %3297 = vmatpush1.msra.mxu0 0.0
  %3298 = vmatprep.subr.mxu0 0.0
  %3299 = vmatpush1.msra.mxu0 0.0
  %3300 = vmatprep.subr.mxu0 0.0
  %3301 = vmatpush1.msra.mxu0 0.0
  %3302 = vmatprep.subr.mxu0 0.0
  %3303 = vmatpush1.msra.mxu0 0.0
  %3304 = vmatprep.subr.mxu0 0.0
  %3305 = vmatpush1.msra.mxu0 0.0
  %3306 = vmatprep.subr.mxu0 0.0
  %3307 = vmatpush1.msra.mxu0 0.0
  %3308 = vmatprep.subr.mxu0 0.0
  %3309 = vmatpush1.msra.mxu0 0.0
  %3310 = vmatprep.subr.mxu0 0.0
  %3311 = vmatpush1.msra.mxu0 0.0
  %3312 = vmatprep.subr.mxu0 0.0
  %3313 = vmatpush1.msra.mxu0 0.0
  %3314 = vmatprep.subr.mxu0 0.0
  %3315 = vmatpush1.msra.mxu0 0.0
  %3316 = vmatprep.subr.mxu0 0.0
  %3317 = vmatpush1.msra.mxu0 0.0
  %3318 = vmatprep.subr.mxu0 0.0
  %3319 = vmatpush1.msra.mxu0 0.0
  %3320 = vmatprep.subr.mxu0 0.0
  %3321 = vmatpush1.msra.mxu0 0.0
  %3322 = vmatprep.subr.mxu0 0.0
  %3323 = vmatpush1.msra.mxu0 0.0
  %3324 = vmatprep.subr.mxu0 0.0
  %3325 = vmatpush1.msra.mxu0 0.0
  %3326 = vmatprep.mubr.f32.mxu0 0.0
  %3327 = vmatmul.mubr.f32.gmra.mrb[0].mxu0 %v3253
  %v3328 = vpop.f32.mrb[0].mxu0
  %v3329 = vadd.f32 0.0, %v3328
  %v3330 = vpop.f32.mrb[0].mxu0
  %v3331 = vadd.f32 0.0, %v3330
  %3332 = vmatprep.mubr.f32.mxu0 0.0
  %3333 = vmatmul.mubr.f32.gmra.mrb[0].mxu0 %v3256
  %v3334 = vpop.f32.mrb[0].mxu0
  %v3335 = vadd.f32 0.0, %v3334
  %v3336 = vpop.f32.mrb[0].mxu0
  %v3337 = vadd.f32 0.0, %v3336
  %3338 = vdwg.mxu0
  %v3339 = vadd.f32 %v3239, %v3329
  %v3340 = vadd.f32 %v3240, %v3331
  %v3341 = vadd.f32 %v3241, %v3335
  %v3342 = vadd.f32 %v3242, %v3337
  %s3343 = scalar_lea.vmem %s5, 64
  %v3344 = vld [vmem:[%s3343] sm:$0xff]
  %v3345 = vld [vmem:[%s3343 + $0x8] sm:$0xf]
  %3346 = vrot.lane.b32.xlu0 %v2955, 117
  %v3347 = vpop.permute.xlu0 %3346
  %3348 = vrot.lane.b32.xlu0 %v2956, 117
  %v3349 = vpop.permute.xlu0 %3348
  %v3350 = vsel %vm2728, %v3347, %v3349
  %v3352 = vsel %vm2969, %v3344, 0
  %v3355 = vsel %vm2969, %v3345, 0
  %v3357 = vsel %vm2414, %v3350, 0
  %v3359 = vsel %vm2414, %v3349, 0
  %3361 = vmatprep.subr.mxu0 %v3359
  %3362 = vmatpush1.msra.mxu0 %v3357
  %3363 = vmatprep.subr.mxu0 0.0
  %3364 = vmatpush1.msra.mxu0 0.0
  %3365 = vmatprep.subr.mxu0 0.0
  %3366 = vmatpush1.msra.mxu0 0.0
  %3367 = vmatprep.subr.mxu0 0.0
  %3368 = vmatpush1.msra.mxu0 0.0
  %3369 = vmatprep.subr.mxu0 0.0
  %3370 = vmatpush1.msra.mxu0 0.0
  %3371 = vmatprep.subr.mxu0 0.0
  %3372 = vmatpush1.msra.mxu0 0.0
  %3373 = vmatprep.subr.mxu0 0.0
  %3374 = vmatpush1.msra.mxu0 0.0
  %3375 = vmatprep.subr.mxu0 0.0
  %3376 = vmatpush1.msra.mxu0 0.0
  %3377 = vmatprep.subr.mxu0 0.0
  %3378 = vmatpush1.msra.mxu0 0.0
  %3379 = vmatprep.subr.mxu0 0.0
  %3380 = vmatpush1.msra.mxu0 0.0
  %3381 = vmatprep.subr.mxu0 0.0
  %3382 = vmatpush1.msra.mxu0 0.0
  %3383 = vmatprep.subr.mxu0 0.0
  %3384 = vmatpush1.msra.mxu0 0.0
  %3385 = vmatprep.subr.mxu0 0.0
  %3386 = vmatpush1.msra.mxu0 0.0
  %3387 = vmatprep.subr.mxu0 0.0
  %3388 = vmatpush1.msra.mxu0 0.0
  %3389 = vmatprep.subr.mxu0 0.0
  %3390 = vmatpush1.msra.mxu0 0.0
  %3391 = vmatprep.subr.mxu0 0.0
  %3392 = vmatpush1.msra.mxu0 0.0
  %3393 = vmatprep.subr.mxu0 0.0
  %3394 = vmatpush1.msra.mxu0 0.0
  %3395 = vmatprep.subr.mxu0 0.0
  %3396 = vmatpush1.msra.mxu0 0.0
  %3397 = vmatprep.subr.mxu0 0.0
  %3398 = vmatpush1.msra.mxu0 0.0
  %3399 = vmatprep.subr.mxu0 0.0
  %3400 = vmatpush1.msra.mxu0 0.0
  %3401 = vmatprep.subr.mxu0 0.0
  %3402 = vmatpush1.msra.mxu0 0.0
  %3403 = vmatprep.subr.mxu0 0.0
  %3404 = vmatpush1.msra.mxu0 0.0
  %3405 = vmatprep.subr.mxu0 0.0
  %3406 = vmatpush1.msra.mxu0 0.0
  %3407 = vmatprep.subr.mxu0 0.0
  %3408 = vmatpush1.msra.mxu0 0.0
  %3409 = vmatprep.subr.mxu0 0.0
  %3410 = vmatpush1.msra.mxu0 0.0
  %3411 = vmatprep.subr.mxu0 0.0
  %3412 = vmatpush1.msra.mxu0 0.0
  %3413 = vmatprep.subr.mxu0 0.0
  %3414 = vmatpush1.msra.mxu0 0.0
  %3415 = vmatprep.subr.mxu0 0.0
  %3416 = vmatpush1.msra.mxu0 0.0
  %3417 = vmatprep.subr.mxu0 0.0
  %3418 = vmatpush1.msra.mxu0 0.0
  %3419 = vmatprep.subr.mxu0 0.0
  %3420 = vmatpush1.msra.mxu0 0.0
  %3421 = vmatprep.subr.mxu0 0.0
  %3422 = vmatpush1.msra.mxu0 0.0
  %3423 = vmatprep.subr.mxu0 0.0
  %3424 = vmatpush1.msra.mxu0 0.0
  %3425 = vmatprep.mubr.f32.mxu0 0.0
  %3426 = vmatmul.mubr.f32.gmra.mrb[0].mxu0 %v3352
  %v3427 = vpop.f32.mrb[0].mxu0
  %v3428 = vadd.f32 0.0, %v3427
  %v3429 = vpop.f32.mrb[0].mxu0
  %v3430 = vadd.f32 0.0, %v3429
  %3431 = vmatprep.mubr.f32.mxu0 0.0
  %3432 = vmatmul.mubr.f32.gmra.mrb[0].mxu0 %v3355
  %v3433 = vpop.f32.mrb[0].mxu0
  %v3434 = vadd.f32 0.0, %v3433
  %v3435 = vpop.f32.mrb[0].mxu0
  %v3436 = vadd.f32 0.0, %v3435
  %3437 = vdwg.mxu0
  %v3438 = vadd.f32 %v3339, %v3428
  %v3439 = vadd.f32 %v3340, %v3430
  %v3440 = vadd.f32 %v3341, %v3434
  %v3441 = vadd.f32 %v3342, %v3436
  %s3442 = scalar_lea.vmem %s5, 80
  %v3443 = vld [vmem:[%s3442] sm:$0xff]
  %v3444 = vld [vmem:[%s3442 + $0x8] sm:$0xf]
  %3445 = vrot.lane.b32.xlu0 %v2955, 116
  %v3446 = vpop.permute.xlu0 %3445
  %3447 = vrot.lane.b32.xlu0 %v2956, 116
  %v3448 = vpop.permute.xlu0 %3447
  %vm3449 = vcmask 949248
  %v3450 = vsel %vm3449, %v3446, %v3448
  %v3452 = vsel %vm2969, %v3443, 0
  %v3455 = vsel %vm2969, %v3444, 0
  %v3457 = vsel %vm2414, %v3450, 0
  %v3459 = vsel %vm2414, %v3448, 0
  %3461 = vmatprep.subr.mxu0 %v3459
  %3462 = vmatpush1.msra.mxu0 %v3457
  %3463 = vmatprep.subr.mxu0 0.0
  %3464 = vmatpush1.msra.mxu0 0.0
  %3465 = vmatprep.subr.mxu0 0.0
  %3466 = vmatpush1.msra.mxu0 0.0
  %3467 = vmatprep.subr.mxu0 0.0
  %3468 = vmatpush1.msra.mxu0 0.0
  %3469 = vmatprep.subr.mxu0 0.0
  %3470 = vmatpush1.msra.mxu0 0.0
  %3471 = vmatprep.subr.mxu0 0.0
  %3472 = vmatpush1.msra.mxu0 0.0
  %3473 = vmatprep.subr.mxu0 0.0
  %3474 = vmatpush1.msra.mxu0 0.0
  %3475 = vmatprep.subr.mxu0 0.0
  %3476 = vmatpush1.msra.mxu0 0.0
  %3477 = vmatprep.subr.mxu0 0.0
  %3478 = vmatpush1.msra.mxu0 0.0
  %3479 = vmatprep.subr.mxu0 0.0
  %3480 = vmatpush1.msra.mxu0 0.0
  %3481 = vmatprep.subr.mxu0 0.0
  %3482 = vmatpush1.msra.mxu0 0.0
  %3483 = vmatprep.subr.mxu0 0.0
  %3484 = vmatpush1.msra.mxu0 0.0
  %3485 = vmatprep.subr.mxu0 0.0
  %3486 = vmatpush1.msra.mxu0 0.0
  %3487 = vmatprep.subr.mxu0 0.0
  %3488 = vmatpush1.msra.mxu0 0.0
  %3489 = vmatprep.subr.mxu0 0.0
  %3490 = vmatpush1.msra.mxu0 0.0
  %3491 = vmatprep.subr.mxu0 0.0
  %3492 = vmatpush1.msra.mxu0 0.0
  %3493 = vmatprep.subr.mxu0 0.0
  %3494 = vmatpush1.msra.mxu0 0.0
  %3495 = vmatprep.subr.mxu0 0.0
  %3496 = vmatpush1.msra.mxu0 0.0
  %3497 = vmatprep.subr.mxu0 0.0
  %3498 = vmatpush1.msra.mxu0 0.0
  %3499 = vmatprep.subr.mxu0 0.0
  %3500 = vmatpush1.msra.mxu0 0.0
  %3501 = vmatprep.subr.mxu0 0.0
  %3502 = vmatpush1.msra.mxu0 0.0
  %3503 = vmatprep.subr.mxu0 0.0
  %3504 = vmatpush1.msra.mxu0 0.0
  %3505 = vmatprep.subr.mxu0 0.0
  %3506 = vmatpush1.msra.mxu0 0.0
  %3507 = vmatprep.subr.mxu0 0.0
  %3508 = vmatpush1.msra.mxu0 0.0
  %3509 = vmatprep.subr.mxu0 0.0
  %3510 = vmatpush1.msra.mxu0 0.0
  %3511 = vmatprep.subr.mxu0 0.0
  %3512 = vmatpush1.msra.mxu0 0.0
  %3513 = vmatprep.subr.mxu0 0.0
  %3514 = vmatpush1.msra.mxu0 0.0
  %3515 = vmatprep.subr.mxu0 0.0
  %3516 = vmatpush1.msra.mxu0 0.0
  %3517 = vmatprep.subr.mxu0 0.0
  %3518 = vmatpush1.msra.mxu0 0.0
  %3519 = vmatprep.subr.mxu0 0.0
  %3520 = vmatpush1.msra.mxu0 0.0
  %3521 = vmatprep.subr.mxu0 0.0
  %3522 = vmatpush1.msra.mxu0 0.0
  %3523 = vmatprep.subr.mxu0 0.0
  %3524 = vmatpush1.msra.mxu0 0.0
  %3525 = vmatprep.mubr.f32.mxu0 0.0
  %3526 = vmatmul.mubr.f32.gmra.mrb[0].mxu0 %v3452
  %v3527 = vpop.f32.mrb[0].mxu0
  %v3528 = vadd.f32 0.0, %v3527
  %v3529 = vpop.f32.mrb[0].mxu0
  %v3530 = vadd.f32 0.0, %v3529
  %3531 = vmatprep.mubr.f32.mxu0 0.0
  %3532 = vmatmul.mubr.f32.gmra.mrb[0].mxu0 %v3455
  %v3533 = vpop.f32.mrb[0].mxu0
  %v3534 = vadd.f32 0.0, %v3533
  %v3535 = vpop.f32.mrb[0].mxu0
  %v3536 = vadd.f32 0.0, %v3535
  %3537 = vdwg.mxu0
  %v3538 = vadd.f32 %v3438, %v3528
  %v3539 = vadd.f32 %v3439, %v3530
  %v3540 = vadd.f32 %v3440, %v3534
  %v3541 = vadd.f32 %v3441, %v3536
  %s3542 = scalar_lea.vmem %s5, 96
  %v3543 = vld [vmem:[%s3542] sm:$0xff]
  %v3544 = vld [vmem:[%s3542 + $0x8] sm:$0xf]
  %3545 = vrot.lane.b32.xlu0 %v2955, 108
  %v3546 = vpop.permute.xlu0 %3545
  %3547 = vrot.lane.b32.xlu0 %v2956, 108
  %v3548 = vpop.permute.xlu0 %3547
  %v3549 = vsel %vm1347, %v3546, %v3548
  %v3551 = vsel %vm2969, %v3543, 0
  %v3554 = vsel %vm2969, %v3544, 0
  %v3556 = vsel %vm2414, %v3549, 0
  %v3558 = vsel %vm2414, %v3548, 0
  %3560 = vmatprep.subr.mxu0 %v3558
  %3561 = vmatpush1.msra.mxu0 %v3556
  %3562 = vmatprep.subr.mxu0 0.0
  %3563 = vmatpush1.msra.mxu0 0.0
  %3564 = vmatprep.subr.mxu0 0.0
  %3565 = vmatpush1.msra.mxu0 0.0
  %3566 = vmatprep.subr.mxu0 0.0
  %3567 = vmatpush1.msra.mxu0 0.0
  %3568 = vmatprep.subr.mxu0 0.0
  %3569 = vmatpush1.msra.mxu0 0.0
  %3570 = vmatprep.subr.mxu0 0.0
  %3571 = vmatpush1.msra.mxu0 0.0
  %3572 = vmatprep.subr.mxu0 0.0
  %3573 = vmatpush1.msra.mxu0 0.0
  %3574 = vmatprep.subr.mxu0 0.0
  %3575 = vmatpush1.msra.mxu0 0.0
  %3576 = vmatprep.subr.mxu0 0.0
  %3577 = vmatpush1.msra.mxu0 0.0
  %3578 = vmatprep.subr.mxu0 0.0
  %3579 = vmatpush1.msra.mxu0 0.0
  %3580 = vmatprep.subr.mxu0 0.0
  %3581 = vmatpush1.msra.mxu0 0.0
  %3582 = vmatprep.subr.mxu0 0.0
  %3583 = vmatpush1.msra.mxu0 0.0
  %3584 = vmatprep.subr.mxu0 0.0
  %3585 = vmatpush1.msra.mxu0 0.0
  %3586 = vmatprep.subr.mxu0 0.0
  %3587 = vmatpush1.msra.mxu0 0.0
  %3588 = vmatprep.subr.mxu0 0.0
  %3589 = vmatpush1.msra.mxu0 0.0
  %3590 = vmatprep.subr.mxu0 0.0
  %3591 = vmatpush1.msra.mxu0 0.0
  %3592 = vmatprep.subr.mxu0 0.0
  %3593 = vmatpush1.msra.mxu0 0.0
  %3594 = vmatprep.subr.mxu0 0.0
  %3595 = vmatpush1.msra.mxu0 0.0
  %3596 = vmatprep.subr.mxu0 0.0
  %3597 = vmatpush1.msra.mxu0 0.0
  %3598 = vmatprep.subr.mxu0 0.0
  %3599 = vmatpush1.msra.mxu0 0.0
  %3600 = vmatprep.subr.mxu0 0.0
  %3601 = vmatpush1.msra.mxu0 0.0
  %3602 = vmatprep.subr.mxu0 0.0
  %3603 = vmatpush1.msra.mxu0 0.0
  %3604 = vmatprep.subr.mxu0 0.0
  %3605 = vmatpush1.msra.mxu0 0.0
  %3606 = vmatprep.subr.mxu0 0.0
  %3607 = vmatpush1.msra.mxu0 0.0
  %3608 = vmatprep.subr.mxu0 0.0
  %3609 = vmatpush1.msra.mxu0 0.0
  %3610 = vmatprep.subr.mxu0 0.0
  %3611 = vmatpush1.msra.mxu0 0.0
  %3612 = vmatprep.subr.mxu0 0.0
  %3613 = vmatpush1.msra.mxu0 0.0
  %3614 = vmatprep.subr.mxu0 0.0
  %3615 = vmatpush1.msra.mxu0 0.0
  %3616 = vmatprep.subr.mxu0 0.0
  %3617 = vmatpush1.msra.mxu0 0.0
  %3618 = vmatprep.subr.mxu0 0.0
  %3619 = vmatpush1.msra.mxu0 0.0
  %3620 = vmatprep.subr.mxu0 0.0
  %3621 = vmatpush1.msra.mxu0 0.0
  %3622 = vmatprep.subr.mxu0 0.0
  %3623 = vmatpush1.msra.mxu0 0.0
  %3624 = vmatprep.mubr.f32.mxu0 0.0
  %3625 = vmatmul.mubr.f32.gmra.mrb[0].mxu0 %v3551
  %v3626 = vpop.f32.mrb[0].mxu0
  %v3627 = vadd.f32 0.0, %v3626
  %v3628 = vpop.f32.mrb[0].mxu0
  %v3629 = vadd.f32 0.0, %v3628
  %3630 = vmatprep.mubr.f32.mxu0 0.0
  %3631 = vmatmul.mubr.f32.gmra.mrb[0].mxu0 %v3554
  %v3632 = vpop.f32.mrb[0].mxu0
  %v3633 = vadd.f32 0.0, %v3632
  %v3634 = vpop.f32.mrb[0].mxu0
  %v3635 = vadd.f32 0.0, %v3634
  %3636 = vdwg.mxu0
  %v3637 = vadd.f32 %v3538, %v3627
  %v3638 = vadd.f32 %v3539, %v3629
  %v3639 = vadd.f32 %v3540, %v3633
  %v3640 = vadd.f32 %v3541, %v3635
  %s3641 = scalar_lea.vmem %s5, 112
  %v3642 = vld [vmem:[%s3641] sm:$0xff]
  %v3643 = vld [vmem:[%s3641 + $0x8] sm:$0xf]
  %3644 = vrot.lane.b32.xlu0 %v2955, 107
  %v3645 = vpop.permute.xlu0 %3644
  %3646 = vrot.lane.b32.xlu0 %v2956, 107
  %v3647 = vpop.permute.xlu0 %3646
  %vm3648 = vcmask 875520
  %v3649 = vsel %vm3648, %v3645, %v3647
  %v3651 = vsel %vm2969, %v3642, 0
  %v3654 = vsel %vm2969, %v3643, 0
  %v3656 = vsel %vm2414, %v3649, 0
  %v3658 = vsel %vm2414, %v3647, 0
  %3660 = vmatprep.subr.mxu0 %v3658
  %3661 = vmatpush1.msra.mxu0 %v3656
  %3662 = vmatprep.subr.mxu0 0.0
  %3663 = vmatpush1.msra.mxu0 0.0
  %3664 = vmatprep.subr.mxu0 0.0
  %3665 = vmatpush1.msra.mxu0 0.0
  %3666 = vmatprep.subr.mxu0 0.0
  %3667 = vmatpush1.msra.mxu0 0.0
  %3668 = vmatprep.subr.mxu0 0.0
  %3669 = vmatpush1.msra.mxu0 0.0
  %3670 = vmatprep.subr.mxu0 0.0
  %3671 = vmatpush1.msra.mxu0 0.0
  %3672 = vmatprep.subr.mxu0 0.0
  %3673 = vmatpush1.msra.mxu0 0.0
  %3674 = vmatprep.subr.mxu0 0.0
  %3675 = vmatpush1.msra.mxu0 0.0
  %3676 = vmatprep.subr.mxu0 0.0
  %3677 = vmatpush1.msra.mxu0 0.0
  %3678 = vmatprep.subr.mxu0 0.0
  %3679 = vmatpush1.msra.mxu0 0.0
  %3680 = vmatprep.subr.mxu0 0.0
  %3681 = vmatpush1.msra.mxu0 0.0
  %3682 = vmatprep.subr.mxu0 0.0
  %3683 = vmatpush1.msra.mxu0 0.0
  %3684 = vmatprep.subr.mxu0 0.0
  %3685 = vmatpush1.msra.mxu0 0.0
  %3686 = vmatprep.subr.mxu0 0.0
  %3687 = vmatpush1.msra.mxu0 0.0
  %3688 = vmatprep.subr.mxu0 0.0
  %3689 = vmatpush1.msra.mxu0 0.0
  %3690 = vmatprep.subr.mxu0 0.0
  %3691 = vmatpush1.msra.mxu0 0.0
  %3692 = vmatprep.subr.mxu0 0.0
  %3693 = vmatpush1.msra.mxu0 0.0
  %3694 = vmatprep.subr.mxu0 0.0
  %3695 = vmatpush1.msra.mxu0 0.0
  %3696 = vmatprep.subr.mxu0 0.0
  %3697 = vmatpush1.msra.mxu0 0.0
  %3698 = vmatprep.subr.mxu0 0.0
  %3699 = vmatpush1.msra.mxu0 0.0
  %3700 = vmatprep.subr.mxu0 0.0
  %3701 = vmatpush1.msra.mxu0 0.0
  %3702 = vmatprep.subr.mxu0 0.0
  %3703 = vmatpush1.msra.mxu0 0.0
  %3704 = vmatprep.subr.mxu0 0.0
  %3705 = vmatpush1.msra.mxu0 0.0
  %3706 = vmatprep.subr.mxu0 0.0
  %3707 = vmatpush1.msra.mxu0 0.0
  %3708 = vmatprep.subr.mxu0 0.0
  %3709 = vmatpush1.msra.mxu0 0.0
  %3710 = vmatprep.subr.mxu0 0.0
  %3711 = vmatpush1.msra.mxu0 0.0
  %3712 = vmatprep.subr.mxu0 0.0
  %3713 = vmatpush1.msra.mxu0 0.0
  %3714 = vmatprep.subr.mxu0 0.0
  %3715 = vmatpush1.msra.mxu0 0.0
  %3716 = vmatprep.subr.mxu0 0.0
  %3717 = vmatpush1.msra.mxu0 0.0
  %3718 = vmatprep.subr.mxu0 0.0
  %3719 = vmatpush1.msra.mxu0 0.0
  %3720 = vmatprep.subr.mxu0 0.0
  %3721 = vmatpush1.msra.mxu0 0.0
  %3722 = vmatprep.subr.mxu0 0.0
  %3723 = vmatpush1.msra.mxu0 0.0
  %3724 = vmatprep.mubr.f32.mxu0 0.0
  %3725 = vmatmul.mubr.f32.gmra.mrb[0].mxu0 %v3651
  %v3726 = vpop.f32.mrb[0].mxu0
  %v3727 = vadd.f32 0.0, %v3726
  %v3728 = vpop.f32.mrb[0].mxu0
  %v3729 = vadd.f32 0.0, %v3728
  %3730 = vmatprep.mubr.f32.mxu0 0.0
  %3731 = vmatmul.mubr.f32.gmra.mrb[0].mxu0 %v3654
  %v3732 = vpop.f32.mrb[0].mxu0
  %v3733 = vadd.f32 0.0, %v3732
  %v3734 = vpop.f32.mrb[0].mxu0
  %v3735 = vadd.f32 0.0, %v3734
  %3736 = vdwg.mxu0
  %v3737 = vadd.f32 %v3637, %v3727
  %v3738 = vadd.f32 %v3638, %v3729
  %v3739 = vadd.f32 %v3639, %v3733
  %v3740 = vadd.f32 %v3640, %v3735
  %s3741 = scalar_lea.vmem %s5, 128
  %v3742 = vld [vmem:[%s3741] sm:$0xff]
  %v3743 = vld [vmem:[%s3741 + $0x8] sm:$0xf]
  %3744 = vrot.lane.b32.xlu0 %v2955, 106
  %v3745 = vpop.permute.xlu0 %3744
  %3746 = vrot.lane.b32.xlu0 %v2956, 106
  %v3747 = vpop.permute.xlu0 %3746
  %vm3748 = vcmask 867328
  %v3749 = vsel %vm3748, %v3745, %v3747
  %v3751 = vsel %vm2969, %v3742, 0
  %v3754 = vsel %vm2969, %v3743, 0
  %v3756 = vsel %vm2414, %v3749, 0
  %v3758 = vsel %vm2414, %v3747, 0
  %3760 = vmatprep.subr.mxu0 %v3758
  %3761 = vmatpush1.msra.mxu0 %v3756
  %3762 = vmatprep.subr.mxu0 0.0
  %3763 = vmatpush1.msra.mxu0 0.0
  %3764 = vmatprep.subr.mxu0 0.0
  %3765 = vmatpush1.msra.mxu0 0.0
  %3766 = vmatprep.subr.mxu0 0.0
  %3767 = vmatpush1.msra.mxu0 0.0
  %3768 = vmatprep.subr.mxu0 0.0
  %3769 = vmatpush1.msra.mxu0 0.0
  %3770 = vmatprep.subr.mxu0 0.0
  %3771 = vmatpush1.msra.mxu0 0.0
  %3772 = vmatprep.subr.mxu0 0.0
  %3773 = vmatpush1.msra.mxu0 0.0
  %3774 = vmatprep.subr.mxu0 0.0
  %3775 = vmatpush1.msra.mxu0 0.0
  %3776 = vmatprep.subr.mxu0 0.0
  %3777 = vmatpush1.msra.mxu0 0.0
  %3778 = vmatprep.subr.mxu0 0.0
  %3779 = vmatpush1.msra.mxu0 0.0
  %3780 = vmatprep.subr.mxu0 0.0
  %3781 = vmatpush1.msra.mxu0 0.0
  %3782 = vmatprep.subr.mxu0 0.0
  %3783 = vmatpush1.msra.mxu0 0.0
  %3784 = vmatprep.subr.mxu0 0.0
  %3785 = vmatpush1.msra.mxu0 0.0
  %3786 = vmatprep.subr.mxu0 0.0
  %3787 = vmatpush1.msra.mxu0 0.0
  %3788 = vmatprep.subr.mxu0 0.0
  %3789 = vmatpush1.msra.mxu0 0.0
  %3790 = vmatprep.subr.mxu0 0.0
  %3791 = vmatpush1.msra.mxu0 0.0
  %3792 = vmatprep.subr.mxu0 0.0
  %3793 = vmatpush1.msra.mxu0 0.0
  %3794 = vmatprep.subr.mxu0 0.0
  %3795 = vmatpush1.msra.mxu0 0.0
  %3796 = vmatprep.subr.mxu0 0.0
  %3797 = vmatpush1.msra.mxu0 0.0
  %3798 = vmatprep.subr.mxu0 0.0
  %3799 = vmatpush1.msra.mxu0 0.0
  %3800 = vmatprep.subr.mxu0 0.0
  %3801 = vmatpush1.msra.mxu0 0.0
  %3802 = vmatprep.subr.mxu0 0.0
  %3803 = vmatpush1.msra.mxu0 0.0
  %3804 = vmatprep.subr.mxu0 0.0
  %3805 = vmatpush1.msra.mxu0 0.0
  %3806 = vmatprep.subr.mxu0 0.0
  %3807 = vmatpush1.msra.mxu0 0.0
  %3808 = vmatprep.subr.mxu0 0.0
  %3809 = vmatpush1.msra.mxu0 0.0
  %3810 = vmatprep.subr.mxu0 0.0
  %3811 = vmatpush1.msra.mxu0 0.0
  %3812 = vmatprep.subr.mxu0 0.0
  %3813 = vmatpush1.msra.mxu0 0.0
  %3814 = vmatprep.subr.mxu0 0.0
  %3815 = vmatpush1.msra.mxu0 0.0
  %3816 = vmatprep.subr.mxu0 0.0
  %3817 = vmatpush1.msra.mxu0 0.0
  %3818 = vmatprep.subr.mxu0 0.0
  %3819 = vmatpush1.msra.mxu0 0.0
  %3820 = vmatprep.subr.mxu0 0.0
  %3821 = vmatpush1.msra.mxu0 0.0
  %3822 = vmatprep.subr.mxu0 0.0
  %3823 = vmatpush1.msra.mxu0 0.0
  %3824 = vmatprep.mubr.f32.mxu0 0.0
  %3825 = vmatmul.mubr.f32.gmra.mrb[0].mxu0 %v3751
  %v3826 = vpop.f32.mrb[0].mxu0
  %v3827 = vadd.f32 0.0, %v3826
  %v3828 = vpop.f32.mrb[0].mxu0
  %v3829 = vadd.f32 0.0, %v3828
  %3830 = vmatprep.mubr.f32.mxu0 0.0
  %3831 = vmatmul.mubr.f32.gmra.mrb[0].mxu0 %v3754
  %v3832 = vpop.f32.mrb[0].mxu0
  %v3833 = vadd.f32 0.0, %v3832
  %v3834 = vpop.f32.mrb[0].mxu0
  %v3835 = vadd.f32 0.0, %v3834
  %3836 = vdwg.mxu0
  %v3837 = vadd.f32 %v3737, %v3827
  %v3838 = vadd.f32 %v3738, %v3829
  %v3839 = vadd.f32 %v3739, %v3833
  %v3840 = vadd.f32 %v3740, %v3835
  %v3841 = vld [vmem:[%s7] sm:$0x3]
  %v3843 = vlaneseq
  %v3844 = vshrl.u32 %v3843, 7
  %v3845 = vsub.s32 0, %v3844
  %v3846 = vrot.slane %v3841, %v3845
  %v3847 = vlaneseq
  %v3848 = vshrl.u32 %v3847, 7
  %v3849 = vsub.s32 1, %v3848
  %v3850 = vrot.slane %v3841, %v3849
  %v3853 = vmul.f32 %v3837, %v3846
  %v3854 = vmul.f32 %v3838, %v3850
  %v3855 = vmul.f32 %v3839, %v3846
  %v3856 = vmul.f32 %v3840, %v3850
  %vm3857 = vcmask 588800
  %v3858 = vsel %vm3857, %v3854, 0.0
  %v3859 = vadd.f32 %v3853, %v3858
  %3860 = vadd.xlane.f32.xlu0 %v3859
  %v3861 = vpop.xlane.xlu0 %3860
  %v3862 = vsel %vm81, %v3855, 0.0
  %vm3863 = vcmask 584704
  %v3864 = vsel %vm3863, %v3856, 0.0
  %v3865 = vadd.f32 %v3862, %v3864
  %3866 = vadd.xlane.f32.xlu0 %v3865
  %v3867 = vpop.xlane.xlu0 %3866
  %v3868 = vmul.f32 %v3853, %v3853
  %v3869 = vmul.f32 %v3854, %v3854
  %v3870 = vmul.f32 %v3855, %v3855
  %v3871 = vmul.f32 %v3856, %v3856
  %v3872 = vsel %vm3857, %v3869, 0.0
  %v3873 = vadd.f32 %v3868, %v3872
  %3874 = vadd.xlane.f32.xlu0 %v3873
  %v3875 = vpop.xlane.xlu0 %3874
  %v3876 = vsel %vm81, %v3870, 0.0
  %v3877 = vsel %vm3863, %v3871, 0.0
  %v3878 = vadd.f32 %v3876, %v3877
  %3879 = vadd.xlane.f32.xlu0 %v3878
  %v3880 = vpop.xlane.xlu0 %3879
  %v3881 = vmul.f32 %v3861, 0.0078125
  %v3882 = vmul.f32 %v3867, 0.0078125
  %v3883 = vmul.f32 %v3875, 0.0078125
  %v3884 = vmul.f32 %v3880, 0.0078125
  %v3885 = vmul.f32 %v3881, %v3881
  %v3886 = vmul.f32 %v3882, %v3882
  %v3887 = vsub.f32 %v3883, %v3885
  %v3888 = vsub.f32 %v3884, %v3886
  %v3889 = vld [vmem:[%s6] sm:$0xff]
  %v3890 = vld [vmem:[%s6 + $0x8] sm:$0xf]
  %v3891 = vadd.f32 %v3887, 1e-05
  %v3892 = vadd.f32 %v3888, 1e-05
  %v3893 = vrsqrt.pop %v3891
  %v3894 = vrsqrt.pop %v3892
  %v3895 = vmul.f32 %v3889, %v3893
  %v3896 = vmul.f32 %v3890, %v3894
  %s3897 = scalar_lea.vmem %s6, 16
  %v3898 = vld [vmem:[%s3897] sm:$0xff]
  %v3899 = vld [vmem:[%s3897 + $0x8] sm:$0xf]
  %v3900 = vmul.f32 %v3881, %v3895
  %v3901 = vmul.f32 %v3882, %v3896
  %v3902 = vsub.f32 %v3898, %v3900
  %v3903 = vsub.f32 %v3899, %v3901
  %3905 = vset.pattern.permute.xlu0 0
  %3906 = vperm.xlu0 %3905, %v3895
  %v3907 = vpop.permute.xlu0 %3906
  %3910 = vset.pattern.permute.xlu0 0
  %3911 = vperm.xlu0 %3910, %v3896
  %v3912 = vpop.permute.xlu0 %3911
  %v3914 = vmul.f32 %v3837, %v3907
  %v3915 = vmul.f32 %v3838, %v3907
  %v3916 = vmul.f32 %v3839, %v3912
  %v3917 = vmul.f32 %v3840, %v3912
  %3919 = vset.pattern.permute.xlu0 0
  %3920 = vperm.xlu0 %3919, %v3902
  %v3921 = vpop.permute.xlu0 %3920
  %3924 = vset.pattern.permute.xlu0 0
  %3925 = vperm.xlu0 %3924, %v3903
  %v3926 = vpop.permute.xlu0 %3925
  %v3928 = vadd.f32 %v3914, %v3921
  %v3929 = vadd.f32 %v3915, %v3921
  %v3930 = vadd.f32 %v3916, %v3926
  %v3931 = vadd.f32 %v3917, %v3926
  %v3932 = vmax.f32 %v3928, 0.0
  %v3933 = vmax.f32 %v3929, 0.0
  %v3934 = vmax.f32 %v3930, 0.0
  %v3935 = vmax.f32 %v3931, 0.0
  %3936 = vst [vmem:[#allocation3] sm:$0xff] %v3932
  %3937 = vst.msk [vmem:[#allocation3 + $0x8] sm:$0xff] %vm3857, %v3933
  %3938 = vst [vmem:[#allocation3 + $0x10] sm:$0xf] %v3934
  %3939 = vst.msk [vmem:[#allocation3 + $0x18] sm:$0xf] %vm3863, %v3935
  %v3940 = vld [vmem:[#allocation3] sm:$0xff]
  %v3941 = vld [vmem:[#allocation3 + $0x8] sm:$0xff]
  %v3942 = vld [vmem:[#allocation3 + $0x10] sm:$0xf]
  %v3943 = vld [vmem:[#allocation3 + $0x18] sm:$0xf]
  %3948 = vrot.lane.b32.xlu0 %v3940, 127
  %v3949 = vpop.permute.xlu0 %3948
  %3950 = vrot.lane.b32.xlu0 %v3941, 127
  %v3951 = vpop.permute.xlu0 %3950
  %3952 = vrot.lane.b32.xlu0 %v3942, 127
  %v3953 = vpop.permute.xlu0 %3952
  %3954 = vrot.lane.b32.xlu0 %v3943, 127
  %v3955 = vpop.permute.xlu0 %3954
  %v3956 = vsel %vm71, %v3949, %v3951
  %v3957 = vsel %vm71, %v3953, %v3955
  %v3962 = vmax.f32 %v3940, %v3956
  %v3963 = vmax.f32 %v3941, %v3951
  %v3964 = vmax.f32 %v3942, %v3957
  %v3965 = vmax.f32 %v3943, %v3955
  %3970 = vrot.lane.b32.xlu0 %v3962, 118
  %v3971 = vpop.permute.xlu0 %3970
  %3972 = vrot.lane.b32.xlu0 %v3963, 118
  %v3973 = vpop.permute.xlu0 %3972
  %3974 = vrot.lane.b32.xlu0 %v3964, 118
  %v3975 = vpop.permute.xlu0 %3974
  %3976 = vrot.lane.b32.xlu0 %v3965, 118
  %v3977 = vpop.permute.xlu0 %3976
  %v3978 = vsel %vm3250, %v3971, %v3973
  %v3979 = vsel %vm3250, %v3975, %v3977
  %v3984 = vmax.f32 %v3962, %v3978
  %v3985 = vmax.f32 %v3963, %v3973
  %v3986 = vmax.f32 %v3964, %v3979
  %v3987 = vmax.f32 %v3965, %v3977
  %v3988 = vld [vmem:[%s8] sm:$0xff]
  %v3989 = vld [vmem:[%s8 + $0x8] sm:$0xff]
  %v3990 = vld [vmem:[%s8 + $0x10] sm:$0xff]
  %v3991 = vld [vmem:[%s8 + $0x18] sm:$0xff]
  %v3992 = vld [vmem:[%s8 + $0x20] sm:$0xff]
  %v3993 = vld [vmem:[%s8 + $0x28] sm:$0xff]
  %v3994 = vld [vmem:[%s8 + $0x30] sm:$0xff]
  %v3995 = vld [vmem:[%s8 + $0x38] sm:$0xff]
  %v3996 = vld [vmem:[%s8 + $0x40] sm:$0xff]
  %v3997 = vld [vmem:[%s8 + $0x48] sm:$0xff]
  %v3998 = vld [vmem:[%s8 + $0x50] sm:$0xff]
  %v3999 = vld [vmem:[%s8 + $0x58] sm:$0xff]
  %v4000 = vld [vmem:[%s8 + $0x60] sm:$0xff]
  %v4001 = vld [vmem:[%s8 + $0x68] sm:$0xff]
  %v4002 = vld [vmem:[%s8 + $0x70] sm:$0xff]
  %v4003 = vld [vmem:[%s8 + $0x78] sm:$0xff]
  %v4004 = vld [vmem:[%s8 + $0x80] sm:$0xff]
  %v4005 = vld [vmem:[%s8 + $0x88] sm:$0xff]
  %v4006 = vld [vmem:[%s8 + $0x90] sm:$0xff]
  %v4007 = vld [vmem:[%s8 + $0x98] sm:$0xff]
  %v4008 = vld [vmem:[%s8 + $0xa0] sm:$0xff]
  %v4009 = vld [vmem:[%s8 + $0xa8] sm:$0xff]
  %v4010 = vld [vmem:[%s8 + $0xb0] sm:$0xff]
  %v4011 = vld [vmem:[%s8 + $0xb8] sm:$0x1f]
  %vm4012 = vcmask 498688
  %v4014 = vsel %vm4012, %v3985, 0
  %v4017 = vsel %vm4012, %v3987, 0
  %v4020 = vsel %vm2732, %v4011, 0
  %4022 = vmatprep.subr.mxu0 0.0
  %4023 = vmatpush1.msra.mxu0 %v3988
  %4024 = vmatprep.subr.mxu0 0.0
  %4025 = vmatpush1.msra.mxu0 %v3989
  %4026 = vmatprep.subr.mxu0 0.0
  %4027 = vmatpush1.msra.mxu0 %v3990
  %4028 = vmatprep.subr.mxu0 0.0
  %4029 = vmatpush1.msra.mxu0 %v3991
  %4030 = vmatprep.subr.mxu0 0.0
  %4031 = vmatpush1.msra.mxu0 %v3992
  %4032 = vmatprep.subr.mxu0 0.0
  %4033 = vmatpush1.msra.mxu0 %v3993
  %4034 = vmatprep.subr.mxu0 0.0
  %4035 = vmatpush1.msra.mxu0 %v3994
  %4036 = vmatprep.subr.mxu0 0.0
  %4037 = vmatpush1.msra.mxu0 %v3995
  %4038 = vmatprep.subr.mxu0 0.0
  %4039 = vmatpush1.msra.mxu0 %v3996
  %4040 = vmatprep.subr.mxu0 0.0
  %4041 = vmatpush1.msra.mxu0 %v3997
  %4042 = vmatprep.subr.mxu0 0.0
  %4043 = vmatpush1.msra.mxu0 %v3998
  %4044 = vmatprep.subr.mxu0 0.0
  %4045 = vmatpush1.msra.mxu0 %v3999
  %4046 = vmatprep.subr.mxu0 0.0
  %4047 = vmatpush1.msra.mxu0 %v4000
  %4048 = vmatprep.subr.mxu0 0.0
  %4049 = vmatpush1.msra.mxu0 %v4001
  %4050 = vmatprep.subr.mxu0 0.0
  %4051 = vmatpush1.msra.mxu0 %v4002
  %4052 = vmatprep.subr.mxu0 0.0
  %4053 = vmatpush1.msra.mxu0 %v4003
  %4054 = vmatprep.subr.mxu0 0.0
  %4055 = vmatpush1.msra.mxu0 %v4004
  %4056 = vmatprep.subr.mxu0 0.0
  %4057 = vmatpush1.msra.mxu0 %v4005
  %4058 = vmatprep.subr.mxu0 0.0
  %4059 = vmatpush1.msra.mxu0 %v4006
  %4060 = vmatprep.subr.mxu0 0.0
  %4061 = vmatpush1.msra.mxu0 %v4007
  %4062 = vmatprep.subr.mxu0 0.0
  %4063 = vmatpush1.msra.mxu0 %v4008
  %4064 = vmatprep.subr.mxu0 0.0
  %4065 = vmatpush1.msra.mxu0 %v4009
  %4066 = vmatprep.subr.mxu0 0.0
  %4067 = vmatpush1.msra.mxu0 %v4010
  %4068 = vmatprep.subr.mxu0 0.0
  %4069 = vmatpush1.msra.mxu0 %v4020
  %4070 = vmatprep.subr.mxu0 0.0
  %4071 = vmatpush1.msra.mxu0 0.0
  %4072 = vmatprep.subr.mxu0 0.0
  %4073 = vmatpush1.msra.mxu0 0.0
  %4074 = vmatprep.subr.mxu0 0.0
  %4075 = vmatpush1.msra.mxu0 0.0
  %4076 = vmatprep.subr.mxu0 0.0
  %4077 = vmatpush1.msra.mxu0 0.0
  %4078 = vmatprep.subr.mxu0 0.0
  %4079 = vmatpush1.msra.mxu0 0.0
  %4080 = vmatprep.subr.mxu0 0.0
  %4081 = vmatpush1.msra.mxu0 0.0
  %4082 = vmatprep.subr.mxu0 0.0
  %4083 = vmatpush1.msra.mxu0 0.0
  %4084 = vmatprep.subr.mxu0 0.0
  %4085 = vmatpush1.msra.mxu0 0.0
  %4086 = vmatprep.mubr.f32.mxu0 %v4014
  %4087 = vmatmul.mubr.f32.gmra.mrb[0].mxu0 %v3984
  %v4088 = vpop.f32.mrb[0].mxu0
  %v4089 = vadd.f32 0.0, %v4088
  %v4090 = vpop.f32.mrb[0].mxu0
  %4091 = vmatprep.mubr.f32.mxu0 %v4017
  %4092 = vmatmul.mubr.f32.gmra.mrb[0].mxu0 %v3986
  %v4093 = vpop.f32.mrb[0].mxu0
  %v4094 = vadd.f32 0.0, %v4093
  %v4095 = vpop.f32.mrb[0].mxu0
  %4096 = vdwg.mxu0
  %v4097 = vld [vmem:[%s9] sm:$0xff]
  %v4098 = vld [vmem:[%s9 + $0x8] sm:$0xff]
  %v4099 = vld [vmem:[%s9 + $0x10] sm:$0xff]
  %v4100 = vld [vmem:[%s9 + $0x18] sm:$0xff]
  %vm4101 = vcmask 97280
  %v4103 = vsel %vm4101, %v4097, 0
  %v4106 = vsel %vm4101, %v4098, 0
  %v4109 = vsel %vm4101, %v4099, 0
  %v4112 = vsel %vm4101, %v4100, 0
  %v4115 = vsel %vm81, %v4094, 0
  %4117 = vmatprep.subr.mxu0 0.0
  %4118 = vmatpush1.msra.mxu0 %v4089
  %4119 = vmatprep.subr.mxu0 0.0
  %4120 = vmatpush1.msra.mxu0 %v4115
  %4121 = vmatprep.subr.mxu0 0.0
  %4122 = vmatpush1.msra.mxu0 0.0
  %4123 = vmatprep.subr.mxu0 0.0
  %4124 = vmatpush1.msra.mxu0 0.0
  %4125 = vmatprep.subr.mxu0 0.0
  %4126 = vmatpush1.msra.mxu0 0.0
  %4127 = vmatprep.subr.mxu0 0.0
  %4128 = vmatpush1.msra.mxu0 0.0
  %4129 = vmatprep.subr.mxu0 0.0
  %4130 = vmatpush1.msra.mxu0 0.0
  %4131 = vmatprep.subr.mxu0 0.0
  %4132 = vmatpush1.msra.mxu0 0.0
  %4133 = vmatprep.subr.mxu0 0.0
  %4134 = vmatpush1.msra.mxu0 0.0
  %4135 = vmatprep.subr.mxu0 0.0
  %4136 = vmatpush1.msra.mxu0 0.0
  %4137 = vmatprep.subr.mxu0 0.0
  %4138 = vmatpush1.msra.mxu0 0.0
  %4139 = vmatprep.subr.mxu0 0.0
  %4140 = vmatpush1.msra.mxu0 0.0
  %4141 = vmatprep.subr.mxu0 0.0
  %4142 = vmatpush1.msra.mxu0 0.0
  %4143 = vmatprep.subr.mxu0 0.0
  %4144 = vmatpush1.msra.mxu0 0.0
  %4145 = vmatprep.subr.mxu0 0.0
  %4146 = vmatpush1.msra.mxu0 0.0
  %4147 = vmatprep.subr.mxu0 0.0
  %4148 = vmatpush1.msra.mxu0 0.0
  %4149 = vmatprep.subr.mxu0 0.0
  %4150 = vmatpush1.msra.mxu0 0.0
  %4151 = vmatprep.subr.mxu0 0.0
  %4152 = vmatpush1.msra.mxu0 0.0
  %4153 = vmatprep.subr.mxu0 0.0
  %4154 = vmatpush1.msra.mxu0 0.0
  %4155 = vmatprep.subr.mxu0 0.0
  %4156 = vmatpush1.msra.mxu0 0.0
  %4157 = vmatprep.subr.mxu0 0.0
  %4158 = vmatpush1.msra.mxu0 0.0
  %4159 = vmatprep.subr.mxu0 0.0
  %4160 = vmatpush1.msra.mxu0 0.0
  %4161 = vmatprep.subr.mxu0 0.0
  %4162 = vmatpush1.msra.mxu0 0.0
  %4163 = vmatprep.subr.mxu0 0.0
  %4164 = vmatpush1.msra.mxu0 0.0
  %4165 = vmatprep.subr.mxu0 0.0
  %4166 = vmatpush1.msra.mxu0 0.0
  %4167 = vmatprep.subr.mxu0 0.0
  %4168 = vmatpush1.msra.mxu0 0.0
  %4169 = vmatprep.subr.mxu0 0.0
  %4170 = vmatpush1.msra.mxu0 0.0
  %4171 = vmatprep.subr.mxu0 0.0
  %4172 = vmatpush1.msra.mxu0 0.0
  %4173 = vmatprep.subr.mxu0 0.0
  %4174 = vmatpush1.msra.mxu0 0.0
  %4175 = vmatprep.subr.mxu0 0.0
  %4176 = vmatpush1.msra.mxu0 0.0
  %4177 = vmatprep.subr.mxu0 0.0
  %4178 = vmatpush1.msra.mxu0 0.0
  %4179 = vmatprep.subr.mxu0 0.0
  %4180 = vmatpush1.msra.mxu0 0.0
  %4181 = vmatprep.mubr.f32.mxu0 0.0
  %4182 = vmatmul.mubr.f32.gmra.mrb[0].mxu0 %v4103
  %v4183 = vpop.f32.mrb[0].mxu0
  %v4184 = vadd.f32 0.0, %v4183
  %v4185 = vpop.f32.mrb[0].mxu0
  %4186 = vmatprep.mubr.f32.mxu0 0.0
  %4187 = vmatmul.mubr.f32.gmra.mrb[0].mxu0 %v4106
  %v4188 = vpop.f32.mrb[0].mxu0
  %v4189 = vadd.f32 0.0, %v4188
  %v4190 = vpop.f32.mrb[0].mxu0
  %4191 = vmatprep.mubr.f32.mxu0 0.0
  %4192 = vmatmul.mubr.f32.gmra.mrb[0].mxu0 %v4109
  %v4193 = vpop.f32.mrb[0].mxu0
  %v4194 = vadd.f32 0.0, %v4193
  %v4195 = vpop.f32.mrb[0].mxu0
  %4196 = vmatprep.mubr.f32.mxu0 0.0
  %4197 = vmatmul.mubr.f32.gmra.mrb[0].mxu0 %v4112
  %v4198 = vpop.f32.mrb[0].mxu0
  %v4199 = vadd.f32 0.0, %v4198
  %v4200 = vpop.f32.mrb[0].mxu0
  %4201 = vdwg.mxu0
  %v4202 = vld [vmem:[%s12] sm:$0x3]
  %v4203 = vld [vmem:[%s11] sm:$0xff]
  %v4204 = vld [vmem:[%s11 + $0x8] sm:$0xff]
  %v4205 = vld [vmem:[%s11 + $0x10] sm:$0xff]
  %v4206 = vld [vmem:[%s11 + $0x18] sm:$0xff]
  %v4207 = vmul.f32 %v4184, %v4203
  %v4208 = vmul.f32 %v4189, %v4204
  %v4209 = vmul.f32 %v4194, %v4205
  %v4210 = vmul.f32 %v4199, %v4206
  %vm4211 = vcmask 261120
  %v4213 = vsel %vm4211, %v4202, 0
  %4215 = vmatprep.subr.mxu0 0.0
  %4216 = vmatpush1.msra.mxu0 %v4207
  %4217 = vmatprep.subr.mxu0 0.0
  %4218 = vmatpush1.msra.mxu0 %v4208
  %4219 = vmatprep.subr.mxu0 0.0
  %4220 = vmatpush1.msra.mxu0 %v4209
  %4221 = vmatprep.subr.mxu0 0.0
  %4222 = vmatpush1.msra.mxu0 %v4210
  %4223 = vmatprep.subr.mxu0 0.0
  %4224 = vmatpush1.msra.mxu0 0.0
  %4225 = vmatprep.subr.mxu0 0.0
  %4226 = vmatpush1.msra.mxu0 0.0
  %4227 = vmatprep.subr.mxu0 0.0
  %4228 = vmatpush1.msra.mxu0 0.0
  %4229 = vmatprep.subr.mxu0 0.0
  %4230 = vmatpush1.msra.mxu0 0.0
  %4231 = vmatprep.subr.mxu0 0.0
  %4232 = vmatpush1.msra.mxu0 0.0
  %4233 = vmatprep.subr.mxu0 0.0
  %4234 = vmatpush1.msra.mxu0 0.0
  %4235 = vmatprep.subr.mxu0 0.0
  %4236 = vmatpush1.msra.mxu0 0.0
  %4237 = vmatprep.subr.mxu0 0.0
  %4238 = vmatpush1.msra.mxu0 0.0
  %4239 = vmatprep.subr.mxu0 0.0
  %4240 = vmatpush1.msra.mxu0 0.0
  %4241 = vmatprep.subr.mxu0 0.0
  %4242 = vmatpush1.msra.mxu0 0.0
  %4243 = vmatprep.subr.mxu0 0.0
  %4244 = vmatpush1.msra.mxu0 0.0
  %4245 = vmatprep.subr.mxu0 0.0
  %4246 = vmatpush1.msra.mxu0 0.0
  %4247 = vmatprep.subr.mxu0 0.0
  %4248 = vmatpush1.msra.mxu0 0.0
  %4249 = vmatprep.subr.mxu0 0.0
  %4250 = vmatpush1.msra.mxu0 0.0
  %4251 = vmatprep.subr.mxu0 0.0
  %4252 = vmatpush1.msra.mxu0 0.0
  %4253 = vmatprep.subr.mxu0 0.0
  %4254 = vmatpush1.msra.mxu0 0.0
  %4255 = vmatprep.subr.mxu0 0.0
  %4256 = vmatpush1.msra.mxu0 0.0
  %4257 = vmatprep.subr.mxu0 0.0
  %4258 = vmatpush1.msra.mxu0 0.0
  %4259 = vmatprep.subr.mxu0 0.0
  %4260 = vmatpush1.msra.mxu0 0.0
  %4261 = vmatprep.subr.mxu0 0.0
  %4262 = vmatpush1.msra.mxu0 0.0
  %4263 = vmatprep.subr.mxu0 0.0
  %4264 = vmatpush1.msra.mxu0 0.0
  %4265 = vmatprep.subr.mxu0 0.0
  %4266 = vmatpush1.msra.mxu0 0.0
  %4267 = vmatprep.subr.mxu0 0.0
  %4268 = vmatpush1.msra.mxu0 0.0
  %4269 = vmatprep.subr.mxu0 0.0
  %4270 = vmatpush1.msra.mxu0 0.0
  %4271 = vmatprep.subr.mxu0 0.0
  %4272 = vmatpush1.msra.mxu0 0.0
  %4273 = vmatprep.subr.mxu0 0.0
  %4274 = vmatpush1.msra.mxu0 0.0
  %4275 = vmatprep.subr.mxu0 0.0
  %4276 = vmatpush1.msra.mxu0 0.0
  %4277 = vmatprep.subr.mxu0 0.0
  %4278 = vmatpush1.msra.mxu0 0.0
  %4279 = vmatprep.mubr.f32.mxu0 0.0
  %4280 = vmatmul.mubr.f32.gmra.mrb[0].mxu0 %v4213
  %v4281 = vpop.f32.mrb[0].mxu0
  %v4282 = vadd.f32 0.0, %v4281
  %v4283 = vpop.f32.mrb[0].mxu0
  %4284 = vdwg.mxu0
  %v4285 = vld [vmem:[%s13] sm:$0xff]
  %v4286 = vld [vmem:[%s13 + $0x8] sm:$0xff]
  %v4287 = vld [vmem:[%s13 + $0x10] sm:$0xff]
  %v4288 = vld [vmem:[%s13 + $0x18] sm:$0xff]
  %v4289 = vld [vmem:[%s10] sm:$0x3]
  %4291 = vset.pattern.permute.xlu0 0
  %4292 = vperm.xlu0 %4291, %v4289
  %v4293 = vpop.permute.xlu0 %4292
  %v4296 = vsel %vm4211, %v4282, 0
  %4298 = vmatprep.subr.mxu0 0.0
  %4299 = vmatpush1.msra.mxu0 %v4285
  %4300 = vmatprep.subr.mxu0 0.0
  %4301 = vmatpush1.msra.mxu0 %v4286
  %4302 = vmatprep.subr.mxu0 0.0
  %4303 = vmatpush1.msra.mxu0 %v4287
  %4304 = vmatprep.subr.mxu0 0.0
  %4305 = vmatpush1.msra.mxu0 %v4288
  %4306 = vmatprep.subr.mxu0 0.0
  %4307 = vmatpush1.msra.mxu0 0.0
  %4308 = vmatprep.subr.mxu0 0.0
  %4309 = vmatpush1.msra.mxu0 0.0
  %4310 = vmatprep.subr.mxu0 0.0
  %4311 = vmatpush1.msra.mxu0 0.0
  %4312 = vmatprep.subr.mxu0 0.0
  %4313 = vmatpush1.msra.mxu0 0.0
  %4314 = vmatprep.subr.mxu0 0.0
  %4315 = vmatpush1.msra.mxu0 0.0
  %4316 = vmatprep.subr.mxu0 0.0
  %4317 = vmatpush1.msra.mxu0 0.0
  %4318 = vmatprep.subr.mxu0 0.0
  %4319 = vmatpush1.msra.mxu0 0.0
  %4320 = vmatprep.subr.mxu0 0.0
  %4321 = vmatpush1.msra.mxu0 0.0
  %4322 = vmatprep.subr.mxu0 0.0
  %4323 = vmatpush1.msra.mxu0 0.0
  %4324 = vmatprep.subr.mxu0 0.0
  %4325 = vmatpush1.msra.mxu0 0.0
  %4326 = vmatprep.subr.mxu0 0.0
  %4327 = vmatpush1.msra.mxu0 0.0
  %4328 = vmatprep.subr.mxu0 0.0
  %4329 = vmatpush1.msra.mxu0 0.0
  %4330 = vmatprep.subr.mxu0 0.0
  %4331 = vmatpush1.msra.mxu0 0.0
  %4332 = vmatprep.subr.mxu0 0.0
  %4333 = vmatpush1.msra.mxu0 0.0
  %4334 = vmatprep.subr.mxu0 0.0
  %4335 = vmatpush1.msra.mxu0 0.0
  %4336 = vmatprep.subr.mxu0 0.0
  %4337 = vmatpush1.msra.mxu0 0.0
  %4338 = vmatprep.subr.mxu0 0.0
  %4339 = vmatpush1.msra.mxu0 0.0
  %4340 = vmatprep.subr.mxu0 0.0
  %4341 = vmatpush1.msra.mxu0 0.0
  %4342 = vmatprep.subr.mxu0 0.0
  %4343 = vmatpush1.msra.mxu0 0.0
  %4344 = vmatprep.subr.mxu0 0.0
  %4345 = vmatpush1.msra.mxu0 0.0
  %4346 = vmatprep.subr.mxu0 0.0
  %4347 = vmatpush1.msra.mxu0 0.0
  %4348 = vmatprep.subr.mxu0 0.0
  %4349 = vmatpush1.msra.mxu0 0.0
  %4350 = vmatprep.subr.mxu0 0.0
  %4351 = vmatpush1.msra.mxu0 0.0
  %4352 = vmatprep.subr.mxu0 0.0
  %4353 = vmatpush1.msra.mxu0 0.0
  %4354 = vmatprep.subr.mxu0 0.0
  %4355 = vmatpush1.msra.mxu0 0.0
  %4356 = vmatprep.subr.mxu0 0.0
  %4357 = vmatpush1.msra.mxu0 0.0
  %4358 = vmatprep.subr.mxu0 0.0
  %4359 = vmatpush1.msra.mxu0 0.0
  %4360 = vmatprep.subr.mxu0 0.0
  %4361 = vmatpush1.msra.mxu0 0.0
  %4362 = vmatprep.mubr.f32.mxu0 0.0
  %4363 = vmatmul.mubr.f32.gmra.mrb[0].mxu0 %v4296
  %v4364 = vpop.f32.mrb[0].mxu0
  %v4365 = vadd.f32 %v4293, %v4364
  %v4366 = vpop.f32.mrb[0].mxu0
  %4367 = vdwg.mxu0
  %v4368 = vand.u32 2147483647, %v4365
  %vm4369 = vcmp.le.f32.partialorder %v4368, 0.7853982
  %vm4370 = vcmp.lt.s32.totalorder %v4365, 0
  %v4371 = vand.u32 %v4365, 2139095040
  %v4372 = vshrl.u32 %v4371, 23
  %v4373 = vsub.s32 %v4372, 127
  %v4374 = vand.u32 2147483647, %v4365
  %v4375 = vand.u32 %v4374, 8388607
  %v4376 = vor.u32 %v4375, 8388608
  %v4377 = vsub.s32 0, %v4376
  %v4378 = vadd.s32 %v4373, 1
  %vm4379 = vcmp.gt.s32.totalorder %v4378, 0
  %v4380 = vsel %vm4379, %v4378, 0
  %v4381 = vshrl.u32 %v4380, 5
  %v4382 = vand.u32 %v4380, 31
  %v4383 = vsub.s32 32, %v4382
  %v4384 = vshrl.u32 683565275, %v4383
  %v4385 = vshll.u32 683565275, %v4382
  %v4386 = vshrl.u32 2475754826, %v4383
  %v4387 = vor.u32 %v4385, %v4386
  %v4388 = vshll.u32 2475754826, %v4382
  %v4389 = vshrl.u32 2131351028, %v4383
  %v4390 = vor.u32 %v4388, %v4389
  %v4391 = vshll.u32 2131351028, %v4382
  %v4392 = vshrl.u32 2102212464, %v4383
  %v4393 = vor.u32 %v4391, %v4392
  %v4394 = vshll.u32 2102212464, %v4382
  %v4395 = vshrl.u32 920167782, %v4383
  %v4396 = vor.u32 %v4394, %v4395
  %v4397 = vshll.u32 920167782, %v4382
  %v4398 = vshrl.u32 1326507024, %v4383
  %v4399 = vor.u32 %v4397, %v4398
  %vm4400 = vcmp.lt.s32.totalorder %v4381, 1
  %vm4401 = vcmp.lt.s32.totalorder %v4381, 2
  %vm4402 = vcmp.lt.s32.totalorder %v4381, 3
  %vm4403 = vcmp.lt.s32.totalorder %v4381, 4
  %v4404 = vsel %vm4400, %v4384, %v4387
  %v4405 = vsel %vm4403, %v4393, 2102212464
  %v4406 = vsel %vm4402, %v4390, %v4405
  %v4407 = vsel %vm4401, %v4404, %v4406
  %v4408 = vsel %vm4400, %v4387, %v4390
  %v4409 = vsel %vm4403, %v4396, 920167782
  %v4410 = vsel %vm4402, %v4393, %v4409
  %v4411 = vsel %vm4401, %v4408, %v4410
  %v4412 = vsel %vm4400, %v4390, %v4393
  %v4413 = vsel %vm4403, %v4399, 1326507024
  %v4414 = vsel %vm4402, %v4396, %v4413
  %v4415 = vsel %vm4401, %v4412, %v4414
  %v4416 = vshll.u32 %v4376, 8
  %v4417 = vmul.u32.u64.compose %v4416, %v4415
  %v4418 = vextract.low.u32 %v4417
  %v4419 = vextract.high.u32 %v4417
  %v4420 = vmul.u32.u64.compose %v4416, %v4411
  %v4421 = vextract.low.u32 %v4420
  %v4422 = vextract.high.u32 %v4420
  %v4423 = vmul.u32 %v4416, %v4407
  %v4424 = vadd.s32 %v4419, %v4421
  %vm4425 = vc.u32 %v4419, %v4421
  %v4426 = vadd.s32 %v4422, 1
  %v4427 = vsel %vm4425, %v4426, %v4422
  %v4428 = vadd.s32 %v4423, %v4427
  %v4429 = vadd.s32 %v4428, 536870912
  %v4430 = vshrl.u32 %v4429, 30
  %v4431 = vshll.u32 %v4430, 30
  %v4432 = vsub.s32 %v4428, %v4431
  %vm4433 = vcmp.lt.s32.totalorder %v4432, 0
  %v4434 = vsub.s32 0, %v4432
  %v4435 = vsel %vm4433, %v4434, %v4432
  %v4436 = vclz %v4435
  %v4437 = vsub.s32 %v4436, 2
  %vm4438 = vcmp.gt.s32.totalorder 0, %v4437
  %v4439 = vsel %vm4438, 0, %v4437
  %v4440 = vsub.s32 32, %v4439
  %v4441 = vshll.u32 %v4432, %v4439
  %v4442 = vshrl.u32 %v4424, %v4440
  %v4443 = vor.u32 %v4441, %v4442
  %v4444 = vsub.s32 4294967266, %v4439
  %v4445 = vadd.s32 %v4444, 127
  %v4446 = vshll.u32 %v4445, 23
  %v4447 = vor.u32 4788187, %v4446
  %v4448 = vand.u32 2147483647, %v4447
  %v4450 = vcvt.s32.f32 %v4443
  %v4451 = vmul.f32 %v4450, %v4448
  %v4452 = vxor.u32 %v4451, 2147483648
  %v4453 = vsel %vm4370, %v4452, %v4451
  %v4454 = vsub.s32 4, %v4430
  %v4455 = vsel %vm4370, %v4454, %v4430
  %v4456 = vsel %vm4369, %v4365, %v4453
  %v4457 = vsel %vm4369, 0, %v4455
  %v4458 = vcosq.f32.pop %v4456
  %v4459 = vsinq.f32.pop %v4456
  %vm4460 = vweird.f32 %v4365
  %v4461 = vadd.s32 %v4457, 3
  %v4462 = vand.u32 %v4461, 3
  %vm4463 = vcmp.lt.s32.totalorder %v4462, 2
  %vm4464 = vcmp.eq.s32.totalorder %v4462, 0
  %v4465 = vxor.u32 %v4459, 2147483648
  %v4466 = vsel %vm4464, %v4458, %v4465
  %vm4467 = vcmp.eq.s32.totalorder %v4462, 2
  %v4468 = vxor.u32 %v4458, 2147483648
  %v4469 = vsel %vm4467, %v4468, %v4459
  %v4470 = vsel %vm4463, %v4466, %v4469
  %v4471 = vsel %vm4460, nan, %v4470
  %v4472 = vadd.f32 %v4471, 1.0
  %v4473 = vmul.f32 %v4472, 5.5
  %vm4474 = vcmask 9216
  %4475 = vst.msk [vmem:[%s14] sm:$0x3] %vm4474, %v4473
  %v4476 = vsub.f32 1.0, %v4473
  %4477 = vst.msk [vmem:[%s14 + $0x2] sm:$0x3] %vm4474, %v4476
  // Predicated region
  $region58: #{simple_quantum_conv_net.1} parent=0 // pred_check
    _
  $region59: #{simple_quantum_conv_net.1} parent=0 // pred_check_branch
    %4479 = sbr.rel (0) target = $region61
  $region60: #{simple_quantum_conv_net.1} parent=0 // pred_region
    _
  $region61: #{simple_quantum_conv_net.1} parent=0 // pred_fallthru
    _
  // Predicated region
  $region62: #{simple_quantum_conv_net.1} parent=0 // pred_check
    _
  $region63: #{simple_quantum_conv_net.1} parent=0 // pred_check_branch
    %4481 = sbr.rel (0) target = $region65
  $region64: #{simple_quantum_conv_net.1} parent=0 // pred_region
    _
  $region65: #{simple_quantum_conv_net.1} parent=0 // pred_fallthru
    _

</llo_original>
